<compile_context>
chip_gen: v7x
topology: tpu7x:2x2x1
jax: 0.10.0
libtpu: 0.0.40
codegen_flags: <defaults>
</compile_context>

<pallas_src>
import jax
import jax.numpy as jnp
from jax import lax
from jax.experimental import pallas as pl
from jax.experimental.pallas import tpu as pltpu

BERT_HIDDEN = 768            # 'bert-base-*'
BUCKET_EMBED = 20
SCORE_HIDDEN = 128
NUM_BUCKETS = 9              # len([1,2,3,4,5,8,16,32,64]); embedding rows = 10
H3 = 3 * BERT_HIDDEN         # span-repr width ('x,y,x*y') = 2304
DEFAULT_TM = 256             # row tile: ~11 MB live VMEM -> fits v5e/v6e/v7x


def _round_up(x, m):
    return (x + m - 1) // m * m


def _pair_score_kernel(gP_ref, gA_ref, gB_ref, dA_ref, dB_ref,
                       w1a_ref, w1b_ref, w1c_ref, w2_ref, b2_ref,
                       outA_ref, outB_ref):
    """One row tile (TM batch rows), both mention pairs.

    gP arrives pre-normalized (f32 in the wrapper) as bf16; its W1a matmul is
    computed once and shared by the (P,A) and (P,B) pairs.  Candidate spans
    arrive raw (bf16) and are L2-normalized here with f32 math.  The K=20
    distance matmul (+ b1) is pre-folded into dA_ref / dB_ref (TM, 128) f32.
    """
    f32 = jnp.float32
    bf16 = jnp.bfloat16

    gP_bf = gP_ref[...]                                 # (TM, 3H) bf16
    gP = gP_bf.astype(f32)

    # Shared across both pairs: one MXU pass for the pronoun span.
    hP = jnp.dot(gP_bf, w1a_ref[...], preferred_element_type=f32)   # (TM, 128)

    w1b = w1b_ref[...]
    w1c = w1c_ref[...]
    w2 = w2_ref[...]                                    # (1, 128) f32
    b2 = b2_ref[...]                                    # (1, 1)   f32

    def one_pair(g_raw_ref, d_ref, out_ref):
        g_raw = g_raw_ref[...].astype(f32)              # (TM, 3H), f32 VPU math
        # F.normalize(p=2, dim=1, eps=1e-12): 1/max(||g||,eps) == rsqrt(max(ss,eps^2))
        ss = jnp.sum(g_raw * g_raw, axis=-1, keepdims=True)
        g = g_raw * lax.rsqrt(jnp.maximum(ss, 1e-24))
        ew = gP * g                                     # elementwise feature (f32)
        h = (hP
             + jnp.dot(g.astype(bf16), w1b, preferred_element_type=f32)
             + jnp.dot(ew.astype(bf16), w1c, preferred_element_type=f32)
             + d_ref[...])                              # dist@W1d + b1 (f32)
        h = jnp.maximum(h, 0.0)                         # ReLU (Dropout = identity)
        # Linear(128 -> 1) as VPU multiply + lane reduce (no N=1 MXU matmul).
        out_ref[...] = jnp.sum(h * w2, axis=-1, keepdims=True) + b2

    one_pair(gA_ref, dA_ref, outA_ref)
    one_pair(gB_ref, dB_ref, outB_ref)


def pair_scores(gP_bf, gA_bf, gB_bf, dA_term, dB_term,
                w1a, w1b, w1c, w2_row, b2_2d, *, tm):
    """Row-tiled pallas_call over the padded batch; returns ((Bp,1),(Bp,1)) f32."""
    bp_rows = gP_bf.shape[0]
    assert bp_rows % tm == 0 and tm % 8 == 0

    act_spec = pl.BlockSpec((tm, H3), lambda i: (i, 0))
    dst_spec = pl.BlockSpec((tm, SCORE_HIDDEN), lambda i: (i, 0))
    out_spec = pl.BlockSpec((tm, 1), lambda i: (i, 0))
    # Constant index_map -> weights are DMA'd once and stay resident.
    w1_spec = pl.BlockSpec((H3, SCORE_HIDDEN), lambda i: (0, 0))
    w2_spec = pl.BlockSpec((1, SCORE_HIDDEN), lambda i: (0, 0))
    b2_spec = pl.BlockSpec((1, 1), lambda i: (0, 0))

    flops = 5 * 2 * bp_rows * H3 * SCORE_HIDDEN          # 5 MXU dots of Bp rows
    bytes_accessed = (3 * bp_rows * H3 * 2                # bf16 activation streams
                      + 2 * bp_rows * SCORE_HIDDEN * 4    # f32 fused dist terms
                      + 3 * H3 * SCORE_HIDDEN * 2         # bf16 W1 blocks
                      + 2 * bp_rows * 4)                  # f32 outputs

    return pl.pallas_call(
        _pair_score_kernel,
        out_shape=(jax.ShapeDtypeStruct((bp_rows, 1), jnp.float32),
                   jax.ShapeDtypeStruct((bp_rows, 1), jnp.float32)),
        grid=(bp_rows // tm,),
        in_specs=[act_spec, act_spec, act_spec, dst_spec, dst_spec,
                  w1_spec, w1_spec, w1_spec, w2_spec, b2_spec],
        out_specs=(out_spec, out_spec),
        compiler_params=pltpu.CompilerParams(
            dimension_semantics=("parallel",),
            vmem_limit_bytes=48 * 1024 * 1024),
        cost_estimate=pl.CostEstimate(flops=flops,
                                      transcendentals=2 * bp_rows,
                                      bytes_accessed=bytes_accessed),
    )(gP_bf, gA_bf, gB_bf, dA_term, dB_term, w1a, w1b, w1c, w2_row, b2_2d)


def prepare_scorer_params(params):
    """Pre-slice W1 into concat blocks (bf16) and fold emb_table @ W1d + b1."""
    emb_table, w1, b1, w2, b2 = params
    w1 = jnp.asarray(w1, jnp.float32)
    w1a = w1[0:H3].astype(jnp.bfloat16)                  # gP block
    w1b = w1[H3:2 * H3].astype(jnp.bfloat16)             # candidate block
    w1c = w1[2 * H3:3 * H3].astype(jnp.bfloat16)         # gP*gX block
    w1d = w1[3 * H3:]                                    # (20, 128) dist block, f32
    # K=20 dist matmul + b1 folded into one f32 lookup table (10, 128).
    fused_dist_table = (jnp.asarray(emb_table, jnp.float32) @ w1d
                        + jnp.asarray(b1, jnp.float32).reshape(1, SCORE_HIDDEN))
    w2_row = jnp.asarray(w2, jnp.float32).reshape(1, SCORE_HIDDEN)
    b2_2d = jnp.asarray(b2, jnp.float32).reshape(1, 1)
    return (fused_dist_table, w1a, w1b, w1c, w2_row, b2_2d)


def score_model_forward(bert_output, offsets, distP_A, distP_B, prepared_params,
                        *, tm=None):
    """Mirrors score_model.forward given precomputed encoder hidden states."""
    fused_dist_table, w1a, w1b, w1c, w2_row, b2_2d = prepared_params
    B = bert_output.shape[0]

    # Distance-bucket embedding, already fused with W1d and b1 -> (B, 128) f32.
    dA_term = fused_dist_table[distP_A]
    dB_term = fused_dist_table[distP_B]

    # EndpointSpanExtractor(combination='x,y,x*y') (glue gather).
    starts = offsets[..., 0]                                         # (B, 3)
    ends = offsets[..., 1]                                           # (B, 3)
    x = jnp.take_along_axis(bert_output, starts[..., None], axis=1)  # (B, 3, H)
    y = jnp.take_along_axis(bert_output, ends[..., None], axis=1)    # (B, 3, H)

    def span_repr(i):
        xi, yi = x[:, i], y[:, i]
        return jnp.concatenate([xi, yi, xi * yi], axis=-1)           # (B, 3H) f32

    gA_raw = span_repr(0)
    gB_raw = span_repr(1)
    gP_raw = span_repr(2)

    # gP normalized exactly once (f32), shared by both pairs.
    gP = gP_raw / jnp.maximum(jnp.linalg.norm(gP_raw, axis=-1, keepdims=True), 1e-12)

    # bf16 activation streams (halves HBM traffic); kernel math stays f32.
    gP_bf = gP.astype(jnp.bfloat16)
    gA_bf = gA_raw.astype(jnp.bfloat16)
    gB_bf = gB_raw.astype(jnp.bfloat16)

    if tm is None:
        tm = min(DEFAULT_TM, _round_up(B, 8))
    bp_rows = _round_up(B, tm)
    pad = bp_rows - B
    if pad:
        gP_bf = jnp.pad(gP_bf, ((0, pad), (0, 0)))
        gA_bf = jnp.pad(gA_bf, ((0, pad), (0, 0)))
        gB_bf = jnp.pad(gB_bf, ((0, pad), (0, 0)))
        dA_term = jnp.pad(dA_term, ((0, pad), (0, 0)))
        dB_term = jnp.pad(dB_term, ((0, pad), (0, 0)))

    ap, bp = pair_scores(gP_bf, gA_bf, gB_bf, dA_term, dB_term,
                         w1a, w1b, w1c, w2_row, b2_2d, tm=tm)
    ap_score = ap[:B]
    bp_score = bp[:B]
    nan_score = jnp.zeros_like(ap_score)
    return jnp.concatenate([ap_score, bp_score, nan_score], axis=1)  # (B, 3)


def _reference_forward(bert_output, offsets, distP_A, distP_B, params):
    """Pure-JAX reference of the same math (f32, HIGHEST precision)."""
    emb_table, w1, b1, w2, b2 = params
    distPA_embed = emb_table[distP_A]
    distPB_embed = emb_table[distP_B]
    starts = offsets[..., 0]
    ends = offsets[..., 1]
    x = jnp.take_along_axis(bert_output, starts[..., None], axis=1)
    y = jnp.take_along_axis(bert_output, ends[..., None], axis=1)
    span_repres = jnp.concatenate([x, y, x * y], axis=-1)

    def l2norm(v):
        return v / jnp.maximum(jnp.linalg.norm(v, axis=-1, keepdims=True), 1e-12)

    gA, gB, gP = (l2norm(span_repres[:, 0]),
                  l2norm(span_repres[:, 1]),
                  l2norm(span_repres[:, 2]))

    def mp_score(g1, g2, d):
        feat = jnp.concatenate([g1, g2, g1 * g2, d], axis=-1)
        h = jnp.maximum(
            jnp.dot(feat, w1, precision=jax.lax.Precision.HIGHEST) + b1, 0.0)
        return jnp.dot(h, w2, precision=jax.lax.Precision.HIGHEST) + b2

    ap = mp_score(gP, gA, distPA_embed)
    bp = mp_score(gP, gB, distPB_embed)
    return jnp.concatenate([ap, bp, jnp.zeros_like(ap)], axis=1)


if __name__ == "__main__":
    B, S, H = 2, 16, BERT_HIDDEN
    D_IN = 3 * H3 + BUCKET_EMBED               # 6932

    key = jax.random.PRNGKey(0)
    (k_emb, k_w1, k_b1, k_w2, k_b2,
     k_bert, k_off, k_da, k_db) = jax.random.split(key, 9)

    # Deterministic parameter init (shapes from the module's __init__).
    emb_table = jax.random.normal(k_emb, (NUM_BUCKETS + 1, BUCKET_EMBED), jnp.float32) * 0.1
    w1 = jax.random.normal(k_w1, (D_IN, SCORE_HIDDEN), jnp.float32) * 0.02
    b1 = jax.random.normal(k_b1, (SCORE_HIDDEN,), jnp.float32) * 0.02
    w2 = jax.random.normal(k_w2, (SCORE_HIDDEN, 1), jnp.float32) * 0.02
    b2 = jax.random.normal(k_b2, (1,), jnp.float32) * 0.02
    params = (emb_table, w1, b1, w2, b2)
    prepared = prepare_scorer_params(params)   # done once, outside jit

    fwd = jax.jit(score_model_forward, static_argnames=("tm",))

    # --- demo batch (B = 2): single grid step, tm = 8 (padded) ---
    bert_output = jax.random.normal(k_bert, (B, S, H), jnp.float32)
    offsets = jnp.sort(jax.random.randint(k_off, (B, 3, 2), 0, S), axis=-1)
    distP_A = jax.random.randint(k_da, (B,), 0, NUM_BUCKETS + 1)
    distP_B = jax.random.randint(k_db, (B,), 0, NUM_BUCKETS + 1)

    out = jax.block_until_ready(fwd(bert_output, offsets, distP_A, distP_B, prepared))
    ref = _reference_forward(bert_output, offsets, distP_A, distP_B, params)
    assert out.shape == (B, 3), out.shape
    assert jnp.allclose(out, ref, atol=1e-2, rtol=1e-2), (out, ref)

    # --- multi-tile path (B = 20, tm = 8 -> 3 grid steps + padding) ---
    B2 = 20
    kb2, ko2, ka2, kd2 = jax.random.split(jax.random.PRNGKey(1), 4)
    bert_output2 = jax.random.normal(kb2, (B2, S, H), jnp.float32)
    offsets2 = jnp.sort(jax.random.randint(ko2, (B2, 3, 2), 0, S), axis=-1)
    distP_A2 = jax.random.randint(ka2, (B2,), 0, NUM_BUCKETS + 1)
    distP_B2 = jax.random.randint(kd2, (B2,), 0, NUM_BUCKETS + 1)

    out2 = jax.block_until_ready(
        fwd(bert_output2, offsets2, distP_A2, distP_B2, prepared, tm=8))
    ref2 = _reference_forward(bert_output2, offsets2, distP_A2, distP_B2, params)
    assert out2.shape == (B2, 3), out2.shape
    assert jnp.allclose(out2, ref2, atol=1e-2, rtol=1e-2), (out2, ref2)

    print("KERNEL_OK")
</pallas_src>

<mosaic_0001>
module attributes {stable_mosaic.version = 11 : i64} {
  func.func @_pair_score_kernel(%arg0: i32, %arg1: memref<8x2304xbf16, #tpu.memory_space<vmem>>, %arg2: memref<8x2304xbf16, #tpu.memory_space<vmem>>, %arg3: memref<8x2304xbf16, #tpu.memory_space<vmem>>, %arg4: memref<8x128xf32, #tpu.memory_space<vmem>>, %arg5: memref<8x128xf32, #tpu.memory_space<vmem>>, %arg6: memref<2304x128xbf16, #tpu.memory_space<vmem>>, %arg7: memref<2304x128xbf16, #tpu.memory_space<vmem>>, %arg8: memref<2304x128xbf16, #tpu.memory_space<vmem>>, %arg9: memref<1x128xf32, #tpu.memory_space<vmem>>, %arg10: memref<1x1xf32, #tpu.memory_space<vmem>>, %arg11: memref<8x1xf32, #tpu.memory_space<vmem>>, %arg12: memref<8x1xf32, #tpu.memory_space<vmem>>) attributes {dimension_semantics = [#tpu.dimension_semantics<parallel>], iteration_bounds = array<i64: 1>, scalar_prefetch = 0 : i64, scratch_operands = 0 : i64, tpu.core_type = #tpu.core_type<tc>, window_params = [{transform_indices = @transform_0, window_bounds = array<i64: 8, 2304>}, {transform_indices = @transform_1, window_bounds = array<i64: 8, 2304>}, {transform_indices = @transform_2, window_bounds = array<i64: 8, 2304>}, {transform_indices = @transform_3, window_bounds = array<i64: 8, 128>}, {transform_indices = @transform_4, window_bounds = array<i64: 8, 128>}, {pipeline_mode = #tpu.pipeline_mode<synchronous>, transform_indices = @transform_5, window_bounds = array<i64: 2304, 128>}, {pipeline_mode = #tpu.pipeline_mode<synchronous>, transform_indices = @transform_6, window_bounds = array<i64: 2304, 128>}, {pipeline_mode = #tpu.pipeline_mode<synchronous>, transform_indices = @transform_7, window_bounds = array<i64: 2304, 128>}, {pipeline_mode = #tpu.pipeline_mode<synchronous>, transform_indices = @transform_8, window_bounds = array<i64: 1, 128>}, {pipeline_mode = #tpu.pipeline_mode<synchronous>, transform_indices = @transform_9, window_bounds = array<i64: 1, 1>}, {transform_indices = @transform_10, window_bounds = array<i64: 8, 1>}, {transform_indices = @transform_11, window_bounds = array<i64: 8, 1>}]} {
    %c0 = arith.constant 0 : index
    %c0_0 = arith.constant 0 : index
    %0 = vector.load %arg1[%c0, %c0_0] : memref<8x2304xbf16, #tpu.memory_space<vmem>>, vector<8x2304xbf16>
    %1 = arith.extf %0 : vector<8x2304xbf16> to vector<8x2304xf32>
    %c0_1 = arith.constant 0 : index
    %c0_2 = arith.constant 0 : index
    %2 = vector.load %arg6[%c0_1, %c0_2] : memref<2304x128xbf16, #tpu.memory_space<vmem>>, vector<2304x128xbf16>
    %cst = arith.constant dense<0.000000e+00> : vector<8x128xf32>
    %3 = tpu.matmul %0, %2, %cst {dimension_numbers = #tpu.dot_dimension_numbers<[1], [0], [0], [1], [0, 0, 1, 1], [], []>} : vector<8x2304xbf16>, vector<2304x128xbf16>, vector<8x128xf32> -> vector<8x128xf32>
    %c0_3 = arith.constant 0 : index
    %c0_4 = arith.constant 0 : index
    %4 = vector.load %arg7[%c0_3, %c0_4] : memref<2304x128xbf16, #tpu.memory_space<vmem>>, vector<2304x128xbf16>
    %c0_5 = arith.constant 0 : index
    %c0_6 = arith.constant 0 : index
    %5 = vector.load %arg8[%c0_5, %c0_6] : memref<2304x128xbf16, #tpu.memory_space<vmem>>, vector<2304x128xbf16>
    %c0_7 = arith.constant 0 : index
    %c0_8 = arith.constant 0 : index
    %6 = vector.load %arg9[%c0_7, %c0_8] : memref<1x128xf32, #tpu.memory_space<vmem>>, vector<1x128xf32>
    %c0_9 = arith.constant 0 : index
    %c0_10 = arith.constant 0 : index
    %7 = vector.load %arg10[%c0_9, %c0_10] : memref<1x1xf32, #tpu.memory_space<vmem>>, vector<1x1xf32>
    %c0_11 = arith.constant 0 : index
    %c0_12 = arith.constant 0 : index
    %8 = vector.load %arg2[%c0_11, %c0_12] : memref<8x2304xbf16, #tpu.memory_space<vmem>>, vector<8x2304xbf16>
    %9 = arith.extf %8 : vector<8x2304xbf16> to vector<8x2304xf32>
    %10 = arith.mulf %9, %9 : vector<8x2304xf32>
    %cst_13 = arith.constant dense<0.000000e+00> : vector<8xf32>
    %11 = vector.multi_reduction <add>, %10, %cst_13 [1] : vector<8x2304xf32> to vector<8xf32>
    %12 = vector.shape_cast %11 : vector<8xf32> to vector<8x1xf32>
    %cst_14 = arith.constant 1.000000e-24 : f32
    %13 = vector.broadcast %cst_14 : f32 to vector<8x1xf32>
    %14 = arith.maximumf %12, %13 : vector<8x1xf32>
    %15 = math.rsqrt %14 : vector<8x1xf32>
    %16 = vector.broadcast %15 : vector<8x1xf32> to vector<8x2304xf32>
    %17 = arith.mulf %9, %16 : vector<8x2304xf32>
    %18 = arith.mulf %1, %17 : vector<8x2304xf32>
    %19 = arith.truncf %17 : vector<8x2304xf32> to vector<8x2304xbf16>
    %cst_15 = arith.constant dense<0.000000e+00> : vector<8x128xf32>
    %20 = tpu.matmul %19, %4, %cst_15 {dimension_numbers = #tpu.dot_dimension_numbers<[1], [0], [0], [1], [0, 0, 1, 1], [], []>} : vector<8x2304xbf16>, vector<2304x128xbf16>, vector<8x128xf32> -> vector<8x128xf32>
    %21 = arith.addf %3, %20 : vector<8x128xf32>
    %22 = arith.truncf %18 : vector<8x2304xf32> to vector<8x2304xbf16>
    %cst_16 = arith.constant dense<0.000000e+00> : vector<8x128xf32>
    %23 = tpu.matmul %22, %5, %cst_16 {dimension_numbers = #tpu.dot_dimension_numbers<[1], [0], [0], [1], [0, 0, 1, 1], [], []>} : vector<8x2304xbf16>, vector<2304x128xbf16>, vector<8x128xf32> -> vector<8x128xf32>
    %24 = arith.addf %21, %23 : vector<8x128xf32>
    %c0_17 = arith.constant 0 : index
    %c0_18 = arith.constant 0 : index
    %25 = vector.load %arg4[%c0_17, %c0_18] : memref<8x128xf32, #tpu.memory_space<vmem>>, vector<8x128xf32>
    %26 = arith.addf %24, %25 : vector<8x128xf32>
    %cst_19 = arith.constant 0.000000e+00 : f32
    %27 = vector.broadcast %cst_19 : f32 to vector<8x128xf32>
    %28 = arith.maximumf %26, %27 : vector<8x128xf32>
    %29 = vector.broadcast %6 : vector<1x128xf32> to vector<8x128xf32>
    %30 = arith.mulf %28, %29 : vector<8x128xf32>
    %cst_20 = arith.constant dense<0.000000e+00> : vector<8xf32>
    %31 = vector.multi_reduction <add>, %30, %cst_20 [1] : vector<8x128xf32> to vector<8xf32>
    %32 = vector.shape_cast %31 : vector<8xf32> to vector<8x1xf32>
    %33 = vector.broadcast %7 : vector<1x1xf32> to vector<8x1xf32>
    %34 = arith.addf %32, %33 : vector<8x1xf32>
    %c0_21 = arith.constant 0 : index
    %c0_22 = arith.constant 0 : index
    %35 = vector.load %arg11[%c0_21, %c0_22] : memref<8x1xf32, #tpu.memory_space<vmem>>, vector<8x1xf32>
    tpu.vector_store %arg11[%c0_21, %c0_22], %34 {strides = array<i32>} : memref<8x1xf32, #tpu.memory_space<vmem>>, vector<8x1xf32>,
    %c0_23 = arith.constant 0 : index
    %c0_24 = arith.constant 0 : index
    %36 = vector.load %arg3[%c0_23, %c0_24] : memref<8x2304xbf16, #tpu.memory_space<vmem>>, vector<8x2304xbf16>
    %37 = arith.extf %36 : vector<8x2304xbf16> to vector<8x2304xf32>
    %38 = arith.mulf %37, %37 : vector<8x2304xf32>
    %cst_25 = arith.constant dense<0.000000e+00> : vector<8xf32>
    %39 = vector.multi_reduction <add>, %38, %cst_25 [1] : vector<8x2304xf32> to vector<8xf32>
    %40 = vector.shape_cast %39 : vector<8xf32> to vector<8x1xf32>
    %cst_26 = arith.constant 1.000000e-24 : f32
    %41 = vector.broadcast %cst_26 : f32 to vector<8x1xf32>
    %42 = arith.maximumf %40, %41 : vector<8x1xf32>
    %43 = math.rsqrt %42 : vector<8x1xf32>
    %44 = vector.broadcast %43 : vector<8x1xf32> to vector<8x2304xf32>
    %45 = arith.mulf %37, %44 : vector<8x2304xf32>
    %46 = arith.mulf %1, %45 : vector<8x2304xf32>
    %47 = arith.truncf %45 : vector<8x2304xf32> to vector<8x2304xbf16>
    %cst_27 = arith.constant dense<0.000000e+00> : vector<8x128xf32>
    %48 = tpu.matmul %47, %4, %cst_27 {dimension_numbers = #tpu.dot_dimension_numbers<[1], [0], [0], [1], [0, 0, 1, 1], [], []>} : vector<8x2304xbf16>, vector<2304x128xbf16>, vector<8x128xf32> -> vector<8x128xf32>
    %49 = arith.addf %3, %48 : vector<8x128xf32>
    %50 = arith.truncf %46 : vector<8x2304xf32> to vector<8x2304xbf16>
    %cst_28 = arith.constant dense<0.000000e+00> : vector<8x128xf32>
    %51 = tpu.matmul %50, %5, %cst_28 {dimension_numbers = #tpu.dot_dimension_numbers<[1], [0], [0], [1], [0, 0, 1, 1], [], []>} : vector<8x2304xbf16>, vector<2304x128xbf16>, vector<8x128xf32> -> vector<8x128xf32>
    %52 = arith.addf %49, %51 : vector<8x128xf32>
    %c0_29 = arith.constant 0 : index
    %c0_30 = arith.constant 0 : index
    %53 = vector.load %arg5[%c0_29, %c0_30] : memref<8x128xf32, #tpu.memory_space<vmem>>, vector<8x128xf32>
    %54 = arith.addf %52, %53 : vector<8x128xf32>
    %cst_31 = arith.constant 0.000000e+00 : f32
    %55 = vector.broadcast %cst_31 : f32 to vector<8x128xf32>
    %56 = arith.maximumf %54, %55 : vector<8x128xf32>
    %57 = vector.broadcast %6 : vector<1x128xf32> to vector<8x128xf32>
    %58 = arith.mulf %56, %57 : vector<8x128xf32>
    %cst_32 = arith.constant dense<0.000000e+00> : vector<8xf32>
    %59 = vector.multi_reduction <add>, %58, %cst_32 [1] : vector<8x128xf32> to vector<8xf32>
    %60 = vector.shape_cast %59 : vector<8xf32> to vector<8x1xf32>
    %61 = vector.broadcast %7 : vector<1x1xf32> to vector<8x1xf32>
    %62 = arith.addf %60, %61 : vector<8x1xf32>
    %c0_33 = arith.constant 0 : index
    %c0_34 = arith.constant 0 : index
    %63 = vector.load %arg12[%c0_33, %c0_34] : memref<8x1xf32, #tpu.memory_space<vmem>>, vector<8x1xf32>
    tpu.vector_store %arg12[%c0_33, %c0_34], %62 {strides = array<i32>} : memref<8x1xf32, #tpu.memory_space<vmem>>, vector<8x1xf32>,
    return
  }
  func.func @transform_0(%arg0: i32) -> (i32, i32) {
    %c0_i32 = arith.constant 0 : i32
    %c0_i32_0 = arith.constant 0 : i32
    return %arg0, %c0_i32 : i32, i32
  }
  func.func @transform_1(%arg0: i32) -> (i32, i32) {
    %c0_i32 = arith.constant 0 : i32
    %c0_i32_0 = arith.constant 0 : i32
    return %arg0, %c0_i32 : i32, i32
  }
  func.func @transform_2(%arg0: i32) -> (i32, i32) {
    %c0_i32 = arith.constant 0 : i32
    %c0_i32_0 = arith.constant 0 : i32
    return %arg0, %c0_i32 : i32, i32
  }
  func.func @transform_3(%arg0: i32) -> (i32, i32) {
    %c0_i32 = arith.constant 0 : i32
    %c0_i32_0 = arith.constant 0 : i32
    return %arg0, %c0_i32 : i32, i32
  }
  func.func @transform_4(%arg0: i32) -> (i32, i32) {
    %c0_i32 = arith.constant 0 : i32
    %c0_i32_0 = arith.constant 0 : i32
    return %arg0, %c0_i32 : i32, i32
  }
  func.func @transform_5(%arg0: i32) -> (i32, i32) {
    %c0_i32 = arith.constant 0 : i32
    %c0_i32_0 = arith.constant 0 : i32
    %c0_i32_1 = arith.constant 0 : i32
    return %c0_i32, %c0_i32_0 : i32, i32
  }
  func.func @transform_6(%arg0: i32) -> (i32, i32) {
    %c0_i32 = arith.constant 0 : i32
    %c0_i32_0 = arith.constant 0 : i32
    %c0_i32_1 = arith.constant 0 : i32
    return %c0_i32, %c0_i32_0 : i32, i32
  }
  func.func @transform_7(%arg0: i32) -> (i32, i32) {
    %c0_i32 = arith.constant 0 : i32
    %c0_i32_0 = arith.constant 0 : i32
    %c0_i32_1 = arith.constant 0 : i32
    return %c0_i32, %c0_i32_0 : i32, i32
  }
  func.func @transform_8(%arg0: i32) -> (i32, i32) {
    %c0_i32 = arith.constant 0 : i32
    %c0_i32_0 = arith.constant 0 : i32
    %c0_i32_1 = arith.constant 0 : i32
    return %c0_i32, %c0_i32_0 : i32, i32
  }
  func.func @transform_9(%arg0: i32) -> (i32, i32) {
    %c0_i32 = arith.constant 0 : i32
    %c0_i32_0 = arith.constant 0 : i32
    %c0_i32_1 = arith.constant 0 : i32
    return %c0_i32, %c0_i32_0 : i32, i32
  }
  func.func @transform_10(%arg0: i32) -> (i32, i32) {
    %c0_i32 = arith.constant 0 : i32
    %c0_i32_0 = arith.constant 0 : i32
    return %arg0, %c0_i32 : i32, i32
  }
  func.func @transform_11(%arg0: i32) -> (i32, i32) {
    %c0_i32 = arith.constant 0 : i32
    %c0_i32_0 = arith.constant 0 : i32
    return %arg0, %c0_i32 : i32, i32
  }
}

</mosaic_0001>

<llo_original>
// kernel: score_model_forward.1
$region0: #{score_model_forward.1}
  #allocation0 [shape = 'u32[]', space=smem, size = 0x4, offset = 0x4, fixed_abs, tag = 'smem constant byte address 0x4 - core index']
  #allocation1 [shape = 'u32[144,128]{1,0:T(1,128)}', space=vmem, size = 0x12000, scoped, tag = 'internal scratch']
  #allocation2 [shape = 'f32[1,1]{1,0:T(1,128)S(1)}', space=vmem, size = 0x200, scoped, tag = 'scoped memory for score_model_forward.1']
  %s0 = inlined_call_operand.vmem [shape: bf16[8,2304], index: 0, kind: input, shape index: {}]
  %s1 = inlined_call_operand.vmem [shape: bf16[8,2304], index: 1, kind: input, shape index: {}]
  %s2 = inlined_call_operand.vmem [shape: bf16[8,2304], index: 2, kind: input, shape index: {}]
  %s3 = inlined_call_operand.vmem [shape: f32[8,128], index: 3, kind: input, shape index: {}]
  %s4 = inlined_call_operand.vmem [shape: f32[8,128], index: 4, kind: input, shape index: {}]
  %s5 = inlined_call_operand.vmem [shape: bf16[2304,128], index: 5, kind: input, shape index: {}]
  %s6 = inlined_call_operand.hbm [shape: bf16[2304,128], index: 6, kind: input, shape index: {}]
  %s7 = inlined_call_operand.hbm [shape: bf16[2304,128], index: 7, kind: input, shape index: {}]
  %s8 = inlined_call_operand.vmem [shape: f32[1,128], index: 8, kind: input, shape index: {}]
  %s9 = inlined_call_operand.<no memory space> [shape: f32[1,1], index: 9, kind: input, shape index: {}]
  %s10 = inlined_call_operand.vmem [shape: f32[8,1], index: 10, kind: output, shape index: {0}]
  %s11 = inlined_call_operand.vmem [shape: f32[8,1], index: 11, kind: output, shape index: {1}]
  %12 = xla_tuple %s10, %s11
  %s13 = sld [smem:[#allocation0]]
  $region66: #{score_model_forward.1} parent=0
    _
  %s15 = ssub.s32 1, %s13
  %s16 = scalar_select 0, %s15, %s13
  %v17 = vstv %s9
  %18 = vst [vmem:[#allocation2] sm:$0x1] %v17
  $region1: #{score_model_forward.1} parent=0
    #allocation3 [shape = 'u8[589824]{0}', space=vmem, size = 0x90000, scoped, tag = 'input window, operand 6, single buffered']
    #allocation4 [shape = 's32[1]{0}', space=sflag, size = 0x4, scoped, tag = 'scoped memory for score_model_forward.1']
    #allocation5 [shape = 'u8[589824]{0}', space=vmem, size = 0x90000, scoped, tag = 'input window, operand 7, single buffered']
    #allocation6 [shape = 's32[1]{0}', space=sflag, size = 0x4, scoped, tag = 'scoped memory for score_model_forward.1']
    %19 = vsyncpa [#allocation4], 0
    %20 = vsyncpa [#allocation6], 0
    // Predicated region
    $region2: #{score_model_forward.1} parent=1 // pred_check
      _
    $region3: #{score_model_forward.1} parent=1 // pred_check_branch
      %22 = sbr.rel (0) target = $region5
    $region4: #{score_model_forward.1} parent=1 // pred_region
      _
    $region5: #{score_model_forward.1} parent=1 // pred_fallthru
      _
    // Predicated region
    $region6: #{score_model_forward.1} parent=1 // pred_check
      _
    $region7: #{score_model_forward.1} parent=1 // pred_check_branch
      %24 = sbr.rel (0) target = $region9
    $region8: #{score_model_forward.1} parent=1 // pred_region
      _
    $region9: #{score_model_forward.1} parent=1 // pred_fallthru
      _
    // Predicated region
    $region10: #{score_model_forward.1} parent=1 // pred_check
      _
    $region11: #{score_model_forward.1} parent=1 // pred_check_branch
      %26 = sbr.rel (0) target = $region13
    $region12: #{score_model_forward.1} parent=1 // pred_region
      _
    $region13: #{score_model_forward.1} parent=1 // pred_fallthru
      _
    // Predicated region
    $region14: #{score_model_forward.1} parent=1 // pred_check
      _
    $region15: #{score_model_forward.1} parent=1 // pred_check_branch
      %28 = sbr.rel (0) target = $region17
    $region16: #{score_model_forward.1} parent=1 // pred_region
      _
    $region17: #{score_model_forward.1} parent=1 // pred_fallthru
      _
    // Predicated region
    $region18: #{score_model_forward.1} parent=1 // pred_check
      _
    $region19: #{score_model_forward.1} parent=1 // pred_check_branch
      %30 = sbr.rel (0) target = $region21
    $region20: #{score_model_forward.1} parent=1 // pred_region
      _
    $region21: #{score_model_forward.1} parent=1 // pred_fallthru
      _
    // Predicated region
    $region22: #{score_model_forward.1} parent=1 // pred_check
      _
    $region23: #{score_model_forward.1} parent=1 // pred_check_branch
      %32 = sbr.rel (0) target = $region25
    $region24: #{score_model_forward.1} parent=1 // pred_region
      _
    $region25: #{score_model_forward.1} parent=1 // pred_fallthru
      _
    // Predicated region
    $region26: #{score_model_forward.1} parent=1 // pred_check
      _
    $region27: #{score_model_forward.1} parent=1 // pred_check_branch
      %34 = sbr.rel (0) target = $region29
    $region28: #{score_model_forward.1} parent=1 // pred_region
      %s36 = ssub.s32 18432, 18432
      %37 = vsyncadd [#allocation4], %s36
      %s38 = sshll.u32 [#allocation3], 4
      %s39 = int_to_ptr.vmem [resolvable:$true] %s38
      %44 = dma.hbm_to_vmem [thread:$0]  %s6, 18432, %s39, [#allocation4], 64, 64, 4
    $region29: #{score_model_forward.1} parent=1 // pred_fallthru
      _
    // Predicated region
    $region30: #{score_model_forward.1} parent=1 // pred_check
      _
    $region31: #{score_model_forward.1} parent=1 // pred_check_branch
      %46 = sbr.rel (0) target = $region33
    $region32: #{score_model_forward.1} parent=1 // pred_region
      %s48 = ssub.s32 18432, 18432
      %49 = vsyncadd [#allocation6], %s48
      %s50 = sshll.u32 [#allocation5], 4
      %s51 = int_to_ptr.vmem [resolvable:$true] %s50
      %56 = dma.hbm_to_vmem [thread:$0]  %s7, 18432, %s51, [#allocation6], 64, 64, 4
    $region33: #{score_model_forward.1} parent=1 // pred_fallthru
      _
    // Predicated region
    $region34: #{score_model_forward.1} parent=1 // pred_check
      _
    $region35: #{score_model_forward.1} parent=1 // pred_check_branch
      %58 = sbr.rel (0) target = $region37
    $region36: #{score_model_forward.1} parent=1 // pred_region
      _
    $region37: #{score_model_forward.1} parent=1 // pred_fallthru
      _
    // Predicated region
    $region38: #{score_model_forward.1} parent=1 // pred_check
      _
    $region39: #{score_model_forward.1} parent=1 // pred_check_branch
      %60 = sbr.rel (0) target = $region41
    $region40: #{score_model_forward.1} parent=1 // pred_region
      _
    $region41: #{score_model_forward.1} parent=1 // pred_fallthru
      _
    // Predicated region
    $region42: #{score_model_forward.1} parent=1 // pred_check
      _
    $region43: #{score_model_forward.1} parent=1 // pred_check_branch
      %62 = sbr.rel (0) target = $region45
    $region44: #{score_model_forward.1} parent=1 // pred_region
      %63 = dma.done [#allocation4], 18432
    $region45: #{score_model_forward.1} parent=1 // pred_fallthru
      _
    // Predicated region
    $region46: #{score_model_forward.1} parent=1 // pred_check
      _
    $region47: #{score_model_forward.1} parent=1 // pred_check_branch
      %65 = sbr.rel (0) target = $region49
    $region48: #{score_model_forward.1} parent=1 // pred_region
      %66 = dma.done [#allocation6], 18432
    $region49: #{score_model_forward.1} parent=1 // pred_fallthru
      _
    %v68 = vld [vmem:[%s0] sm:$0xff]
    %v69 = vld [vmem:[%s0 + $0x8] sm:$0xff]
    %v70 = vld [vmem:[%s0 + $0x10] sm:$0xff]
    %v71 = vld [vmem:[%s0 + $0x18] sm:$0xff]
    %v72 = vld [vmem:[%s0 + $0x20] sm:$0xff]
    %v73 = vld [vmem:[%s0 + $0x28] sm:$0xff]
    %v74 = vld [vmem:[%s0 + $0x30] sm:$0xff]
    %v75 = vld [vmem:[%s0 + $0x38] sm:$0xff]
    %v76 = vld [vmem:[%s0 + $0x40] sm:$0xff]
    %v77 = vunpack.c.l.bf16 %v68
    %v78 = vunpack.c.h.bf16 %v68
    %v79 = vunpack.c.l.bf16 %v69
    %v80 = vunpack.c.h.bf16 %v69
    %v81 = vunpack.c.l.bf16 %v70
    %v82 = vunpack.c.h.bf16 %v70
    %v83 = vunpack.c.l.bf16 %v71
    %v84 = vunpack.c.h.bf16 %v71
    %v85 = vunpack.c.l.bf16 %v72
    %v86 = vunpack.c.h.bf16 %v72
    %v87 = vunpack.c.l.bf16 %v73
    %v88 = vunpack.c.h.bf16 %v73
    %v89 = vunpack.c.l.bf16 %v74
    %v90 = vunpack.c.h.bf16 %v74
    %v91 = vunpack.c.l.bf16 %v75
    %v92 = vunpack.c.h.bf16 %v75
    %v93 = vunpack.c.l.bf16 %v76
    %v94 = vunpack.c.h.bf16 %v76
    %v95 = vld [vmem:[%s5] sm:$0xf]
    %v96 = vld [vmem:[%s5 + $0x4] sm:$0xf]
    %v97 = vld [vmem:[%s5 + $0x8] sm:$0xf]
    %v98 = vld [vmem:[%s5 + $0xc] sm:$0xf]
    %v99 = vld [vmem:[%s5 + $0x10] sm:$0xf]
    %v100 = vld [vmem:[%s5 + $0x14] sm:$0xf]
    %v101 = vld [vmem:[%s5 + $0x18] sm:$0xf]
    %v102 = vld [vmem:[%s5 + $0x1c] sm:$0xf]
    %v103 = vld [vmem:[%s5 + $0x20] sm:$0xf]
    %v104 = vld [vmem:[%s5 + $0x24] sm:$0xf]
    %v105 = vld [vmem:[%s5 + $0x28] sm:$0xf]
    %v106 = vld [vmem:[%s5 + $0x2c] sm:$0xf]
    %v107 = vld [vmem:[%s5 + $0x30] sm:$0xf]
    %v108 = vld [vmem:[%s5 + $0x34] sm:$0xf]
    %v109 = vld [vmem:[%s5 + $0x38] sm:$0xf]
    %v110 = vld [vmem:[%s5 + $0x3c] sm:$0xf]
    %v111 = vld [vmem:[%s5 + $0x40] sm:$0xf]
    %v112 = vld [vmem:[%s5 + $0x44] sm:$0xf]
    %v113 = vld [vmem:[%s5 + $0x48] sm:$0xf]
    %v114 = vld [vmem:[%s5 + $0x4c] sm:$0xf]
    %v115 = vld [vmem:[%s5 + $0x50] sm:$0xf]
    %v116 = vld [vmem:[%s5 + $0x54] sm:$0xf]
    %v117 = vld [vmem:[%s5 + $0x58] sm:$0xf]
    %v118 = vld [vmem:[%s5 + $0x5c] sm:$0xf]
    %v119 = vld [vmem:[%s5 + $0x60] sm:$0xf]
    %v120 = vld [vmem:[%s5 + $0x64] sm:$0xf]
    %v121 = vld [vmem:[%s5 + $0x68] sm:$0xf]
    %v122 = vld [vmem:[%s5 + $0x6c] sm:$0xf]
    %v123 = vld [vmem:[%s5 + $0x70] sm:$0xf]
    %v124 = vld [vmem:[%s5 + $0x74] sm:$0xf]
    %v125 = vld [vmem:[%s5 + $0x78] sm:$0xf]
    %v126 = vld [vmem:[%s5 + $0x7c] sm:$0xf]
    %v127 = vld [vmem:[%s5 + $0x80] sm:$0xf]
    %v128 = vld [vmem:[%s5 + $0x84] sm:$0xf]
    %v129 = vld [vmem:[%s5 + $0x88] sm:$0xf]
    %v130 = vld [vmem:[%s5 + $0x8c] sm:$0xf]
    %v131 = vld [vmem:[%s5 + $0x90] sm:$0xf]
    %v132 = vld [vmem:[%s5 + $0x94] sm:$0xf]
    %v133 = vld [vmem:[%s5 + $0x98] sm:$0xf]
    %v134 = vld [vmem:[%s5 + $0x9c] sm:$0xf]
    %v135 = vld [vmem:[%s5 + $0xa0] sm:$0xf]
    %v136 = vld [vmem:[%s5 + $0xa4] sm:$0xf]
    %v137 = vld [vmem:[%s5 + $0xa8] sm:$0xf]
    %v138 = vld [vmem:[%s5 + $0xac] sm:$0xf]
    %v139 = vld [vmem:[%s5 + $0xb0] sm:$0xf]
    %v140 = vld [vmem:[%s5 + $0xb4] sm:$0xf]
    %v141 = vld [vmem:[%s5 + $0xb8] sm:$0xf]
    %v142 = vld [vmem:[%s5 + $0xbc] sm:$0xf]
    %v143 = vld [vmem:[%s5 + $0xc0] sm:$0xf]
    %v144 = vld [vmem:[%s5 + $0xc4] sm:$0xf]
    %v145 = vld [vmem:[%s5 + $0xc8] sm:$0xf]
    %v146 = vld [vmem:[%s5 + $0xcc] sm:$0xf]
    %v147 = vld [vmem:[%s5 + $0xd0] sm:$0xf]
    %v148 = vld [vmem:[%s5 + $0xd4] sm:$0xf]
    %v149 = vld [vmem:[%s5 + $0xd8] sm:$0xf]
    %v150 = vld [vmem:[%s5 + $0xdc] sm:$0xf]
    %v151 = vld [vmem:[%s5 + $0xe0] sm:$0xf]
    %v152 = vld [vmem:[%s5 + $0xe4] sm:$0xf]
    %v153 = vld [vmem:[%s5 + $0xe8] sm:$0xf]
    %v154 = vld [vmem:[%s5 + $0xec] sm:$0xf]
    %v155 = vld [vmem:[%s5 + $0xf0] sm:$0xf]
    %v156 = vld [vmem:[%s5 + $0xf4] sm:$0xf]
    %v157 = vld [vmem:[%s5 + $0xf8] sm:$0xf]
    %v158 = vld [vmem:[%s5 + $0xfc] sm:$0xf]
    %v159 = vld [vmem:[%s5 + $0x100] sm:$0xf]
    %v160 = vld [vmem:[%s5 + $0x104] sm:$0xf]
    %v161 = vld [vmem:[%s5 + $0x108] sm:$0xf]
    %v162 = vld [vmem:[%s5 + $0x10c] sm:$0xf]
    %v163 = vld [vmem:[%s5 + $0x110] sm:$0xf]
    %v164 = vld [vmem:[%s5 + $0x114] sm:$0xf]
    %v165 = vld [vmem:[%s5 + $0x118] sm:$0xf]
    %v166 = vld [vmem:[%s5 + $0x11c] sm:$0xf]
    %v167 = vld [vmem:[%s5 + $0x120] sm:$0xf]
    %v168 = vld [vmem:[%s5 + $0x124] sm:$0xf]
    %v169 = vld [vmem:[%s5 + $0x128] sm:$0xf]
    %v170 = vld [vmem:[%s5 + $0x12c] sm:$0xf]
    %v171 = vld [vmem:[%s5 + $0x130] sm:$0xf]
    %v172 = vld [vmem:[%s5 + $0x134] sm:$0xf]
    %v173 = vld [vmem:[%s5 + $0x138] sm:$0xf]
    %v174 = vld [vmem:[%s5 + $0x13c] sm:$0xf]
    %v175 = vld [vmem:[%s5 + $0x140] sm:$0xf]
    %v176 = vld [vmem:[%s5 + $0x144] sm:$0xf]
    %v177 = vld [vmem:[%s5 + $0x148] sm:$0xf]
    %v178 = vld [vmem:[%s5 + $0x14c] sm:$0xf]
    %v179 = vld [vmem:[%s5 + $0x150] sm:$0xf]
    %v180 = vld [vmem:[%s5 + $0x154] sm:$0xf]
    %v181 = vld [vmem:[%s5 + $0x158] sm:$0xf]
    %v182 = vld [vmem:[%s5 + $0x15c] sm:$0xf]
    %v183 = vld [vmem:[%s5 + $0x160] sm:$0xf]
    %v184 = vld [vmem:[%s5 + $0x164] sm:$0xf]
    %v185 = vld [vmem:[%s5 + $0x168] sm:$0xf]
    %v186 = vld [vmem:[%s5 + $0x16c] sm:$0xf]
    %v187 = vld [vmem:[%s5 + $0x170] sm:$0xf]
    %v188 = vld [vmem:[%s5 + $0x174] sm:$0xf]
    %v189 = vld [vmem:[%s5 + $0x178] sm:$0xf]
    %v190 = vld [vmem:[%s5 + $0x17c] sm:$0xf]
    %v191 = vld [vmem:[%s5 + $0x180] sm:$0xf]
    %v192 = vld [vmem:[%s5 + $0x184] sm:$0xf]
    %v193 = vld [vmem:[%s5 + $0x188] sm:$0xf]
    %v194 = vld [vmem:[%s5 + $0x18c] sm:$0xf]
    %v195 = vld [vmem:[%s5 + $0x190] sm:$0xf]
    %v196 = vld [vmem:[%s5 + $0x194] sm:$0xf]
    %v197 = vld [vmem:[%s5 + $0x198] sm:$0xf]
    %v198 = vld [vmem:[%s5 + $0x19c] sm:$0xf]
    %v199 = vld [vmem:[%s5 + $0x1a0] sm:$0xf]
    %v200 = vld [vmem:[%s5 + $0x1a4] sm:$0xf]
    %v201 = vld [vmem:[%s5 + $0x1a8] sm:$0xf]
    %v202 = vld [vmem:[%s5 + $0x1ac] sm:$0xf]
    %v203 = vld [vmem:[%s5 + $0x1b0] sm:$0xf]
    %v204 = vld [vmem:[%s5 + $0x1b4] sm:$0xf]
    %v205 = vld [vmem:[%s5 + $0x1b8] sm:$0xf]
    %v206 = vld [vmem:[%s5 + $0x1bc] sm:$0xf]
    %v207 = vld [vmem:[%s5 + $0x1c0] sm:$0xf]
    %v208 = vld [vmem:[%s5 + $0x1c4] sm:$0xf]
    %v209 = vld [vmem:[%s5 + $0x1c8] sm:$0xf]
    %v210 = vld [vmem:[%s5 + $0x1cc] sm:$0xf]
    %v211 = vld [vmem:[%s5 + $0x1d0] sm:$0xf]
    %v212 = vld [vmem:[%s5 + $0x1d4] sm:$0xf]
    %v213 = vld [vmem:[%s5 + $0x1d8] sm:$0xf]
    %v214 = vld [vmem:[%s5 + $0x1dc] sm:$0xf]
    %v215 = vld [vmem:[%s5 + $0x1e0] sm:$0xf]
    %v216 = vld [vmem:[%s5 + $0x1e4] sm:$0xf]
    %v217 = vld [vmem:[%s5 + $0x1e8] sm:$0xf]
    %v218 = vld [vmem:[%s5 + $0x1ec] sm:$0xf]
    %v219 = vld [vmem:[%s5 + $0x1f0] sm:$0xf]
    %v220 = vld [vmem:[%s5 + $0x1f4] sm:$0xf]
    %v221 = vld [vmem:[%s5 + $0x1f8] sm:$0xf]
    %v222 = vld [vmem:[%s5 + $0x1fc] sm:$0xf]
    %v223 = vld [vmem:[%s5 + $0x200] sm:$0xf]
    %v224 = vld [vmem:[%s5 + $0x204] sm:$0xf]
    %v225 = vld [vmem:[%s5 + $0x208] sm:$0xf]
    %v226 = vld [vmem:[%s5 + $0x20c] sm:$0xf]
    %v227 = vld [vmem:[%s5 + $0x210] sm:$0xf]
    %v228 = vld [vmem:[%s5 + $0x214] sm:$0xf]
    %v229 = vld [vmem:[%s5 + $0x218] sm:$0xf]
    %v230 = vld [vmem:[%s5 + $0x21c] sm:$0xf]
    %v231 = vld [vmem:[%s5 + $0x220] sm:$0xf]
    %v232 = vld [vmem:[%s5 + $0x224] sm:$0xf]
    %v233 = vld [vmem:[%s5 + $0x228] sm:$0xf]
    %v234 = vld [vmem:[%s5 + $0x22c] sm:$0xf]
    %v235 = vld [vmem:[%s5 + $0x230] sm:$0xf]
    %v236 = vld [vmem:[%s5 + $0x234] sm:$0xf]
    %v237 = vld [vmem:[%s5 + $0x238] sm:$0xf]
    %v238 = vld [vmem:[%s5 + $0x23c] sm:$0xf]
    %v239 = vld [vmem:[%s5 + $0x240] sm:$0xf]
    %v240 = vld [vmem:[%s5 + $0x244] sm:$0xf]
    %v241 = vld [vmem:[%s5 + $0x248] sm:$0xf]
    %v242 = vld [vmem:[%s5 + $0x24c] sm:$0xf]
    %v243 = vld [vmem:[%s5 + $0x250] sm:$0xf]
    %v244 = vld [vmem:[%s5 + $0x254] sm:$0xf]
    %v245 = vld [vmem:[%s5 + $0x258] sm:$0xf]
    %v246 = vld [vmem:[%s5 + $0x25c] sm:$0xf]
    %v247 = vld [vmem:[%s5 + $0x260] sm:$0xf]
    %v248 = vld [vmem:[%s5 + $0x264] sm:$0xf]
    %v249 = vld [vmem:[%s5 + $0x268] sm:$0xf]
    %v250 = vld [vmem:[%s5 + $0x26c] sm:$0xf]
    %v251 = vld [vmem:[%s5 + $0x270] sm:$0xf]
    %v252 = vld [vmem:[%s5 + $0x274] sm:$0xf]
    %v253 = vld [vmem:[%s5 + $0x278] sm:$0xf]
    %v254 = vld [vmem:[%s5 + $0x27c] sm:$0xf]
    %v255 = vld [vmem:[%s5 + $0x280] sm:$0xf]
    %v256 = vld [vmem:[%s5 + $0x284] sm:$0xf]
    %v257 = vld [vmem:[%s5 + $0x288] sm:$0xf]
    %v258 = vld [vmem:[%s5 + $0x28c] sm:$0xf]
    %v259 = vld [vmem:[%s5 + $0x290] sm:$0xf]
    %v260 = vld [vmem:[%s5 + $0x294] sm:$0xf]
    %v261 = vld [vmem:[%s5 + $0x298] sm:$0xf]
    %v262 = vld [vmem:[%s5 + $0x29c] sm:$0xf]
    %v263 = vld [vmem:[%s5 + $0x2a0] sm:$0xf]
    %v264 = vld [vmem:[%s5 + $0x2a4] sm:$0xf]
    %v265 = vld [vmem:[%s5 + $0x2a8] sm:$0xf]
    %v266 = vld [vmem:[%s5 + $0x2ac] sm:$0xf]
    %v267 = vld [vmem:[%s5 + $0x2b0] sm:$0xf]
    %v268 = vld [vmem:[%s5 + $0x2b4] sm:$0xf]
    %v269 = vld [vmem:[%s5 + $0x2b8] sm:$0xf]
    %v270 = vld [vmem:[%s5 + $0x2bc] sm:$0xf]
    %v271 = vld [vmem:[%s5 + $0x2c0] sm:$0xf]
    %v272 = vld [vmem:[%s5 + $0x2c4] sm:$0xf]
    %v273 = vld [vmem:[%s5 + $0x2c8] sm:$0xf]
    %v274 = vld [vmem:[%s5 + $0x2cc] sm:$0xf]
    %v275 = vld [vmem:[%s5 + $0x2d0] sm:$0xf]
    %v276 = vld [vmem:[%s5 + $0x2d4] sm:$0xf]
    %v277 = vld [vmem:[%s5 + $0x2d8] sm:$0xf]
    %v278 = vld [vmem:[%s5 + $0x2dc] sm:$0xf]
    %v279 = vld [vmem:[%s5 + $0x2e0] sm:$0xf]
    %v280 = vld [vmem:[%s5 + $0x2e4] sm:$0xf]
    %v281 = vld [vmem:[%s5 + $0x2e8] sm:$0xf]
    %v282 = vld [vmem:[%s5 + $0x2ec] sm:$0xf]
    %v283 = vld [vmem:[%s5 + $0x2f0] sm:$0xf]
    %v284 = vld [vmem:[%s5 + $0x2f4] sm:$0xf]
    %v285 = vld [vmem:[%s5 + $0x2f8] sm:$0xf]
    %v286 = vld [vmem:[%s5 + $0x2fc] sm:$0xf]
    %v287 = vld [vmem:[%s5 + $0x300] sm:$0xf]
    %v288 = vld [vmem:[%s5 + $0x304] sm:$0xf]
    %v289 = vld [vmem:[%s5 + $0x308] sm:$0xf]
    %v290 = vld [vmem:[%s5 + $0x30c] sm:$0xf]
    %v291 = vld [vmem:[%s5 + $0x310] sm:$0xf]
    %v292 = vld [vmem:[%s5 + $0x314] sm:$0xf]
    %v293 = vld [vmem:[%s5 + $0x318] sm:$0xf]
    %v294 = vld [vmem:[%s5 + $0x31c] sm:$0xf]
    %v295 = vld [vmem:[%s5 + $0x320] sm:$0xf]
    %v296 = vld [vmem:[%s5 + $0x324] sm:$0xf]
    %v297 = vld [vmem:[%s5 + $0x328] sm:$0xf]
    %v298 = vld [vmem:[%s5 + $0x32c] sm:$0xf]
    %v299 = vld [vmem:[%s5 + $0x330] sm:$0xf]
    %v300 = vld [vmem:[%s5 + $0x334] sm:$0xf]
    %v301 = vld [vmem:[%s5 + $0x338] sm:$0xf]
    %v302 = vld [vmem:[%s5 + $0x33c] sm:$0xf]
    %v303 = vld [vmem:[%s5 + $0x340] sm:$0xf]
    %v304 = vld [vmem:[%s5 + $0x344] sm:$0xf]
    %v305 = vld [vmem:[%s5 + $0x348] sm:$0xf]
    %v306 = vld [vmem:[%s5 + $0x34c] sm:$0xf]
    %v307 = vld [vmem:[%s5 + $0x350] sm:$0xf]
    %v308 = vld [vmem:[%s5 + $0x354] sm:$0xf]
    %v309 = vld [vmem:[%s5 + $0x358] sm:$0xf]
    %v310 = vld [vmem:[%s5 + $0x35c] sm:$0xf]
    %v311 = vld [vmem:[%s5 + $0x360] sm:$0xf]
    %v312 = vld [vmem:[%s5 + $0x364] sm:$0xf]
    %v313 = vld [vmem:[%s5 + $0x368] sm:$0xf]
    %v314 = vld [vmem:[%s5 + $0x36c] sm:$0xf]
    %v315 = vld [vmem:[%s5 + $0x370] sm:$0xf]
    %v316 = vld [vmem:[%s5 + $0x374] sm:$0xf]
    %v317 = vld [vmem:[%s5 + $0x378] sm:$0xf]
    %v318 = vld [vmem:[%s5 + $0x37c] sm:$0xf]
    %v319 = vld [vmem:[%s5 + $0x380] sm:$0xf]
    %v320 = vld [vmem:[%s5 + $0x384] sm:$0xf]
    %v321 = vld [vmem:[%s5 + $0x388] sm:$0xf]
    %v322 = vld [vmem:[%s5 + $0x38c] sm:$0xf]
    %v323 = vld [vmem:[%s5 + $0x390] sm:$0xf]
    %v324 = vld [vmem:[%s5 + $0x394] sm:$0xf]
    %v325 = vld [vmem:[%s5 + $0x398] sm:$0xf]
    %v326 = vld [vmem:[%s5 + $0x39c] sm:$0xf]
    %v327 = vld [vmem:[%s5 + $0x3a0] sm:$0xf]
    %v328 = vld [vmem:[%s5 + $0x3a4] sm:$0xf]
    %v329 = vld [vmem:[%s5 + $0x3a8] sm:$0xf]
    %v330 = vld [vmem:[%s5 + $0x3ac] sm:$0xf]
    %v331 = vld [vmem:[%s5 + $0x3b0] sm:$0xf]
    %v332 = vld [vmem:[%s5 + $0x3b4] sm:$0xf]
    %v333 = vld [vmem:[%s5 + $0x3b8] sm:$0xf]
    %v334 = vld [vmem:[%s5 + $0x3bc] sm:$0xf]
    %v335 = vld [vmem:[%s5 + $0x3c0] sm:$0xf]
    %v336 = vld [vmem:[%s5 + $0x3c4] sm:$0xf]
    %v337 = vld [vmem:[%s5 + $0x3c8] sm:$0xf]
    %v338 = vld [vmem:[%s5 + $0x3cc] sm:$0xf]
    %v339 = vld [vmem:[%s5 + $0x3d0] sm:$0xf]
    %v340 = vld [vmem:[%s5 + $0x3d4] sm:$0xf]
    %v341 = vld [vmem:[%s5 + $0x3d8] sm:$0xf]
    %v342 = vld [vmem:[%s5 + $0x3dc] sm:$0xf]
    %v343 = vld [vmem:[%s5 + $0x3e0] sm:$0xf]
    %v344 = vld [vmem:[%s5 + $0x3e4] sm:$0xf]
    %v345 = vld [vmem:[%s5 + $0x3e8] sm:$0xf]
    %v346 = vld [vmem:[%s5 + $0x3ec] sm:$0xf]
    %v347 = vld [vmem:[%s5 + $0x3f0] sm:$0xf]
    %v348 = vld [vmem:[%s5 + $0x3f4] sm:$0xf]
    %v349 = vld [vmem:[%s5 + $0x3f8] sm:$0xf]
    %v350 = vld [vmem:[%s5 + $0x3fc] sm:$0xf]
    %v351 = vld [vmem:[%s5 + $0x400] sm:$0xf]
    %v352 = vld [vmem:[%s5 + $0x404] sm:$0xf]
    %v353 = vld [vmem:[%s5 + $0x408] sm:$0xf]
    %v354 = vld [vmem:[%s5 + $0x40c] sm:$0xf]
    %v355 = vld [vmem:[%s5 + $0x410] sm:$0xf]
    %v356 = vld [vmem:[%s5 + $0x414] sm:$0xf]
    %v357 = vld [vmem:[%s5 + $0x418] sm:$0xf]
    %v358 = vld [vmem:[%s5 + $0x41c] sm:$0xf]
    %v359 = vld [vmem:[%s5 + $0x420] sm:$0xf]
    %v360 = vld [vmem:[%s5 + $0x424] sm:$0xf]
    %v361 = vld [vmem:[%s5 + $0x428] sm:$0xf]
    %v362 = vld [vmem:[%s5 + $0x42c] sm:$0xf]
    %v363 = vld [vmem:[%s5 + $0x430] sm:$0xf]
    %v364 = vld [vmem:[%s5 + $0x434] sm:$0xf]
    %v365 = vld [vmem:[%s5 + $0x438] sm:$0xf]
    %v366 = vld [vmem:[%s5 + $0x43c] sm:$0xf]
    %v367 = vld [vmem:[%s5 + $0x440] sm:$0xf]
    %v368 = vld [vmem:[%s5 + $0x444] sm:$0xf]
    %v369 = vld [vmem:[%s5 + $0x448] sm:$0xf]
    %v370 = vld [vmem:[%s5 + $0x44c] sm:$0xf]
    %v371 = vld [vmem:[%s5 + $0x450] sm:$0xf]
    %v372 = vld [vmem:[%s5 + $0x454] sm:$0xf]
    %v373 = vld [vmem:[%s5 + $0x458] sm:$0xf]
    %v374 = vld [vmem:[%s5 + $0x45c] sm:$0xf]
    %v375 = vld [vmem:[%s5 + $0x460] sm:$0xf]
    %v376 = vld [vmem:[%s5 + $0x464] sm:$0xf]
    %v377 = vld [vmem:[%s5 + $0x468] sm:$0xf]
    %v378 = vld [vmem:[%s5 + $0x46c] sm:$0xf]
    %v379 = vld [vmem:[%s5 + $0x470] sm:$0xf]
    %v380 = vld [vmem:[%s5 + $0x474] sm:$0xf]
    %v381 = vld [vmem:[%s5 + $0x478] sm:$0xf]
    %v382 = vld [vmem:[%s5 + $0x47c] sm:$0xf]
    %v392 = vunpack.c.l.b16 %v68
    %v393 = vunpack.c.h.b16 %v68
    %v394 = vunpack.c.l.b16 %v69
    %v395 = vunpack.c.h.b16 %v69
    %v396 = vunpack.c.l.b16 %v70
    %v397 = vunpack.c.h.b16 %v70
    %v398 = vunpack.c.l.b16 %v71
    %v399 = vunpack.c.h.b16 %v71
    %v400 = vunpack.c.l.b16 %v72
    %v401 = vunpack.c.h.b16 %v72
    %v402 = vunpack.c.l.b16 %v73
    %v403 = vunpack.c.h.b16 %v73
    %v404 = vunpack.c.l.b16 %v74
    %v405 = vunpack.c.h.b16 %v74
    %v406 = vunpack.c.l.b16 %v75
    %v407 = vunpack.c.h.b16 %v75
    %v408 = vunpack.c.l.b16 %v76
    %v409 = vunpack.c.h.b16 %v76
    %v410 = vpack.c.b16 %v392, %v392
    %v411 = vpack.c.b16 %v393, %v393
    %v412 = vpack.c.b16 %v394, %v394
    %v413 = vpack.c.b16 %v395, %v395
    %v414 = vpack.c.b16 %v396, %v396
    %v415 = vpack.c.b16 %v397, %v397
    %v416 = vpack.c.b16 %v398, %v398
    %v417 = vpack.c.b16 %v399, %v399
    %v418 = vpack.c.b16 %v400, %v400
    %v419 = vpack.c.b16 %v401, %v401
    %v420 = vpack.c.b16 %v402, %v402
    %v421 = vpack.c.b16 %v403, %v403
    %v422 = vpack.c.b16 %v404, %v404
    %v423 = vpack.c.b16 %v405, %v405
    %v424 = vpack.c.b16 %v406, %v406
    %v425 = vpack.c.b16 %v407, %v407
    %v426 = vpack.c.b16 %v408, %v408
    %v427 = vpack.c.b16 %v409, %v409
    %v734 = vunpack.c.l.b16 %v95
    %v735 = vunpack.c.l.b16 %v96
    %v736 = vunpack.c.l.b16 %v97
    %v737 = vunpack.c.l.b16 %v98
    %v738 = vunpack.c.l.b16 %v99
    %v739 = vunpack.c.l.b16 %v100
    %v740 = vunpack.c.l.b16 %v101
    %v741 = vunpack.c.l.b16 %v102
    %v742 = vunpack.c.l.b16 %v103
    %v743 = vunpack.c.l.b16 %v104
    %v744 = vunpack.c.l.b16 %v105
    %v745 = vunpack.c.l.b16 %v106
    %v746 = vunpack.c.l.b16 %v107
    %v747 = vunpack.c.l.b16 %v108
    %v748 = vunpack.c.l.b16 %v109
    %v749 = vunpack.c.l.b16 %v110
    %v750 = vunpack.c.l.b16 %v111
    %v751 = vunpack.c.l.b16 %v112
    %v752 = vunpack.c.l.b16 %v113
    %v753 = vunpack.c.l.b16 %v114
    %v754 = vunpack.c.l.b16 %v115
    %v755 = vunpack.c.l.b16 %v116
    %v756 = vunpack.c.l.b16 %v117
    %v757 = vunpack.c.l.b16 %v118
    %v758 = vunpack.c.l.b16 %v119
    %v759 = vunpack.c.l.b16 %v120
    %v760 = vunpack.c.l.b16 %v121
    %v761 = vunpack.c.l.b16 %v122
    %v762 = vunpack.c.l.b16 %v123
    %v763 = vunpack.c.l.b16 %v124
    %v764 = vunpack.c.l.b16 %v125
    %v765 = vunpack.c.l.b16 %v126
    %v766 = vunpack.c.l.b16 %v127
    %v767 = vunpack.c.l.b16 %v128
    %v768 = vunpack.c.l.b16 %v129
    %v769 = vunpack.c.l.b16 %v130
    %v770 = vunpack.c.l.b16 %v131
    %v771 = vunpack.c.l.b16 %v132
    %v772 = vunpack.c.l.b16 %v133
    %v773 = vunpack.c.l.b16 %v134
    %v774 = vunpack.c.l.b16 %v135
    %v775 = vunpack.c.l.b16 %v136
    %v776 = vunpack.c.l.b16 %v137
    %v777 = vunpack.c.l.b16 %v138
    %v778 = vunpack.c.l.b16 %v139
    %v779 = vunpack.c.l.b16 %v140
    %v780 = vunpack.c.l.b16 %v141
    %v781 = vunpack.c.l.b16 %v142
    %v782 = vunpack.c.l.b16 %v143
    %v783 = vunpack.c.l.b16 %v144
    %v784 = vunpack.c.l.b16 %v145
    %v785 = vunpack.c.l.b16 %v146
    %v786 = vunpack.c.l.b16 %v147
    %v787 = vunpack.c.l.b16 %v148
    %v788 = vunpack.c.l.b16 %v149
    %v789 = vunpack.c.l.b16 %v150
    %v790 = vunpack.c.l.b16 %v151
    %v791 = vunpack.c.l.b16 %v152
    %v792 = vunpack.c.l.b16 %v153
    %v793 = vunpack.c.l.b16 %v154
    %v794 = vunpack.c.l.b16 %v155
    %v795 = vunpack.c.l.b16 %v156
    %v796 = vunpack.c.l.b16 %v157
    %v797 = vunpack.c.l.b16 %v158
    %v798 = vunpack.c.l.b16 %v159
    %v799 = vunpack.c.l.b16 %v160
    %v800 = vunpack.c.l.b16 %v161
    %v801 = vunpack.c.l.b16 %v162
    %v802 = vunpack.c.l.b16 %v163
    %v803 = vunpack.c.l.b16 %v164
    %v804 = vunpack.c.l.b16 %v165
    %v805 = vunpack.c.l.b16 %v166
    %v806 = vunpack.c.l.b16 %v167
    %v807 = vunpack.c.l.b16 %v168
    %v808 = vunpack.c.l.b16 %v169
    %v809 = vunpack.c.l.b16 %v170
    %v810 = vunpack.c.l.b16 %v171
    %v811 = vunpack.c.l.b16 %v172
    %v812 = vunpack.c.l.b16 %v173
    %v813 = vunpack.c.l.b16 %v174
    %v814 = vunpack.c.l.b16 %v175
    %v815 = vunpack.c.l.b16 %v176
    %v816 = vunpack.c.l.b16 %v177
    %v817 = vunpack.c.l.b16 %v178
    %v818 = vunpack.c.l.b16 %v179
    %v819 = vunpack.c.l.b16 %v180
    %v820 = vunpack.c.l.b16 %v181
    %v821 = vunpack.c.l.b16 %v182
    %v822 = vunpack.c.l.b16 %v183
    %v823 = vunpack.c.l.b16 %v184
    %v824 = vunpack.c.l.b16 %v185
    %v825 = vunpack.c.l.b16 %v186
    %v826 = vunpack.c.l.b16 %v187
    %v827 = vunpack.c.l.b16 %v188
    %v828 = vunpack.c.l.b16 %v189
    %v829 = vunpack.c.l.b16 %v190
    %v830 = vunpack.c.l.b16 %v191
    %v831 = vunpack.c.l.b16 %v192
    %v832 = vunpack.c.l.b16 %v193
    %v833 = vunpack.c.l.b16 %v194
    %v834 = vunpack.c.l.b16 %v195
    %v835 = vunpack.c.l.b16 %v196
    %v836 = vunpack.c.l.b16 %v197
    %v837 = vunpack.c.l.b16 %v198
    %v838 = vunpack.c.l.b16 %v199
    %v839 = vunpack.c.l.b16 %v200
    %v840 = vunpack.c.l.b16 %v201
    %v841 = vunpack.c.l.b16 %v202
    %v842 = vunpack.c.l.b16 %v203
    %v843 = vunpack.c.l.b16 %v204
    %v844 = vunpack.c.l.b16 %v205
    %v845 = vunpack.c.l.b16 %v206
    %v846 = vunpack.c.l.b16 %v207
    %v847 = vunpack.c.l.b16 %v208
    %v848 = vunpack.c.l.b16 %v209
    %v849 = vunpack.c.l.b16 %v210
    %v850 = vunpack.c.l.b16 %v211
    %v851 = vunpack.c.l.b16 %v212
    %v852 = vunpack.c.l.b16 %v213
    %v853 = vunpack.c.l.b16 %v214
    %v854 = vunpack.c.l.b16 %v215
    %v855 = vunpack.c.l.b16 %v216
    %v856 = vunpack.c.l.b16 %v217
    %v857 = vunpack.c.l.b16 %v218
    %v858 = vunpack.c.l.b16 %v219
    %v859 = vunpack.c.l.b16 %v220
    %v860 = vunpack.c.l.b16 %v221
    %v861 = vunpack.c.l.b16 %v222
    %v862 = vunpack.c.l.b16 %v223
    %v863 = vunpack.c.l.b16 %v224
    %v864 = vunpack.c.l.b16 %v225
    %v865 = vunpack.c.l.b16 %v226
    %v866 = vunpack.c.l.b16 %v227
    %v867 = vunpack.c.l.b16 %v228
    %v868 = vunpack.c.l.b16 %v229
    %v869 = vunpack.c.l.b16 %v230
    %v870 = vunpack.c.l.b16 %v231
    %v871 = vunpack.c.l.b16 %v232
    %v872 = vunpack.c.l.b16 %v233
    %v873 = vunpack.c.l.b16 %v234
    %v874 = vunpack.c.l.b16 %v235
    %v875 = vunpack.c.l.b16 %v236
    %v876 = vunpack.c.l.b16 %v237
    %v877 = vunpack.c.l.b16 %v238
    %v878 = vunpack.c.l.b16 %v239
    %v879 = vunpack.c.l.b16 %v240
    %v880 = vunpack.c.l.b16 %v241
    %v881 = vunpack.c.l.b16 %v242
    %v882 = vunpack.c.l.b16 %v243
    %v883 = vunpack.c.l.b16 %v244
    %v884 = vunpack.c.l.b16 %v245
    %v885 = vunpack.c.l.b16 %v246
    %v886 = vunpack.c.l.b16 %v247
    %v887 = vunpack.c.l.b16 %v248
    %v888 = vunpack.c.l.b16 %v249
    %v889 = vunpack.c.l.b16 %v250
    %v890 = vunpack.c.l.b16 %v251
    %v891 = vunpack.c.l.b16 %v252
    %v892 = vunpack.c.l.b16 %v253
    %v893 = vunpack.c.l.b16 %v254
    %v894 = vunpack.c.l.b16 %v255
    %v895 = vunpack.c.l.b16 %v256
    %v896 = vunpack.c.l.b16 %v257
    %v897 = vunpack.c.l.b16 %v258
    %v898 = vunpack.c.l.b16 %v259
    %v899 = vunpack.c.l.b16 %v260
    %v900 = vunpack.c.l.b16 %v261
    %v901 = vunpack.c.l.b16 %v262
    %v902 = vunpack.c.l.b16 %v263
    %v903 = vunpack.c.l.b16 %v264
    %v904 = vunpack.c.l.b16 %v265
    %v905 = vunpack.c.l.b16 %v266
    %v906 = vunpack.c.l.b16 %v267
    %v907 = vunpack.c.l.b16 %v268
    %v908 = vunpack.c.l.b16 %v269
    %v909 = vunpack.c.l.b16 %v270
    %v910 = vunpack.c.l.b16 %v271
    %v911 = vunpack.c.l.b16 %v272
    %v912 = vunpack.c.l.b16 %v273
    %v913 = vunpack.c.l.b16 %v274
    %v914 = vunpack.c.l.b16 %v275
    %v915 = vunpack.c.l.b16 %v276
    %v916 = vunpack.c.l.b16 %v277
    %v917 = vunpack.c.l.b16 %v278
    %v918 = vunpack.c.l.b16 %v279
    %v919 = vunpack.c.l.b16 %v280
    %v920 = vunpack.c.l.b16 %v281
    %v921 = vunpack.c.l.b16 %v282
    %v922 = vunpack.c.l.b16 %v283
    %v923 = vunpack.c.l.b16 %v284
    %v924 = vunpack.c.l.b16 %v285
    %v925 = vunpack.c.l.b16 %v286
    %v926 = vunpack.c.l.b16 %v287
    %v927 = vunpack.c.l.b16 %v288
    %v928 = vunpack.c.l.b16 %v289
    %v929 = vunpack.c.l.b16 %v290
    %v930 = vunpack.c.l.b16 %v291
    %v931 = vunpack.c.l.b16 %v292
    %v932 = vunpack.c.l.b16 %v293
    %v933 = vunpack.c.l.b16 %v294
    %v934 = vunpack.c.l.b16 %v295
    %v935 = vunpack.c.l.b16 %v296
    %v936 = vunpack.c.l.b16 %v297
    %v937 = vunpack.c.l.b16 %v298
    %v938 = vunpack.c.l.b16 %v299
    %v939 = vunpack.c.l.b16 %v300
    %v940 = vunpack.c.l.b16 %v301
    %v941 = vunpack.c.l.b16 %v302
    %v942 = vunpack.c.l.b16 %v303
    %v943 = vunpack.c.l.b16 %v304
    %v944 = vunpack.c.l.b16 %v305
    %v945 = vunpack.c.l.b16 %v306
    %v946 = vunpack.c.l.b16 %v307
    %v947 = vunpack.c.l.b16 %v308
    %v948 = vunpack.c.l.b16 %v309
    %v949 = vunpack.c.l.b16 %v310
    %v950 = vunpack.c.l.b16 %v311
    %v951 = vunpack.c.l.b16 %v312
    %v952 = vunpack.c.l.b16 %v313
    %v953 = vunpack.c.l.b16 %v314
    %v954 = vunpack.c.l.b16 %v315
    %v955 = vunpack.c.l.b16 %v316
    %v956 = vunpack.c.l.b16 %v317
    %v957 = vunpack.c.l.b16 %v318
    %v958 = vunpack.c.l.b16 %v319
    %v959 = vunpack.c.l.b16 %v320
    %v960 = vunpack.c.l.b16 %v321
    %v961 = vunpack.c.l.b16 %v322
    %v962 = vunpack.c.l.b16 %v323
    %v963 = vunpack.c.l.b16 %v324
    %v964 = vunpack.c.l.b16 %v325
    %v965 = vunpack.c.l.b16 %v326
    %v966 = vunpack.c.l.b16 %v327
    %v967 = vunpack.c.l.b16 %v328
    %v968 = vunpack.c.l.b16 %v329
    %v969 = vunpack.c.l.b16 %v330
    %v970 = vunpack.c.l.b16 %v331
    %v971 = vunpack.c.l.b16 %v332
    %v972 = vunpack.c.l.b16 %v333
    %v973 = vunpack.c.l.b16 %v334
    %v974 = vunpack.c.l.b16 %v335
    %v975 = vunpack.c.l.b16 %v336
    %v976 = vunpack.c.l.b16 %v337
    %v977 = vunpack.c.l.b16 %v338
    %v978 = vunpack.c.l.b16 %v339
    %v979 = vunpack.c.l.b16 %v340
    %v980 = vunpack.c.l.b16 %v341
    %v981 = vunpack.c.l.b16 %v342
    %v982 = vunpack.c.l.b16 %v343
    %v983 = vunpack.c.l.b16 %v344
    %v984 = vunpack.c.l.b16 %v345
    %v985 = vunpack.c.l.b16 %v346
    %v986 = vunpack.c.l.b16 %v347
    %v987 = vunpack.c.l.b16 %v348
    %v988 = vunpack.c.l.b16 %v349
    %v989 = vunpack.c.l.b16 %v350
    %v990 = vunpack.c.l.b16 %v351
    %v991 = vunpack.c.l.b16 %v352
    %v992 = vunpack.c.l.b16 %v353
    %v993 = vunpack.c.l.b16 %v354
    %v994 = vunpack.c.l.b16 %v355
    %v995 = vunpack.c.l.b16 %v356
    %v996 = vunpack.c.l.b16 %v357
    %v997 = vunpack.c.l.b16 %v358
    %v998 = vunpack.c.l.b16 %v359
    %v999 = vunpack.c.l.b16 %v360
    %v1000 = vunpack.c.l.b16 %v361
    %v1001 = vunpack.c.l.b16 %v362
    %v1002 = vunpack.c.l.b16 %v363
    %v1003 = vunpack.c.l.b16 %v364
    %v1004 = vunpack.c.l.b16 %v365
    %v1005 = vunpack.c.l.b16 %v366
    %v1006 = vunpack.c.l.b16 %v367
    %v1007 = vunpack.c.l.b16 %v368
    %v1008 = vunpack.c.l.b16 %v369
    %v1009 = vunpack.c.l.b16 %v370
    %v1010 = vunpack.c.l.b16 %v371
    %v1011 = vunpack.c.l.b16 %v372
    %v1012 = vunpack.c.l.b16 %v373
    %v1013 = vunpack.c.l.b16 %v374
    %v1014 = vunpack.c.l.b16 %v375
    %v1015 = vunpack.c.l.b16 %v376
    %v1016 = vunpack.c.l.b16 %v377
    %v1017 = vunpack.c.l.b16 %v378
    %v1018 = vunpack.c.l.b16 %v379
    %v1019 = vunpack.c.l.b16 %v380
    %v1020 = vunpack.c.l.b16 %v381
    %v1021 = vunpack.c.l.b16 %v382
    %v1022 = vpack.c.b16 %v735, %v734
    %v1023 = vpack.c.b16 %v737, %v736
    %v1024 = vpack.c.b16 %v739, %v738
    %v1025 = vpack.c.b16 %v741, %v740
    %v1026 = vpack.c.b16 %v743, %v742
    %v1027 = vpack.c.b16 %v745, %v744
    %v1028 = vpack.c.b16 %v747, %v746
    %v1029 = vpack.c.b16 %v749, %v748
    %v1030 = vpack.c.b16 %v751, %v750
    %v1031 = vpack.c.b16 %v753, %v752
    %v1032 = vpack.c.b16 %v755, %v754
    %v1033 = vpack.c.b16 %v757, %v756
    %v1034 = vpack.c.b16 %v759, %v758
    %v1035 = vpack.c.b16 %v761, %v760
    %v1036 = vpack.c.b16 %v763, %v762
    %v1037 = vpack.c.b16 %v765, %v764
    %v1038 = vpack.c.b16 %v767, %v766
    %v1039 = vpack.c.b16 %v769, %v768
    %v1040 = vpack.c.b16 %v771, %v770
    %v1041 = vpack.c.b16 %v773, %v772
    %v1042 = vpack.c.b16 %v775, %v774
    %v1043 = vpack.c.b16 %v777, %v776
    %v1044 = vpack.c.b16 %v779, %v778
    %v1045 = vpack.c.b16 %v781, %v780
    %v1046 = vpack.c.b16 %v783, %v782
    %v1047 = vpack.c.b16 %v785, %v784
    %v1048 = vpack.c.b16 %v787, %v786
    %v1049 = vpack.c.b16 %v789, %v788
    %v1050 = vpack.c.b16 %v791, %v790
    %v1051 = vpack.c.b16 %v793, %v792
    %v1052 = vpack.c.b16 %v795, %v794
    %v1053 = vpack.c.b16 %v797, %v796
    %v1054 = vpack.c.b16 %v799, %v798
    %v1055 = vpack.c.b16 %v801, %v800
    %v1056 = vpack.c.b16 %v803, %v802
    %v1057 = vpack.c.b16 %v805, %v804
    %v1058 = vpack.c.b16 %v807, %v806
    %v1059 = vpack.c.b16 %v809, %v808
    %v1060 = vpack.c.b16 %v811, %v810
    %v1061 = vpack.c.b16 %v813, %v812
    %v1062 = vpack.c.b16 %v815, %v814
    %v1063 = vpack.c.b16 %v817, %v816
    %v1064 = vpack.c.b16 %v819, %v818
    %v1065 = vpack.c.b16 %v821, %v820
    %v1066 = vpack.c.b16 %v823, %v822
    %v1067 = vpack.c.b16 %v825, %v824
    %v1068 = vpack.c.b16 %v827, %v826
    %v1069 = vpack.c.b16 %v829, %v828
    %v1070 = vpack.c.b16 %v831, %v830
    %v1071 = vpack.c.b16 %v833, %v832
    %v1072 = vpack.c.b16 %v835, %v834
    %v1073 = vpack.c.b16 %v837, %v836
    %v1074 = vpack.c.b16 %v839, %v838
    %v1075 = vpack.c.b16 %v841, %v840
    %v1076 = vpack.c.b16 %v843, %v842
    %v1077 = vpack.c.b16 %v845, %v844
    %v1078 = vpack.c.b16 %v847, %v846
    %v1079 = vpack.c.b16 %v849, %v848
    %v1080 = vpack.c.b16 %v851, %v850
    %v1081 = vpack.c.b16 %v853, %v852
    %v1082 = vpack.c.b16 %v855, %v854
    %v1083 = vpack.c.b16 %v857, %v856
    %v1084 = vpack.c.b16 %v859, %v858
    %v1085 = vpack.c.b16 %v861, %v860
    %v1086 = vpack.c.b16 %v863, %v862
    %v1087 = vpack.c.b16 %v865, %v864
    %v1088 = vpack.c.b16 %v867, %v866
    %v1089 = vpack.c.b16 %v869, %v868
    %v1090 = vpack.c.b16 %v871, %v870
    %v1091 = vpack.c.b16 %v873, %v872
    %v1092 = vpack.c.b16 %v875, %v874
    %v1093 = vpack.c.b16 %v877, %v876
    %v1094 = vpack.c.b16 %v879, %v878
    %v1095 = vpack.c.b16 %v881, %v880
    %v1096 = vpack.c.b16 %v883, %v882
    %v1097 = vpack.c.b16 %v885, %v884
    %v1098 = vpack.c.b16 %v887, %v886
    %v1099 = vpack.c.b16 %v889, %v888
    %v1100 = vpack.c.b16 %v891, %v890
    %v1101 = vpack.c.b16 %v893, %v892
    %v1102 = vpack.c.b16 %v895, %v894
    %v1103 = vpack.c.b16 %v897, %v896
    %v1104 = vpack.c.b16 %v899, %v898
    %v1105 = vpack.c.b16 %v901, %v900
    %v1106 = vpack.c.b16 %v903, %v902
    %v1107 = vpack.c.b16 %v905, %v904
    %v1108 = vpack.c.b16 %v907, %v906
    %v1109 = vpack.c.b16 %v909, %v908
    %v1110 = vpack.c.b16 %v911, %v910
    %v1111 = vpack.c.b16 %v913, %v912
    %v1112 = vpack.c.b16 %v915, %v914
    %v1113 = vpack.c.b16 %v917, %v916
    %v1114 = vpack.c.b16 %v919, %v918
    %v1115 = vpack.c.b16 %v921, %v920
    %v1116 = vpack.c.b16 %v923, %v922
    %v1117 = vpack.c.b16 %v925, %v924
    %v1118 = vpack.c.b16 %v927, %v926
    %v1119 = vpack.c.b16 %v929, %v928
    %v1120 = vpack.c.b16 %v931, %v930
    %v1121 = vpack.c.b16 %v933, %v932
    %v1122 = vpack.c.b16 %v935, %v934
    %v1123 = vpack.c.b16 %v937, %v936
    %v1124 = vpack.c.b16 %v939, %v938
    %v1125 = vpack.c.b16 %v941, %v940
    %v1126 = vpack.c.b16 %v943, %v942
    %v1127 = vpack.c.b16 %v945, %v944
    %v1128 = vpack.c.b16 %v947, %v946
    %v1129 = vpack.c.b16 %v949, %v948
    %v1130 = vpack.c.b16 %v951, %v950
    %v1131 = vpack.c.b16 %v953, %v952
    %v1132 = vpack.c.b16 %v955, %v954
    %v1133 = vpack.c.b16 %v957, %v956
    %v1134 = vpack.c.b16 %v959, %v958
    %v1135 = vpack.c.b16 %v961, %v960
    %v1136 = vpack.c.b16 %v963, %v962
    %v1137 = vpack.c.b16 %v965, %v964
    %v1138 = vpack.c.b16 %v967, %v966
    %v1139 = vpack.c.b16 %v969, %v968
    %v1140 = vpack.c.b16 %v971, %v970
    %v1141 = vpack.c.b16 %v973, %v972
    %v1142 = vpack.c.b16 %v975, %v974
    %v1143 = vpack.c.b16 %v977, %v976
    %v1144 = vpack.c.b16 %v979, %v978
    %v1145 = vpack.c.b16 %v981, %v980
    %v1146 = vpack.c.b16 %v983, %v982
    %v1147 = vpack.c.b16 %v985, %v984
    %v1148 = vpack.c.b16 %v987, %v986
    %v1149 = vpack.c.b16 %v989, %v988
    %v1150 = vpack.c.b16 %v991, %v990
    %v1151 = vpack.c.b16 %v993, %v992
    %v1152 = vpack.c.b16 %v995, %v994
    %v1153 = vpack.c.b16 %v997, %v996
    %v1154 = vpack.c.b16 %v999, %v998
    %v1155 = vpack.c.b16 %v1001, %v1000
    %v1156 = vpack.c.b16 %v1003, %v1002
    %v1157 = vpack.c.b16 %v1005, %v1004
    %v1158 = vpack.c.b16 %v1007, %v1006
    %v1159 = vpack.c.b16 %v1009, %v1008
    %v1160 = vpack.c.b16 %v1011, %v1010
    %v1161 = vpack.c.b16 %v1013, %v1012
    %v1162 = vpack.c.b16 %v1015, %v1014
    %v1163 = vpack.c.b16 %v1017, %v1016
    %v1164 = vpack.c.b16 %v1019, %v1018
    %v1165 = vpack.c.b16 %v1021, %v1020
    %1310 = vmatprep.subr.bf16.mxu0 0
    %1311 = vmatpush1.bf16.msra.mxu0 %v1022
    %1312 = vmatprep.subr.bf16.mxu0 0
    %1313 = vmatpush1.bf16.msra.mxu0 %v1023
    %1314 = vmatprep.subr.bf16.mxu0 0
    %1315 = vmatpush1.bf16.msra.mxu0 %v1024
    %1316 = vmatprep.subr.bf16.mxu0 0
    %1317 = vmatpush1.bf16.msra.mxu0 %v1025
    %1318 = vmatprep.subr.bf16.mxu0 0
    %1319 = vmatpush1.bf16.msra.mxu0 %v1026
    %1320 = vmatprep.subr.bf16.mxu0 0
    %1321 = vmatpush1.bf16.msra.mxu0 %v1027
    %1322 = vmatprep.subr.bf16.mxu0 0
    %1323 = vmatpush1.bf16.msra.mxu0 %v1028
    %1324 = vmatprep.subr.bf16.mxu0 0
    %1325 = vmatpush1.bf16.msra.mxu0 %v1029
    %1326 = vmatprep.subr.bf16.mxu0 0
    %1327 = vmatpush1.bf16.msra.mxu0 %v1030
    %1328 = vmatprep.subr.bf16.mxu0 0
    %1329 = vmatpush1.bf16.msra.mxu0 %v1031
    %1330 = vmatprep.subr.bf16.mxu0 0
    %1331 = vmatpush1.bf16.msra.mxu0 %v1032
    %1332 = vmatprep.subr.bf16.mxu0 0
    %1333 = vmatpush1.bf16.msra.mxu0 %v1033
    %1334 = vmatprep.subr.bf16.mxu0 0
    %1335 = vmatpush1.bf16.msra.mxu0 %v1034
    %1336 = vmatprep.subr.bf16.mxu0 0
    %1337 = vmatpush1.bf16.msra.mxu0 %v1035
    %1338 = vmatprep.subr.bf16.mxu0 0
    %1339 = vmatpush1.bf16.msra.mxu0 %v1036
    %1340 = vmatprep.subr.bf16.mxu0 0
    %1341 = vmatpush1.bf16.msra.mxu0 %v1037
    %1342 = vmatprep.mubr.bf16.mxu0 %v411
    %1343 = vmatmul.mubr.bf16.gmra.mrb[0].mxu0 %v410
    %v1344 = vpop.f32.mrb[0].mxu0
    %v1345 = vadd.f32 0.0, %v1344
    %v1346 = vpop.f32.mrb[0].mxu0
    %v1347 = vpop.f32.mrb[0].mxu0
    %v1348 = vpop.f32.mrb[0].mxu0
    %1349 = vdwg.mxu0
    %1350 = vmatprep.subr.bf16.mxu0 0
    %1351 = vmatpush1.bf16.msra.mxu0 %v1038
    %1352 = vmatprep.subr.bf16.mxu0 0
    %1353 = vmatpush1.bf16.msra.mxu0 %v1039
    %1354 = vmatprep.subr.bf16.mxu0 0
    %1355 = vmatpush1.bf16.msra.mxu0 %v1040
    %1356 = vmatprep.subr.bf16.mxu0 0
    %1357 = vmatpush1.bf16.msra.mxu0 %v1041
    %1358 = vmatprep.subr.bf16.mxu0 0
    %1359 = vmatpush1.bf16.msra.mxu0 %v1042
    %1360 = vmatprep.subr.bf16.mxu0 0
    %1361 = vmatpush1.bf16.msra.mxu0 %v1043
    %1362 = vmatprep.subr.bf16.mxu0 0
    %1363 = vmatpush1.bf16.msra.mxu0 %v1044
    %1364 = vmatprep.subr.bf16.mxu0 0
    %1365 = vmatpush1.bf16.msra.mxu0 %v1045
    %1366 = vmatprep.subr.bf16.mxu0 0
    %1367 = vmatpush1.bf16.msra.mxu0 %v1046
    %1368 = vmatprep.subr.bf16.mxu0 0
    %1369 = vmatpush1.bf16.msra.mxu0 %v1047
    %1370 = vmatprep.subr.bf16.mxu0 0
    %1371 = vmatpush1.bf16.msra.mxu0 %v1048
    %1372 = vmatprep.subr.bf16.mxu0 0
    %1373 = vmatpush1.bf16.msra.mxu0 %v1049
    %1374 = vmatprep.subr.bf16.mxu0 0
    %1375 = vmatpush1.bf16.msra.mxu0 %v1050
    %1376 = vmatprep.subr.bf16.mxu0 0
    %1377 = vmatpush1.bf16.msra.mxu0 %v1051
    %1378 = vmatprep.subr.bf16.mxu0 0
    %1379 = vmatpush1.bf16.msra.mxu0 %v1052
    %1380 = vmatprep.subr.bf16.mxu0 0
    %1381 = vmatpush1.bf16.msra.mxu0 %v1053
    %1382 = vmatprep.mubr.bf16.mxu0 %v413
    %1383 = vmatmul.mubr.bf16.gmra.mrb[0].mxu0 %v412
    %v1384 = vpop.f32.mrb[0].mxu0
    %v1385 = vadd.f32 %v1345, %v1384
    %v1386 = vpop.f32.mrb[0].mxu0
    %v1387 = vpop.f32.mrb[0].mxu0
    %v1388 = vpop.f32.mrb[0].mxu0
    %1389 = vdwg.mxu0
    %1390 = vmatprep.subr.bf16.mxu0 0
    %1391 = vmatpush1.bf16.msra.mxu0 %v1054
    %1392 = vmatprep.subr.bf16.mxu0 0
    %1393 = vmatpush1.bf16.msra.mxu0 %v1055
    %1394 = vmatprep.subr.bf16.mxu0 0
    %1395 = vmatpush1.bf16.msra.mxu0 %v1056
    %1396 = vmatprep.subr.bf16.mxu0 0
    %1397 = vmatpush1.bf16.msra.mxu0 %v1057
    %1398 = vmatprep.subr.bf16.mxu0 0
    %1399 = vmatpush1.bf16.msra.mxu0 %v1058
    %1400 = vmatprep.subr.bf16.mxu0 0
    %1401 = vmatpush1.bf16.msra.mxu0 %v1059
    %1402 = vmatprep.subr.bf16.mxu0 0
    %1403 = vmatpush1.bf16.msra.mxu0 %v1060
    %1404 = vmatprep.subr.bf16.mxu0 0
    %1405 = vmatpush1.bf16.msra.mxu0 %v1061
    %1406 = vmatprep.subr.bf16.mxu0 0
    %1407 = vmatpush1.bf16.msra.mxu0 %v1062
    %1408 = vmatprep.subr.bf16.mxu0 0
    %1409 = vmatpush1.bf16.msra.mxu0 %v1063
    %1410 = vmatprep.subr.bf16.mxu0 0
    %1411 = vmatpush1.bf16.msra.mxu0 %v1064
    %1412 = vmatprep.subr.bf16.mxu0 0
    %1413 = vmatpush1.bf16.msra.mxu0 %v1065
    %1414 = vmatprep.subr.bf16.mxu0 0
    %1415 = vmatpush1.bf16.msra.mxu0 %v1066
    %1416 = vmatprep.subr.bf16.mxu0 0
    %1417 = vmatpush1.bf16.msra.mxu0 %v1067
    %1418 = vmatprep.subr.bf16.mxu0 0
    %1419 = vmatpush1.bf16.msra.mxu0 %v1068
    %1420 = vmatprep.subr.bf16.mxu0 0
    %1421 = vmatpush1.bf16.msra.mxu0 %v1069
    %1422 = vmatprep.mubr.bf16.mxu0 %v415
    %1423 = vmatmul.mubr.bf16.gmra.mrb[0].mxu0 %v414
    %v1424 = vpop.f32.mrb[0].mxu0
    %v1425 = vadd.f32 %v1385, %v1424
    %v1426 = vpop.f32.mrb[0].mxu0
    %v1427 = vpop.f32.mrb[0].mxu0
    %v1428 = vpop.f32.mrb[0].mxu0
    %1429 = vdwg.mxu0
    %1430 = vmatprep.subr.bf16.mxu0 0
    %1431 = vmatpush1.bf16.msra.mxu0 %v1070
    %1432 = vmatprep.subr.bf16.mxu0 0
    %1433 = vmatpush1.bf16.msra.mxu0 %v1071
    %1434 = vmatprep.subr.bf16.mxu0 0
    %1435 = vmatpush1.bf16.msra.mxu0 %v1072
    %1436 = vmatprep.subr.bf16.mxu0 0
    %1437 = vmatpush1.bf16.msra.mxu0 %v1073
    %1438 = vmatprep.subr.bf16.mxu0 0
    %1439 = vmatpush1.bf16.msra.mxu0 %v1074
    %1440 = vmatprep.subr.bf16.mxu0 0
    %1441 = vmatpush1.bf16.msra.mxu0 %v1075
    %1442 = vmatprep.subr.bf16.mxu0 0
    %1443 = vmatpush1.bf16.msra.mxu0 %v1076
    %1444 = vmatprep.subr.bf16.mxu0 0
    %1445 = vmatpush1.bf16.msra.mxu0 %v1077
    %1446 = vmatprep.subr.bf16.mxu0 0
    %1447 = vmatpush1.bf16.msra.mxu0 %v1078
    %1448 = vmatprep.subr.bf16.mxu0 0
    %1449 = vmatpush1.bf16.msra.mxu0 %v1079
    %1450 = vmatprep.subr.bf16.mxu0 0
    %1451 = vmatpush1.bf16.msra.mxu0 %v1080
    %1452 = vmatprep.subr.bf16.mxu0 0
    %1453 = vmatpush1.bf16.msra.mxu0 %v1081
    %1454 = vmatprep.subr.bf16.mxu0 0
    %1455 = vmatpush1.bf16.msra.mxu0 %v1082
    %1456 = vmatprep.subr.bf16.mxu0 0
    %1457 = vmatpush1.bf16.msra.mxu0 %v1083
    %1458 = vmatprep.subr.bf16.mxu0 0
    %1459 = vmatpush1.bf16.msra.mxu0 %v1084
    %1460 = vmatprep.subr.bf16.mxu0 0
    %1461 = vmatpush1.bf16.msra.mxu0 %v1085
    %1462 = vmatprep.mubr.bf16.mxu0 %v417
    %1463 = vmatmul.mubr.bf16.gmra.mrb[0].mxu0 %v416
    %v1464 = vpop.f32.mrb[0].mxu0
    %v1465 = vadd.f32 %v1425, %v1464
    %v1466 = vpop.f32.mrb[0].mxu0
    %v1467 = vpop.f32.mrb[0].mxu0
    %v1468 = vpop.f32.mrb[0].mxu0
    %1469 = vdwg.mxu0
    %1470 = vmatprep.subr.bf16.mxu0 0
    %1471 = vmatpush1.bf16.msra.mxu0 %v1086
    %1472 = vmatprep.subr.bf16.mxu0 0
    %1473 = vmatpush1.bf16.msra.mxu0 %v1087
    %1474 = vmatprep.subr.bf16.mxu0 0
    %1475 = vmatpush1.bf16.msra.mxu0 %v1088
    %1476 = vmatprep.subr.bf16.mxu0 0
    %1477 = vmatpush1.bf16.msra.mxu0 %v1089
    %1478 = vmatprep.subr.bf16.mxu0 0
    %1479 = vmatpush1.bf16.msra.mxu0 %v1090
    %1480 = vmatprep.subr.bf16.mxu0 0
    %1481 = vmatpush1.bf16.msra.mxu0 %v1091
    %1482 = vmatprep.subr.bf16.mxu0 0
    %1483 = vmatpush1.bf16.msra.mxu0 %v1092
    %1484 = vmatprep.subr.bf16.mxu0 0
    %1485 = vmatpush1.bf16.msra.mxu0 %v1093
    %1486 = vmatprep.subr.bf16.mxu0 0
    %1487 = vmatpush1.bf16.msra.mxu0 %v1094
    %1488 = vmatprep.subr.bf16.mxu0 0
    %1489 = vmatpush1.bf16.msra.mxu0 %v1095
    %1490 = vmatprep.subr.bf16.mxu0 0
    %1491 = vmatpush1.bf16.msra.mxu0 %v1096
    %1492 = vmatprep.subr.bf16.mxu0 0
    %1493 = vmatpush1.bf16.msra.mxu0 %v1097
    %1494 = vmatprep.subr.bf16.mxu0 0
    %1495 = vmatpush1.bf16.msra.mxu0 %v1098
    %1496 = vmatprep.subr.bf16.mxu0 0
    %1497 = vmatpush1.bf16.msra.mxu0 %v1099
    %1498 = vmatprep.subr.bf16.mxu0 0
    %1499 = vmatpush1.bf16.msra.mxu0 %v1100
    %1500 = vmatprep.subr.bf16.mxu0 0
    %1501 = vmatpush1.bf16.msra.mxu0 %v1101
    %1502 = vmatprep.mubr.bf16.mxu0 %v419
    %1503 = vmatmul.mubr.bf16.gmra.mrb[0].mxu0 %v418
    %v1504 = vpop.f32.mrb[0].mxu0
    %v1505 = vadd.f32 %v1465, %v1504
    %v1506 = vpop.f32.mrb[0].mxu0
    %v1507 = vpop.f32.mrb[0].mxu0
    %v1508 = vpop.f32.mrb[0].mxu0
    %1509 = vdwg.mxu0
    %1510 = vmatprep.subr.bf16.mxu0 0
    %1511 = vmatpush1.bf16.msra.mxu0 %v1102
    %1512 = vmatprep.subr.bf16.mxu0 0
    %1513 = vmatpush1.bf16.msra.mxu0 %v1103
    %1514 = vmatprep.subr.bf16.mxu0 0
    %1515 = vmatpush1.bf16.msra.mxu0 %v1104
    %1516 = vmatprep.subr.bf16.mxu0 0
    %1517 = vmatpush1.bf16.msra.mxu0 %v1105
    %1518 = vmatprep.subr.bf16.mxu0 0
    %1519 = vmatpush1.bf16.msra.mxu0 %v1106
    %1520 = vmatprep.subr.bf16.mxu0 0
    %1521 = vmatpush1.bf16.msra.mxu0 %v1107
    %1522 = vmatprep.subr.bf16.mxu0 0
    %1523 = vmatpush1.bf16.msra.mxu0 %v1108
    %1524 = vmatprep.subr.bf16.mxu0 0
    %1525 = vmatpush1.bf16.msra.mxu0 %v1109
    %1526 = vmatprep.subr.bf16.mxu0 0
    %1527 = vmatpush1.bf16.msra.mxu0 %v1110
    %1528 = vmatprep.subr.bf16.mxu0 0
    %1529 = vmatpush1.bf16.msra.mxu0 %v1111
    %1530 = vmatprep.subr.bf16.mxu0 0
    %1531 = vmatpush1.bf16.msra.mxu0 %v1112
    %1532 = vmatprep.subr.bf16.mxu0 0
    %1533 = vmatpush1.bf16.msra.mxu0 %v1113
    %1534 = vmatprep.subr.bf16.mxu0 0
    %1535 = vmatpush1.bf16.msra.mxu0 %v1114
    %1536 = vmatprep.subr.bf16.mxu0 0
    %1537 = vmatpush1.bf16.msra.mxu0 %v1115
    %1538 = vmatprep.subr.bf16.mxu0 0
    %1539 = vmatpush1.bf16.msra.mxu0 %v1116
    %1540 = vmatprep.subr.bf16.mxu0 0
    %1541 = vmatpush1.bf16.msra.mxu0 %v1117
    %1542 = vmatprep.mubr.bf16.mxu0 %v421
    %1543 = vmatmul.mubr.bf16.gmra.mrb[0].mxu0 %v420
    %v1544 = vpop.f32.mrb[0].mxu0
    %v1545 = vadd.f32 %v1505, %v1544
    %v1546 = vpop.f32.mrb[0].mxu0
    %v1547 = vpop.f32.mrb[0].mxu0
    %v1548 = vpop.f32.mrb[0].mxu0
    %1549 = vdwg.mxu0
    %1550 = vmatprep.subr.bf16.mxu0 0
    %1551 = vmatpush1.bf16.msra.mxu0 %v1118
    %1552 = vmatprep.subr.bf16.mxu0 0
    %1553 = vmatpush1.bf16.msra.mxu0 %v1119
    %1554 = vmatprep.subr.bf16.mxu0 0
    %1555 = vmatpush1.bf16.msra.mxu0 %v1120
    %1556 = vmatprep.subr.bf16.mxu0 0
    %1557 = vmatpush1.bf16.msra.mxu0 %v1121
    %1558 = vmatprep.subr.bf16.mxu0 0
    %1559 = vmatpush1.bf16.msra.mxu0 %v1122
    %1560 = vmatprep.subr.bf16.mxu0 0
    %1561 = vmatpush1.bf16.msra.mxu0 %v1123
    %1562 = vmatprep.subr.bf16.mxu0 0
    %1563 = vmatpush1.bf16.msra.mxu0 %v1124
    %1564 = vmatprep.subr.bf16.mxu0 0
    %1565 = vmatpush1.bf16.msra.mxu0 %v1125
    %1566 = vmatprep.subr.bf16.mxu0 0
    %1567 = vmatpush1.bf16.msra.mxu0 %v1126
    %1568 = vmatprep.subr.bf16.mxu0 0
    %1569 = vmatpush1.bf16.msra.mxu0 %v1127
    %1570 = vmatprep.subr.bf16.mxu0 0
    %1571 = vmatpush1.bf16.msra.mxu0 %v1128
    %1572 = vmatprep.subr.bf16.mxu0 0
    %1573 = vmatpush1.bf16.msra.mxu0 %v1129
    %1574 = vmatprep.subr.bf16.mxu0 0
    %1575 = vmatpush1.bf16.msra.mxu0 %v1130
    %1576 = vmatprep.subr.bf16.mxu0 0
    %1577 = vmatpush1.bf16.msra.mxu0 %v1131
    %1578 = vmatprep.subr.bf16.mxu0 0
    %1579 = vmatpush1.bf16.msra.mxu0 %v1132
    %1580 = vmatprep.subr.bf16.mxu0 0
    %1581 = vmatpush1.bf16.msra.mxu0 %v1133
    %1582 = vmatprep.mubr.bf16.mxu0 %v423
    %1583 = vmatmul.mubr.bf16.gmra.mrb[0].mxu0 %v422
    %v1584 = vpop.f32.mrb[0].mxu0
    %v1585 = vadd.f32 %v1545, %v1584
    %v1586 = vpop.f32.mrb[0].mxu0
    %v1587 = vpop.f32.mrb[0].mxu0
    %v1588 = vpop.f32.mrb[0].mxu0
    %1589 = vdwg.mxu0
    %1590 = vmatprep.subr.bf16.mxu0 0
    %1591 = vmatpush1.bf16.msra.mxu0 %v1134
    %1592 = vmatprep.subr.bf16.mxu0 0
    %1593 = vmatpush1.bf16.msra.mxu0 %v1135
    %1594 = vmatprep.subr.bf16.mxu0 0
    %1595 = vmatpush1.bf16.msra.mxu0 %v1136
    %1596 = vmatprep.subr.bf16.mxu0 0
    %1597 = vmatpush1.bf16.msra.mxu0 %v1137
    %1598 = vmatprep.subr.bf16.mxu0 0
    %1599 = vmatpush1.bf16.msra.mxu0 %v1138
    %1600 = vmatprep.subr.bf16.mxu0 0
    %1601 = vmatpush1.bf16.msra.mxu0 %v1139
    %1602 = vmatprep.subr.bf16.mxu0 0
    %1603 = vmatpush1.bf16.msra.mxu0 %v1140
    %1604 = vmatprep.subr.bf16.mxu0 0
    %1605 = vmatpush1.bf16.msra.mxu0 %v1141
    %1606 = vmatprep.subr.bf16.mxu0 0
    %1607 = vmatpush1.bf16.msra.mxu0 %v1142
    %1608 = vmatprep.subr.bf16.mxu0 0
    %1609 = vmatpush1.bf16.msra.mxu0 %v1143
    %1610 = vmatprep.subr.bf16.mxu0 0
    %1611 = vmatpush1.bf16.msra.mxu0 %v1144
    %1612 = vmatprep.subr.bf16.mxu0 0
    %1613 = vmatpush1.bf16.msra.mxu0 %v1145
    %1614 = vmatprep.subr.bf16.mxu0 0
    %1615 = vmatpush1.bf16.msra.mxu0 %v1146
    %1616 = vmatprep.subr.bf16.mxu0 0
    %1617 = vmatpush1.bf16.msra.mxu0 %v1147
    %1618 = vmatprep.subr.bf16.mxu0 0
    %1619 = vmatpush1.bf16.msra.mxu0 %v1148
    %1620 = vmatprep.subr.bf16.mxu0 0
    %1621 = vmatpush1.bf16.msra.mxu0 %v1149
    %1622 = vmatprep.mubr.bf16.mxu0 %v425
    %1623 = vmatmul.mubr.bf16.gmra.mrb[0].mxu0 %v424
    %v1624 = vpop.f32.mrb[0].mxu0
    %v1625 = vadd.f32 %v1585, %v1624
    %v1626 = vpop.f32.mrb[0].mxu0
    %v1627 = vpop.f32.mrb[0].mxu0
    %v1628 = vpop.f32.mrb[0].mxu0
    %1629 = vdwg.mxu0
    %1630 = vmatprep.subr.bf16.mxu0 0
    %1631 = vmatpush1.bf16.msra.mxu0 %v1150
    %1632 = vmatprep.subr.bf16.mxu0 0
    %1633 = vmatpush1.bf16.msra.mxu0 %v1151
    %1634 = vmatprep.subr.bf16.mxu0 0
    %1635 = vmatpush1.bf16.msra.mxu0 %v1152
    %1636 = vmatprep.subr.bf16.mxu0 0
    %1637 = vmatpush1.bf16.msra.mxu0 %v1153
    %1638 = vmatprep.subr.bf16.mxu0 0
    %1639 = vmatpush1.bf16.msra.mxu0 %v1154
    %1640 = vmatprep.subr.bf16.mxu0 0
    %1641 = vmatpush1.bf16.msra.mxu0 %v1155
    %1642 = vmatprep.subr.bf16.mxu0 0
    %1643 = vmatpush1.bf16.msra.mxu0 %v1156
    %1644 = vmatprep.subr.bf16.mxu0 0
    %1645 = vmatpush1.bf16.msra.mxu0 %v1157
    %1646 = vmatprep.subr.bf16.mxu0 0
    %1647 = vmatpush1.bf16.msra.mxu0 %v1158
    %1648 = vmatprep.subr.bf16.mxu0 0
    %1649 = vmatpush1.bf16.msra.mxu0 %v1159
    %1650 = vmatprep.subr.bf16.mxu0 0
    %1651 = vmatpush1.bf16.msra.mxu0 %v1160
    %1652 = vmatprep.subr.bf16.mxu0 0
    %1653 = vmatpush1.bf16.msra.mxu0 %v1161
    %1654 = vmatprep.subr.bf16.mxu0 0
    %1655 = vmatpush1.bf16.msra.mxu0 %v1162
    %1656 = vmatprep.subr.bf16.mxu0 0
    %1657 = vmatpush1.bf16.msra.mxu0 %v1163
    %1658 = vmatprep.subr.bf16.mxu0 0
    %1659 = vmatpush1.bf16.msra.mxu0 %v1164
    %1660 = vmatprep.subr.bf16.mxu0 0
    %1661 = vmatpush1.bf16.msra.mxu0 %v1165
    %1662 = vmatprep.mubr.bf16.mxu0 %v427
    %1663 = vmatmul.mubr.bf16.gmra.mrb[0].mxu0 %v426
    %v1664 = vpop.f32.mrb[0].mxu0
    %v1665 = vadd.f32 %v1625, %v1664
    %v1666 = vpop.f32.mrb[0].mxu0
    %v1667 = vpop.f32.mrb[0].mxu0
    %v1668 = vpop.f32.mrb[0].mxu0
    %1669 = vdwg.mxu0
    %v1670 = vld [vmem:[#allocation3] sm:$0xf]
    %v1671 = vld [vmem:[#allocation3 + $0x4] sm:$0xf]
    %v1672 = vld [vmem:[#allocation3 + $0x8] sm:$0xf]
    %v1673 = vld [vmem:[#allocation3 + $0xc] sm:$0xf]
    %v1674 = vld [vmem:[#allocation3 + $0x10] sm:$0xf]
    %v1675 = vld [vmem:[#allocation3 + $0x14] sm:$0xf]
    %v1676 = vld [vmem:[#allocation3 + $0x18] sm:$0xf]
    %v1677 = vld [vmem:[#allocation3 + $0x1c] sm:$0xf]
    %v1678 = vld [vmem:[#allocation3 + $0x20] sm:$0xf]
    %v1679 = vld [vmem:[#allocation3 + $0x24] sm:$0xf]
    %v1680 = vld [vmem:[#allocation3 + $0x28] sm:$0xf]
    %v1681 = vld [vmem:[#allocation3 + $0x2c] sm:$0xf]
    %v1682 = vld [vmem:[#allocation3 + $0x30] sm:$0xf]
    %v1683 = vld [vmem:[#allocation3 + $0x34] sm:$0xf]
    %v1684 = vld [vmem:[#allocation3 + $0x38] sm:$0xf]
    %v1685 = vld [vmem:[#allocation3 + $0x3c] sm:$0xf]
    %v1686 = vld [vmem:[#allocation3 + $0x40] sm:$0xf]
    %v1687 = vld [vmem:[#allocation3 + $0x44] sm:$0xf]
    %v1688 = vld [vmem:[#allocation3 + $0x48] sm:$0xf]
    %v1689 = vld [vmem:[#allocation3 + $0x4c] sm:$0xf]
    %v1690 = vld [vmem:[#allocation3 + $0x50] sm:$0xf]
    %v1691 = vld [vmem:[#allocation3 + $0x54] sm:$0xf]
    %v1692 = vld [vmem:[#allocation3 + $0x58] sm:$0xf]
    %v1693 = vld [vmem:[#allocation3 + $0x5c] sm:$0xf]
    %v1694 = vld [vmem:[#allocation3 + $0x60] sm:$0xf]
    %v1695 = vld [vmem:[#allocation3 + $0x64] sm:$0xf]
    %v1696 = vld [vmem:[#allocation3 + $0x68] sm:$0xf]
    %v1697 = vld [vmem:[#allocation3 + $0x6c] sm:$0xf]
    %v1698 = vld [vmem:[#allocation3 + $0x70] sm:$0xf]
    %v1699 = vld [vmem:[#allocation3 + $0x74] sm:$0xf]
    %v1700 = vld [vmem:[#allocation3 + $0x78] sm:$0xf]
    %v1701 = vld [vmem:[#allocation3 + $0x7c] sm:$0xf]
    %v1702 = vld [vmem:[#allocation3 + $0x80] sm:$0xf]
    %v1703 = vld [vmem:[#allocation3 + $0x84] sm:$0xf]
    %v1704 = vld [vmem:[#allocation3 + $0x88] sm:$0xf]
    %v1705 = vld [vmem:[#allocation3 + $0x8c] sm:$0xf]
    %v1706 = vld [vmem:[#allocation3 + $0x90] sm:$0xf]
    %v1707 = vld [vmem:[#allocation3 + $0x94] sm:$0xf]
    %v1708 = vld [vmem:[#allocation3 + $0x98] sm:$0xf]
    %v1709 = vld [vmem:[#allocation3 + $0x9c] sm:$0xf]
    %v1710 = vld [vmem:[#allocation3 + $0xa0] sm:$0xf]
    %v1711 = vld [vmem:[#allocation3 + $0xa4] sm:$0xf]
    %v1712 = vld [vmem:[#allocation3 + $0xa8] sm:$0xf]
    %v1713 = vld [vmem:[#allocation3 + $0xac] sm:$0xf]
    %v1714 = vld [vmem:[#allocation3 + $0xb0] sm:$0xf]
    %v1715 = vld [vmem:[#allocation3 + $0xb4] sm:$0xf]
    %v1716 = vld [vmem:[#allocation3 + $0xb8] sm:$0xf]
    %v1717 = vld [vmem:[#allocation3 + $0xbc] sm:$0xf]
    %v1718 = vld [vmem:[#allocation3 + $0xc0] sm:$0xf]
    %v1719 = vld [vmem:[#allocation3 + $0xc4] sm:$0xf]
    %v1720 = vld [vmem:[#allocation3 + $0xc8] sm:$0xf]
    %v1721 = vld [vmem:[#allocation3 + $0xcc] sm:$0xf]
    %v1722 = vld [vmem:[#allocation3 + $0xd0] sm:$0xf]
    %v1723 = vld [vmem:[#allocation3 + $0xd4] sm:$0xf]
    %v1724 = vld [vmem:[#allocation3 + $0xd8] sm:$0xf]
    %v1725 = vld [vmem:[#allocation3 + $0xdc] sm:$0xf]
    %v1726 = vld [vmem:[#allocation3 + $0xe0] sm:$0xf]
    %v1727 = vld [vmem:[#allocation3 + $0xe4] sm:$0xf]
    %v1728 = vld [vmem:[#allocation3 + $0xe8] sm:$0xf]
    %v1729 = vld [vmem:[#allocation3 + $0xec] sm:$0xf]
    %v1730 = vld [vmem:[#allocation3 + $0xf0] sm:$0xf]
    %v1731 = vld [vmem:[#allocation3 + $0xf4] sm:$0xf]
    %v1732 = vld [vmem:[#allocation3 + $0xf8] sm:$0xf]
    %v1733 = vld [vmem:[#allocation3 + $0xfc] sm:$0xf]
    %v1734 = vld [vmem:[#allocation3 + $0x100] sm:$0xf]
    %v1735 = vld [vmem:[#allocation3 + $0x104] sm:$0xf]
    %v1736 = vld [vmem:[#allocation3 + $0x108] sm:$0xf]
    %v1737 = vld [vmem:[#allocation3 + $0x10c] sm:$0xf]
    %v1738 = vld [vmem:[#allocation3 + $0x110] sm:$0xf]
    %v1739 = vld [vmem:[#allocation3 + $0x114] sm:$0xf]
    %v1740 = vld [vmem:[#allocation3 + $0x118] sm:$0xf]
    %v1741 = vld [vmem:[#allocation3 + $0x11c] sm:$0xf]
    %v1742 = vld [vmem:[#allocation3 + $0x120] sm:$0xf]
    %v1743 = vld [vmem:[#allocation3 + $0x124] sm:$0xf]
    %v1744 = vld [vmem:[#allocation3 + $0x128] sm:$0xf]
    %v1745 = vld [vmem:[#allocation3 + $0x12c] sm:$0xf]
    %v1746 = vld [vmem:[#allocation3 + $0x130] sm:$0xf]
    %v1747 = vld [vmem:[#allocation3 + $0x134] sm:$0xf]
    %v1748 = vld [vmem:[#allocation3 + $0x138] sm:$0xf]
    %v1749 = vld [vmem:[#allocation3 + $0x13c] sm:$0xf]
    %v1750 = vld [vmem:[#allocation3 + $0x140] sm:$0xf]
    %v1751 = vld [vmem:[#allocation3 + $0x144] sm:$0xf]
    %v1752 = vld [vmem:[#allocation3 + $0x148] sm:$0xf]
    %v1753 = vld [vmem:[#allocation3 + $0x14c] sm:$0xf]
    %v1754 = vld [vmem:[#allocation3 + $0x150] sm:$0xf]
    %v1755 = vld [vmem:[#allocation3 + $0x154] sm:$0xf]
    %v1756 = vld [vmem:[#allocation3 + $0x158] sm:$0xf]
    %v1757 = vld [vmem:[#allocation3 + $0x15c] sm:$0xf]
    %v1758 = vld [vmem:[#allocation3 + $0x160] sm:$0xf]
    %v1759 = vld [vmem:[#allocation3 + $0x164] sm:$0xf]
    %v1760 = vld [vmem:[#allocation3 + $0x168] sm:$0xf]
    %v1761 = vld [vmem:[#allocation3 + $0x16c] sm:$0xf]
    %v1762 = vld [vmem:[#allocation3 + $0x170] sm:$0xf]
    %v1763 = vld [vmem:[#allocation3 + $0x174] sm:$0xf]
    %v1764 = vld [vmem:[#allocation3 + $0x178] sm:$0xf]
    %v1765 = vld [vmem:[#allocation3 + $0x17c] sm:$0xf]
    %v1766 = vld [vmem:[#allocation3 + $0x180] sm:$0xf]
    %v1767 = vld [vmem:[#allocation3 + $0x184] sm:$0xf]
    %v1768 = vld [vmem:[#allocation3 + $0x188] sm:$0xf]
    %v1769 = vld [vmem:[#allocation3 + $0x18c] sm:$0xf]
    %v1770 = vld [vmem:[#allocation3 + $0x190] sm:$0xf]
    %v1771 = vld [vmem:[#allocation3 + $0x194] sm:$0xf]
    %v1772 = vld [vmem:[#allocation3 + $0x198] sm:$0xf]
    %v1773 = vld [vmem:[#allocation3 + $0x19c] sm:$0xf]
    %v1774 = vld [vmem:[#allocation3 + $0x1a0] sm:$0xf]
    %v1775 = vld [vmem:[#allocation3 + $0x1a4] sm:$0xf]
    %v1776 = vld [vmem:[#allocation3 + $0x1a8] sm:$0xf]
    %v1777 = vld [vmem:[#allocation3 + $0x1ac] sm:$0xf]
    %v1778 = vld [vmem:[#allocation3 + $0x1b0] sm:$0xf]
    %v1779 = vld [vmem:[#allocation3 + $0x1b4] sm:$0xf]
    %v1780 = vld [vmem:[#allocation3 + $0x1b8] sm:$0xf]
    %v1781 = vld [vmem:[#allocation3 + $0x1bc] sm:$0xf]
    %v1782 = vld [vmem:[#allocation3 + $0x1c0] sm:$0xf]
    %v1783 = vld [vmem:[#allocation3 + $0x1c4] sm:$0xf]
    %v1784 = vld [vmem:[#allocation3 + $0x1c8] sm:$0xf]
    %v1785 = vld [vmem:[#allocation3 + $0x1cc] sm:$0xf]
    %v1786 = vld [vmem:[#allocation3 + $0x1d0] sm:$0xf]
    %v1787 = vld [vmem:[#allocation3 + $0x1d4] sm:$0xf]
    %v1788 = vld [vmem:[#allocation3 + $0x1d8] sm:$0xf]
    %v1789 = vld [vmem:[#allocation3 + $0x1dc] sm:$0xf]
    %v1790 = vld [vmem:[#allocation3 + $0x1e0] sm:$0xf]
    %v1791 = vld [vmem:[#allocation3 + $0x1e4] sm:$0xf]
    %v1792 = vld [vmem:[#allocation3 + $0x1e8] sm:$0xf]
    %v1793 = vld [vmem:[#allocation3 + $0x1ec] sm:$0xf]
    %v1794 = vld [vmem:[#allocation3 + $0x1f0] sm:$0xf]
    %v1795 = vld [vmem:[#allocation3 + $0x1f4] sm:$0xf]
    %v1796 = vld [vmem:[#allocation3 + $0x1f8] sm:$0xf]
    %v1797 = vld [vmem:[#allocation3 + $0x1fc] sm:$0xf]
    %v1798 = vld [vmem:[#allocation3 + $0x200] sm:$0xf]
    %v1799 = vld [vmem:[#allocation3 + $0x204] sm:$0xf]
    %v1800 = vld [vmem:[#allocation3 + $0x208] sm:$0xf]
    %v1801 = vld [vmem:[#allocation3 + $0x20c] sm:$0xf]
    %v1802 = vld [vmem:[#allocation3 + $0x210] sm:$0xf]
    %v1803 = vld [vmem:[#allocation3 + $0x214] sm:$0xf]
    %v1804 = vld [vmem:[#allocation3 + $0x218] sm:$0xf]
    %v1805 = vld [vmem:[#allocation3 + $0x21c] sm:$0xf]
    %v1806 = vld [vmem:[#allocation3 + $0x220] sm:$0xf]
    %v1807 = vld [vmem:[#allocation3 + $0x224] sm:$0xf]
    %v1808 = vld [vmem:[#allocation3 + $0x228] sm:$0xf]
    %v1809 = vld [vmem:[#allocation3 + $0x22c] sm:$0xf]
    %v1810 = vld [vmem:[#allocation3 + $0x230] sm:$0xf]
    %v1811 = vld [vmem:[#allocation3 + $0x234] sm:$0xf]
    %v1812 = vld [vmem:[#allocation3 + $0x238] sm:$0xf]
    %v1813 = vld [vmem:[#allocation3 + $0x23c] sm:$0xf]
    %v1814 = vld [vmem:[#allocation3 + $0x240] sm:$0xf]
    %v1815 = vld [vmem:[#allocation3 + $0x244] sm:$0xf]
    %v1816 = vld [vmem:[#allocation3 + $0x248] sm:$0xf]
    %v1817 = vld [vmem:[#allocation3 + $0x24c] sm:$0xf]
    %v1818 = vld [vmem:[#allocation3 + $0x250] sm:$0xf]
    %v1819 = vld [vmem:[#allocation3 + $0x254] sm:$0xf]
    %v1820 = vld [vmem:[#allocation3 + $0x258] sm:$0xf]
    %v1821 = vld [vmem:[#allocation3 + $0x25c] sm:$0xf]
    %v1822 = vld [vmem:[#allocation3 + $0x260] sm:$0xf]
    %v1823 = vld [vmem:[#allocation3 + $0x264] sm:$0xf]
    %v1824 = vld [vmem:[#allocation3 + $0x268] sm:$0xf]
    %v1825 = vld [vmem:[#allocation3 + $0x26c] sm:$0xf]
    %v1826 = vld [vmem:[#allocation3 + $0x270] sm:$0xf]
    %v1827 = vld [vmem:[#allocation3 + $0x274] sm:$0xf]
    %v1828 = vld [vmem:[#allocation3 + $0x278] sm:$0xf]
    %v1829 = vld [vmem:[#allocation3 + $0x27c] sm:$0xf]
    %v1830 = vld [vmem:[#allocation3 + $0x280] sm:$0xf]
    %v1831 = vld [vmem:[#allocation3 + $0x284] sm:$0xf]
    %v1832 = vld [vmem:[#allocation3 + $0x288] sm:$0xf]
    %v1833 = vld [vmem:[#allocation3 + $0x28c] sm:$0xf]
    %v1834 = vld [vmem:[#allocation3 + $0x290] sm:$0xf]
    %v1835 = vld [vmem:[#allocation3 + $0x294] sm:$0xf]
    %v1836 = vld [vmem:[#allocation3 + $0x298] sm:$0xf]
    %v1837 = vld [vmem:[#allocation3 + $0x29c] sm:$0xf]
    %v1838 = vld [vmem:[#allocation3 + $0x2a0] sm:$0xf]
    %v1839 = vld [vmem:[#allocation3 + $0x2a4] sm:$0xf]
    %v1840 = vld [vmem:[#allocation3 + $0x2a8] sm:$0xf]
    %v1841 = vld [vmem:[#allocation3 + $0x2ac] sm:$0xf]
    %v1842 = vld [vmem:[#allocation3 + $0x2b0] sm:$0xf]
    %v1843 = vld [vmem:[#allocation3 + $0x2b4] sm:$0xf]
    %v1844 = vld [vmem:[#allocation3 + $0x2b8] sm:$0xf]
    %v1845 = vld [vmem:[#allocation3 + $0x2bc] sm:$0xf]
    %v1846 = vld [vmem:[#allocation3 + $0x2c0] sm:$0xf]
    %v1847 = vld [vmem:[#allocation3 + $0x2c4] sm:$0xf]
    %v1848 = vld [vmem:[#allocation3 + $0x2c8] sm:$0xf]
    %v1849 = vld [vmem:[#allocation3 + $0x2cc] sm:$0xf]
    %v1850 = vld [vmem:[#allocation3 + $0x2d0] sm:$0xf]
    %v1851 = vld [vmem:[#allocation3 + $0x2d4] sm:$0xf]
    %v1852 = vld [vmem:[#allocation3 + $0x2d8] sm:$0xf]
    %v1853 = vld [vmem:[#allocation3 + $0x2dc] sm:$0xf]
    %v1854 = vld [vmem:[#allocation3 + $0x2e0] sm:$0xf]
    %v1855 = vld [vmem:[#allocation3 + $0x2e4] sm:$0xf]
    %v1856 = vld [vmem:[#allocation3 + $0x2e8] sm:$0xf]
    %v1857 = vld [vmem:[#allocation3 + $0x2ec] sm:$0xf]
    %v1858 = vld [vmem:[#allocation3 + $0x2f0] sm:$0xf]
    %v1859 = vld [vmem:[#allocation3 + $0x2f4] sm:$0xf]
    %v1860 = vld [vmem:[#allocation3 + $0x2f8] sm:$0xf]
    %v1861 = vld [vmem:[#allocation3 + $0x2fc] sm:$0xf]
    %v1862 = vld [vmem:[#allocation3 + $0x300] sm:$0xf]
    %v1863 = vld [vmem:[#allocation3 + $0x304] sm:$0xf]
    %v1864 = vld [vmem:[#allocation3 + $0x308] sm:$0xf]
    %v1865 = vld [vmem:[#allocation3 + $0x30c] sm:$0xf]
    %v1866 = vld [vmem:[#allocation3 + $0x310] sm:$0xf]
    %v1867 = vld [vmem:[#allocation3 + $0x314] sm:$0xf]
    %v1868 = vld [vmem:[#allocation3 + $0x318] sm:$0xf]
    %v1869 = vld [vmem:[#allocation3 + $0x31c] sm:$0xf]
    %v1870 = vld [vmem:[#allocation3 + $0x320] sm:$0xf]
    %v1871 = vld [vmem:[#allocation3 + $0x324] sm:$0xf]
    %v1872 = vld [vmem:[#allocation3 + $0x328] sm:$0xf]
    %v1873 = vld [vmem:[#allocation3 + $0x32c] sm:$0xf]
    %v1874 = vld [vmem:[#allocation3 + $0x330] sm:$0xf]
    %v1875 = vld [vmem:[#allocation3 + $0x334] sm:$0xf]
    %v1876 = vld [vmem:[#allocation3 + $0x338] sm:$0xf]
    %v1877 = vld [vmem:[#allocation3 + $0x33c] sm:$0xf]
    %v1878 = vld [vmem:[#allocation3 + $0x340] sm:$0xf]
    %v1879 = vld [vmem:[#allocation3 + $0x344] sm:$0xf]
    %v1880 = vld [vmem:[#allocation3 + $0x348] sm:$0xf]
    %v1881 = vld [vmem:[#allocation3 + $0x34c] sm:$0xf]
    %v1882 = vld [vmem:[#allocation3 + $0x350] sm:$0xf]
    %v1883 = vld [vmem:[#allocation3 + $0x354] sm:$0xf]
    %v1884 = vld [vmem:[#allocation3 + $0x358] sm:$0xf]
    %v1885 = vld [vmem:[#allocation3 + $0x35c] sm:$0xf]
    %v1886 = vld [vmem:[#allocation3 + $0x360] sm:$0xf]
    %v1887 = vld [vmem:[#allocation3 + $0x364] sm:$0xf]
    %v1888 = vld [vmem:[#allocation3 + $0x368] sm:$0xf]
    %v1889 = vld [vmem:[#allocation3 + $0x36c] sm:$0xf]
    %v1890 = vld [vmem:[#allocation3 + $0x370] sm:$0xf]
    %v1891 = vld [vmem:[#allocation3 + $0x374] sm:$0xf]
    %v1892 = vld [vmem:[#allocation3 + $0x378] sm:$0xf]
    %v1893 = vld [vmem:[#allocation3 + $0x37c] sm:$0xf]
    %v1894 = vld [vmem:[#allocation3 + $0x380] sm:$0xf]
    %v1895 = vld [vmem:[#allocation3 + $0x384] sm:$0xf]
    %v1896 = vld [vmem:[#allocation3 + $0x388] sm:$0xf]
    %v1897 = vld [vmem:[#allocation3 + $0x38c] sm:$0xf]
    %v1898 = vld [vmem:[#allocation3 + $0x390] sm:$0xf]
    %v1899 = vld [vmem:[#allocation3 + $0x394] sm:$0xf]
    %v1900 = vld [vmem:[#allocation3 + $0x398] sm:$0xf]
    %v1901 = vld [vmem:[#allocation3 + $0x39c] sm:$0xf]
    %v1902 = vld [vmem:[#allocation3 + $0x3a0] sm:$0xf]
    %v1903 = vld [vmem:[#allocation3 + $0x3a4] sm:$0xf]
    %v1904 = vld [vmem:[#allocation3 + $0x3a8] sm:$0xf]
    %v1905 = vld [vmem:[#allocation3 + $0x3ac] sm:$0xf]
    %v1906 = vld [vmem:[#allocation3 + $0x3b0] sm:$0xf]
    %v1907 = vld [vmem:[#allocation3 + $0x3b4] sm:$0xf]
    %v1908 = vld [vmem:[#allocation3 + $0x3b8] sm:$0xf]
    %v1909 = vld [vmem:[#allocation3 + $0x3bc] sm:$0xf]
    %v1910 = vld [vmem:[#allocation3 + $0x3c0] sm:$0xf]
    %v1911 = vld [vmem:[#allocation3 + $0x3c4] sm:$0xf]
    %v1912 = vld [vmem:[#allocation3 + $0x3c8] sm:$0xf]
    %v1913 = vld [vmem:[#allocation3 + $0x3cc] sm:$0xf]
    %v1914 = vld [vmem:[#allocation3 + $0x3d0] sm:$0xf]
    %v1915 = vld [vmem:[#allocation3 + $0x3d4] sm:$0xf]
    %v1916 = vld [vmem:[#allocation3 + $0x3d8] sm:$0xf]
    %v1917 = vld [vmem:[#allocation3 + $0x3dc] sm:$0xf]
    %v1918 = vld [vmem:[#allocation3 + $0x3e0] sm:$0xf]
    %v1919 = vld [vmem:[#allocation3 + $0x3e4] sm:$0xf]
    %v1920 = vld [vmem:[#allocation3 + $0x3e8] sm:$0xf]
    %v1921 = vld [vmem:[#allocation3 + $0x3ec] sm:$0xf]
    %v1922 = vld [vmem:[#allocation3 + $0x3f0] sm:$0xf]
    %v1923 = vld [vmem:[#allocation3 + $0x3f4] sm:$0xf]
    %v1924 = vld [vmem:[#allocation3 + $0x3f8] sm:$0xf]
    %v1925 = vld [vmem:[#allocation3 + $0x3fc] sm:$0xf]
    %v1926 = vld [vmem:[#allocation3 + $0x400] sm:$0xf]
    %v1927 = vld [vmem:[#allocation3 + $0x404] sm:$0xf]
    %v1928 = vld [vmem:[#allocation3 + $0x408] sm:$0xf]
    %v1929 = vld [vmem:[#allocation3 + $0x40c] sm:$0xf]
    %v1930 = vld [vmem:[#allocation3 + $0x410] sm:$0xf]
    %v1931 = vld [vmem:[#allocation3 + $0x414] sm:$0xf]
    %v1932 = vld [vmem:[#allocation3 + $0x418] sm:$0xf]
    %v1933 = vld [vmem:[#allocation3 + $0x41c] sm:$0xf]
    %v1934 = vld [vmem:[#allocation3 + $0x420] sm:$0xf]
    %v1935 = vld [vmem:[#allocation3 + $0x424] sm:$0xf]
    %v1936 = vld [vmem:[#allocation3 + $0x428] sm:$0xf]
    %v1937 = vld [vmem:[#allocation3 + $0x42c] sm:$0xf]
    %v1938 = vld [vmem:[#allocation3 + $0x430] sm:$0xf]
    %v1939 = vld [vmem:[#allocation3 + $0x434] sm:$0xf]
    %v1940 = vld [vmem:[#allocation3 + $0x438] sm:$0xf]
    %v1941 = vld [vmem:[#allocation3 + $0x43c] sm:$0xf]
    %v1942 = vld [vmem:[#allocation3 + $0x440] sm:$0xf]
    %v1943 = vld [vmem:[#allocation3 + $0x444] sm:$0xf]
    %v1944 = vld [vmem:[#allocation3 + $0x448] sm:$0xf]
    %v1945 = vld [vmem:[#allocation3 + $0x44c] sm:$0xf]
    %v1946 = vld [vmem:[#allocation3 + $0x450] sm:$0xf]
    %v1947 = vld [vmem:[#allocation3 + $0x454] sm:$0xf]
    %v1948 = vld [vmem:[#allocation3 + $0x458] sm:$0xf]
    %v1949 = vld [vmem:[#allocation3 + $0x45c] sm:$0xf]
    %v1950 = vld [vmem:[#allocation3 + $0x460] sm:$0xf]
    %v1951 = vld [vmem:[#allocation3 + $0x464] sm:$0xf]
    %v1952 = vld [vmem:[#allocation3 + $0x468] sm:$0xf]
    %v1953 = vld [vmem:[#allocation3 + $0x46c] sm:$0xf]
    %v1954 = vld [vmem:[#allocation3 + $0x470] sm:$0xf]
    %v1955 = vld [vmem:[#allocation3 + $0x474] sm:$0xf]
    %v1956 = vld [vmem:[#allocation3 + $0x478] sm:$0xf]
    %v1957 = vld [vmem:[#allocation3 + $0x47c] sm:$0xf]
    %v1958 = vld [vmem:[#allocation5] sm:$0xf]
    %v1959 = vld [vmem:[#allocation5 + $0x4] sm:$0xf]
    %v1960 = vld [vmem:[#allocation5 + $0x8] sm:$0xf]
    %v1961 = vld [vmem:[#allocation5 + $0xc] sm:$0xf]
    %v1962 = vld [vmem:[#allocation5 + $0x10] sm:$0xf]
    %v1963 = vld [vmem:[#allocation5 + $0x14] sm:$0xf]
    %v1964 = vld [vmem:[#allocation5 + $0x18] sm:$0xf]
    %v1965 = vld [vmem:[#allocation5 + $0x1c] sm:$0xf]
    %v1966 = vld [vmem:[#allocation5 + $0x20] sm:$0xf]
    %v1967 = vld [vmem:[#allocation5 + $0x24] sm:$0xf]
    %v1968 = vld [vmem:[#allocation5 + $0x28] sm:$0xf]
    %v1969 = vld [vmem:[#allocation5 + $0x2c] sm:$0xf]
    %v1970 = vld [vmem:[#allocation5 + $0x30] sm:$0xf]
    %v1971 = vld [vmem:[#allocation5 + $0x34] sm:$0xf]
    %v1972 = vld [vmem:[#allocation5 + $0x38] sm:$0xf]
    %v1973 = vld [vmem:[#allocation5 + $0x3c] sm:$0xf]
    %v1974 = vld [vmem:[#allocation5 + $0x40] sm:$0xf]
    %v1975 = vld [vmem:[#allocation5 + $0x44] sm:$0xf]
    %v1976 = vld [vmem:[#allocation5 + $0x48] sm:$0xf]
    %v1977 = vld [vmem:[#allocation5 + $0x4c] sm:$0xf]
    %v1978 = vld [vmem:[#allocation5 + $0x50] sm:$0xf]
    %v1979 = vld [vmem:[#allocation5 + $0x54] sm:$0xf]
    %v1980 = vld [vmem:[#allocation5 + $0x58] sm:$0xf]
    %v1981 = vld [vmem:[#allocation5 + $0x5c] sm:$0xf]
    %v1982 = vld [vmem:[#allocation5 + $0x60] sm:$0xf]
    %v1983 = vld [vmem:[#allocation5 + $0x64] sm:$0xf]
    %v1984 = vld [vmem:[#allocation5 + $0x68] sm:$0xf]
    %v1985 = vld [vmem:[#allocation5 + $0x6c] sm:$0xf]
    %v1986 = vld [vmem:[#allocation5 + $0x70] sm:$0xf]
    %v1987 = vld [vmem:[#allocation5 + $0x74] sm:$0xf]
    %v1988 = vld [vmem:[#allocation5 + $0x78] sm:$0xf]
    %v1989 = vld [vmem:[#allocation5 + $0x7c] sm:$0xf]
    %v1990 = vld [vmem:[#allocation5 + $0x80] sm:$0xf]
    %v1991 = vld [vmem:[#allocation5 + $0x84] sm:$0xf]
    %v1992 = vld [vmem:[#allocation5 + $0x88] sm:$0xf]
    %v1993 = vld [vmem:[#allocation5 + $0x8c] sm:$0xf]
    %v1994 = vld [vmem:[#allocation5 + $0x90] sm:$0xf]
    %v1995 = vld [vmem:[#allocation5 + $0x94] sm:$0xf]
    %v1996 = vld [vmem:[#allocation5 + $0x98] sm:$0xf]
    %v1997 = vld [vmem:[#allocation5 + $0x9c] sm:$0xf]
    %v1998 = vld [vmem:[#allocation5 + $0xa0] sm:$0xf]
    %v1999 = vld [vmem:[#allocation5 + $0xa4] sm:$0xf]
    %v2000 = vld [vmem:[#allocation5 + $0xa8] sm:$0xf]
    %v2001 = vld [vmem:[#allocation5 + $0xac] sm:$0xf]
    %v2002 = vld [vmem:[#allocation5 + $0xb0] sm:$0xf]
    %v2003 = vld [vmem:[#allocation5 + $0xb4] sm:$0xf]
    %v2004 = vld [vmem:[#allocation5 + $0xb8] sm:$0xf]
    %v2005 = vld [vmem:[#allocation5 + $0xbc] sm:$0xf]
    %v2006 = vld [vmem:[#allocation5 + $0xc0] sm:$0xf]
    %v2007 = vld [vmem:[#allocation5 + $0xc4] sm:$0xf]
    %v2008 = vld [vmem:[#allocation5 + $0xc8] sm:$0xf]
    %v2009 = vld [vmem:[#allocation5 + $0xcc] sm:$0xf]
    %v2010 = vld [vmem:[#allocation5 + $0xd0] sm:$0xf]
    %v2011 = vld [vmem:[#allocation5 + $0xd4] sm:$0xf]
    %v2012 = vld [vmem:[#allocation5 + $0xd8] sm:$0xf]
    %v2013 = vld [vmem:[#allocation5 + $0xdc] sm:$0xf]
    %v2014 = vld [vmem:[#allocation5 + $0xe0] sm:$0xf]
    %v2015 = vld [vmem:[#allocation5 + $0xe4] sm:$0xf]
    %v2016 = vld [vmem:[#allocation5 + $0xe8] sm:$0xf]
    %v2017 = vld [vmem:[#allocation5 + $0xec] sm:$0xf]
    %v2018 = vld [vmem:[#allocation5 + $0xf0] sm:$0xf]
    %v2019 = vld [vmem:[#allocation5 + $0xf4] sm:$0xf]
    %v2020 = vld [vmem:[#allocation5 + $0xf8] sm:$0xf]
    %v2021 = vld [vmem:[#allocation5 + $0xfc] sm:$0xf]
    %v2022 = vld [vmem:[#allocation5 + $0x100] sm:$0xf]
    %v2023 = vld [vmem:[#allocation5 + $0x104] sm:$0xf]
    %v2024 = vld [vmem:[#allocation5 + $0x108] sm:$0xf]
    %v2025 = vld [vmem:[#allocation5 + $0x10c] sm:$0xf]
    %v2026 = vld [vmem:[#allocation5 + $0x110] sm:$0xf]
    %v2027 = vld [vmem:[#allocation5 + $0x114] sm:$0xf]
    %v2028 = vld [vmem:[#allocation5 + $0x118] sm:$0xf]
    %v2029 = vld [vmem:[#allocation5 + $0x11c] sm:$0xf]
    %v2030 = vld [vmem:[#allocation5 + $0x120] sm:$0xf]
    %v2031 = vld [vmem:[#allocation5 + $0x124] sm:$0xf]
    %v2032 = vld [vmem:[#allocation5 + $0x128] sm:$0xf]
    %v2033 = vld [vmem:[#allocation5 + $0x12c] sm:$0xf]
    %v2034 = vld [vmem:[#allocation5 + $0x130] sm:$0xf]
    %v2035 = vld [vmem:[#allocation5 + $0x134] sm:$0xf]
    %v2036 = vld [vmem:[#allocation5 + $0x138] sm:$0xf]
    %v2037 = vld [vmem:[#allocation5 + $0x13c] sm:$0xf]
    %v2038 = vld [vmem:[#allocation5 + $0x140] sm:$0xf]
    %v2039 = vld [vmem:[#allocation5 + $0x144] sm:$0xf]
    %v2040 = vld [vmem:[#allocation5 + $0x148] sm:$0xf]
    %v2041 = vld [vmem:[#allocation5 + $0x14c] sm:$0xf]
    %v2042 = vld [vmem:[#allocation5 + $0x150] sm:$0xf]
    %v2043 = vld [vmem:[#allocation5 + $0x154] sm:$0xf]
    %v2044 = vld [vmem:[#allocation5 + $0x158] sm:$0xf]
    %v2045 = vld [vmem:[#allocation5 + $0x15c] sm:$0xf]
    %v2046 = vld [vmem:[#allocation5 + $0x160] sm:$0xf]
    %v2047 = vld [vmem:[#allocation5 + $0x164] sm:$0xf]
    %v2048 = vld [vmem:[#allocation5 + $0x168] sm:$0xf]
    %v2049 = vld [vmem:[#allocation5 + $0x16c] sm:$0xf]
    %v2050 = vld [vmem:[#allocation5 + $0x170] sm:$0xf]
    %v2051 = vld [vmem:[#allocation5 + $0x174] sm:$0xf]
    %v2052 = vld [vmem:[#allocation5 + $0x178] sm:$0xf]
    %v2053 = vld [vmem:[#allocation5 + $0x17c] sm:$0xf]
    %v2054 = vld [vmem:[#allocation5 + $0x180] sm:$0xf]
    %v2055 = vld [vmem:[#allocation5 + $0x184] sm:$0xf]
    %v2056 = vld [vmem:[#allocation5 + $0x188] sm:$0xf]
    %v2057 = vld [vmem:[#allocation5 + $0x18c] sm:$0xf]
    %v2058 = vld [vmem:[#allocation5 + $0x190] sm:$0xf]
    %v2059 = vld [vmem:[#allocation5 + $0x194] sm:$0xf]
    %v2060 = vld [vmem:[#allocation5 + $0x198] sm:$0xf]
    %v2061 = vld [vmem:[#allocation5 + $0x19c] sm:$0xf]
    %v2062 = vld [vmem:[#allocation5 + $0x1a0] sm:$0xf]
    %v2063 = vld [vmem:[#allocation5 + $0x1a4] sm:$0xf]
    %v2064 = vld [vmem:[#allocation5 + $0x1a8] sm:$0xf]
    %v2065 = vld [vmem:[#allocation5 + $0x1ac] sm:$0xf]
    %v2066 = vld [vmem:[#allocation5 + $0x1b0] sm:$0xf]
    %v2067 = vld [vmem:[#allocation5 + $0x1b4] sm:$0xf]
    %v2068 = vld [vmem:[#allocation5 + $0x1b8] sm:$0xf]
    %v2069 = vld [vmem:[#allocation5 + $0x1bc] sm:$0xf]
    %v2070 = vld [vmem:[#allocation5 + $0x1c0] sm:$0xf]
    %v2071 = vld [vmem:[#allocation5 + $0x1c4] sm:$0xf]
    %v2072 = vld [vmem:[#allocation5 + $0x1c8] sm:$0xf]
    %v2073 = vld [vmem:[#allocation5 + $0x1cc] sm:$0xf]
    %v2074 = vld [vmem:[#allocation5 + $0x1d0] sm:$0xf]
    %v2075 = vld [vmem:[#allocation5 + $0x1d4] sm:$0xf]
    %v2076 = vld [vmem:[#allocation5 + $0x1d8] sm:$0xf]
    %v2077 = vld [vmem:[#allocation5 + $0x1dc] sm:$0xf]
    %v2078 = vld [vmem:[#allocation5 + $0x1e0] sm:$0xf]
    %v2079 = vld [vmem:[#allocation5 + $0x1e4] sm:$0xf]
    %v2080 = vld [vmem:[#allocation5 + $0x1e8] sm:$0xf]
    %v2081 = vld [vmem:[#allocation5 + $0x1ec] sm:$0xf]
    %v2082 = vld [vmem:[#allocation5 + $0x1f0] sm:$0xf]
    %v2083 = vld [vmem:[#allocation5 + $0x1f4] sm:$0xf]
    %v2084 = vld [vmem:[#allocation5 + $0x1f8] sm:$0xf]
    %v2085 = vld [vmem:[#allocation5 + $0x1fc] sm:$0xf]
    %v2086 = vld [vmem:[#allocation5 + $0x200] sm:$0xf]
    %v2087 = vld [vmem:[#allocation5 + $0x204] sm:$0xf]
    %v2088 = vld [vmem:[#allocation5 + $0x208] sm:$0xf]
    %v2089 = vld [vmem:[#allocation5 + $0x20c] sm:$0xf]
    %v2090 = vld [vmem:[#allocation5 + $0x210] sm:$0xf]
    %v2091 = vld [vmem:[#allocation5 + $0x214] sm:$0xf]
    %v2092 = vld [vmem:[#allocation5 + $0x218] sm:$0xf]
    %v2093 = vld [vmem:[#allocation5 + $0x21c] sm:$0xf]
    %v2094 = vld [vmem:[#allocation5 + $0x220] sm:$0xf]
    %v2095 = vld [vmem:[#allocation5 + $0x224] sm:$0xf]
    %v2096 = vld [vmem:[#allocation5 + $0x228] sm:$0xf]
    %v2097 = vld [vmem:[#allocation5 + $0x22c] sm:$0xf]
    %v2098 = vld [vmem:[#allocation5 + $0x230] sm:$0xf]
    %v2099 = vld [vmem:[#allocation5 + $0x234] sm:$0xf]
    %v2100 = vld [vmem:[#allocation5 + $0x238] sm:$0xf]
    %v2101 = vld [vmem:[#allocation5 + $0x23c] sm:$0xf]
    %v2102 = vld [vmem:[#allocation5 + $0x240] sm:$0xf]
    %v2103 = vld [vmem:[#allocation5 + $0x244] sm:$0xf]
    %v2104 = vld [vmem:[#allocation5 + $0x248] sm:$0xf]
    %v2105 = vld [vmem:[#allocation5 + $0x24c] sm:$0xf]
    %v2106 = vld [vmem:[#allocation5 + $0x250] sm:$0xf]
    %v2107 = vld [vmem:[#allocation5 + $0x254] sm:$0xf]
    %v2108 = vld [vmem:[#allocation5 + $0x258] sm:$0xf]
    %v2109 = vld [vmem:[#allocation5 + $0x25c] sm:$0xf]
    %v2110 = vld [vmem:[#allocation5 + $0x260] sm:$0xf]
    %v2111 = vld [vmem:[#allocation5 + $0x264] sm:$0xf]
    %v2112 = vld [vmem:[#allocation5 + $0x268] sm:$0xf]
    %v2113 = vld [vmem:[#allocation5 + $0x26c] sm:$0xf]
    %v2114 = vld [vmem:[#allocation5 + $0x270] sm:$0xf]
    %v2115 = vld [vmem:[#allocation5 + $0x274] sm:$0xf]
    %v2116 = vld [vmem:[#allocation5 + $0x278] sm:$0xf]
    %v2117 = vld [vmem:[#allocation5 + $0x27c] sm:$0xf]
    %v2118 = vld [vmem:[#allocation5 + $0x280] sm:$0xf]
    %v2119 = vld [vmem:[#allocation5 + $0x284] sm:$0xf]
    %v2120 = vld [vmem:[#allocation5 + $0x288] sm:$0xf]
    %v2121 = vld [vmem:[#allocation5 + $0x28c] sm:$0xf]
    %v2122 = vld [vmem:[#allocation5 + $0x290] sm:$0xf]
    %v2123 = vld [vmem:[#allocation5 + $0x294] sm:$0xf]
    %v2124 = vld [vmem:[#allocation5 + $0x298] sm:$0xf]
    %v2125 = vld [vmem:[#allocation5 + $0x29c] sm:$0xf]
    %v2126 = vld [vmem:[#allocation5 + $0x2a0] sm:$0xf]
    %v2127 = vld [vmem:[#allocation5 + $0x2a4] sm:$0xf]
    %v2128 = vld [vmem:[#allocation5 + $0x2a8] sm:$0xf]
    %v2129 = vld [vmem:[#allocation5 + $0x2ac] sm:$0xf]
    %v2130 = vld [vmem:[#allocation5 + $0x2b0] sm:$0xf]
    %v2131 = vld [vmem:[#allocation5 + $0x2b4] sm:$0xf]
    %v2132 = vld [vmem:[#allocation5 + $0x2b8] sm:$0xf]
    %v2133 = vld [vmem:[#allocation5 + $0x2bc] sm:$0xf]
    %v2134 = vld [vmem:[#allocation5 + $0x2c0] sm:$0xf]
    %v2135 = vld [vmem:[#allocation5 + $0x2c4] sm:$0xf]
    %v2136 = vld [vmem:[#allocation5 + $0x2c8] sm:$0xf]
    %v2137 = vld [vmem:[#allocation5 + $0x2cc] sm:$0xf]
    %v2138 = vld [vmem:[#allocation5 + $0x2d0] sm:$0xf]
    %v2139 = vld [vmem:[#allocation5 + $0x2d4] sm:$0xf]
    %v2140 = vld [vmem:[#allocation5 + $0x2d8] sm:$0xf]
    %v2141 = vld [vmem:[#allocation5 + $0x2dc] sm:$0xf]
    %v2142 = vld [vmem:[#allocation5 + $0x2e0] sm:$0xf]
    %v2143 = vld [vmem:[#allocation5 + $0x2e4] sm:$0xf]
    %v2144 = vld [vmem:[#allocation5 + $0x2e8] sm:$0xf]
    %v2145 = vld [vmem:[#allocation5 + $0x2ec] sm:$0xf]
    %v2146 = vld [vmem:[#allocation5 + $0x2f0] sm:$0xf]
    %v2147 = vld [vmem:[#allocation5 + $0x2f4] sm:$0xf]
    %v2148 = vld [vmem:[#allocation5 + $0x2f8] sm:$0xf]
    %v2149 = vld [vmem:[#allocation5 + $0x2fc] sm:$0xf]
    %v2150 = vld [vmem:[#allocation5 + $0x300] sm:$0xf]
    %v2151 = vld [vmem:[#allocation5 + $0x304] sm:$0xf]
    %v2152 = vld [vmem:[#allocation5 + $0x308] sm:$0xf]
    %v2153 = vld [vmem:[#allocation5 + $0x30c] sm:$0xf]
    %v2154 = vld [vmem:[#allocation5 + $0x310] sm:$0xf]
    %v2155 = vld [vmem:[#allocation5 + $0x314] sm:$0xf]
    %v2156 = vld [vmem:[#allocation5 + $0x318] sm:$0xf]
    %v2157 = vld [vmem:[#allocation5 + $0x31c] sm:$0xf]
    %v2158 = vld [vmem:[#allocation5 + $0x320] sm:$0xf]
    %v2159 = vld [vmem:[#allocation5 + $0x324] sm:$0xf]
    %v2160 = vld [vmem:[#allocation5 + $0x328] sm:$0xf]
    %v2161 = vld [vmem:[#allocation5 + $0x32c] sm:$0xf]
    %v2162 = vld [vmem:[#allocation5 + $0x330] sm:$0xf]
    %v2163 = vld [vmem:[#allocation5 + $0x334] sm:$0xf]
    %v2164 = vld [vmem:[#allocation5 + $0x338] sm:$0xf]
    %v2165 = vld [vmem:[#allocation5 + $0x33c] sm:$0xf]
    %v2166 = vld [vmem:[#allocation5 + $0x340] sm:$0xf]
    %v2167 = vld [vmem:[#allocation5 + $0x344] sm:$0xf]
    %v2168 = vld [vmem:[#allocation5 + $0x348] sm:$0xf]
    %v2169 = vld [vmem:[#allocation5 + $0x34c] sm:$0xf]
    %v2170 = vld [vmem:[#allocation5 + $0x350] sm:$0xf]
    %v2171 = vld [vmem:[#allocation5 + $0x354] sm:$0xf]
    %v2172 = vld [vmem:[#allocation5 + $0x358] sm:$0xf]
    %v2173 = vld [vmem:[#allocation5 + $0x35c] sm:$0xf]
    %v2174 = vld [vmem:[#allocation5 + $0x360] sm:$0xf]
    %v2175 = vld [vmem:[#allocation5 + $0x364] sm:$0xf]
    %v2176 = vld [vmem:[#allocation5 + $0x368] sm:$0xf]
    %v2177 = vld [vmem:[#allocation5 + $0x36c] sm:$0xf]
    %v2178 = vld [vmem:[#allocation5 + $0x370] sm:$0xf]
    %v2179 = vld [vmem:[#allocation5 + $0x374] sm:$0xf]
    %v2180 = vld [vmem:[#allocation5 + $0x378] sm:$0xf]
    %v2181 = vld [vmem:[#allocation5 + $0x37c] sm:$0xf]
    %v2182 = vld [vmem:[#allocation5 + $0x380] sm:$0xf]
    %v2183 = vld [vmem:[#allocation5 + $0x384] sm:$0xf]
    %v2184 = vld [vmem:[#allocation5 + $0x388] sm:$0xf]
    %v2185 = vld [vmem:[#allocation5 + $0x38c] sm:$0xf]
    %v2186 = vld [vmem:[#allocation5 + $0x390] sm:$0xf]
    %v2187 = vld [vmem:[#allocation5 + $0x394] sm:$0xf]
    %v2188 = vld [vmem:[#allocation5 + $0x398] sm:$0xf]
    %v2189 = vld [vmem:[#allocation5 + $0x39c] sm:$0xf]
    %v2190 = vld [vmem:[#allocation5 + $0x3a0] sm:$0xf]
    %v2191 = vld [vmem:[#allocation5 + $0x3a4] sm:$0xf]
    %v2192 = vld [vmem:[#allocation5 + $0x3a8] sm:$0xf]
    %v2193 = vld [vmem:[#allocation5 + $0x3ac] sm:$0xf]
    %v2194 = vld [vmem:[#allocation5 + $0x3b0] sm:$0xf]
    %v2195 = vld [vmem:[#allocation5 + $0x3b4] sm:$0xf]
    %v2196 = vld [vmem:[#allocation5 + $0x3b8] sm:$0xf]
    %v2197 = vld [vmem:[#allocation5 + $0x3bc] sm:$0xf]
    %v2198 = vld [vmem:[#allocation5 + $0x3c0] sm:$0xf]
    %v2199 = vld [vmem:[#allocation5 + $0x3c4] sm:$0xf]
    %v2200 = vld [vmem:[#allocation5 + $0x3c8] sm:$0xf]
    %v2201 = vld [vmem:[#allocation5 + $0x3cc] sm:$0xf]
    %v2202 = vld [vmem:[#allocation5 + $0x3d0] sm:$0xf]
    %v2203 = vld [vmem:[#allocation5 + $0x3d4] sm:$0xf]
    %v2204 = vld [vmem:[#allocation5 + $0x3d8] sm:$0xf]
    %v2205 = vld [vmem:[#allocation5 + $0x3dc] sm:$0xf]
    %v2206 = vld [vmem:[#allocation5 + $0x3e0] sm:$0xf]
    %v2207 = vld [vmem:[#allocation5 + $0x3e4] sm:$0xf]
    %v2208 = vld [vmem:[#allocation5 + $0x3e8] sm:$0xf]
    %v2209 = vld [vmem:[#allocation5 + $0x3ec] sm:$0xf]
    %v2210 = vld [vmem:[#allocation5 + $0x3f0] sm:$0xf]
    %v2211 = vld [vmem:[#allocation5 + $0x3f4] sm:$0xf]
    %v2212 = vld [vmem:[#allocation5 + $0x3f8] sm:$0xf]
    %v2213 = vld [vmem:[#allocation5 + $0x3fc] sm:$0xf]
    %v2214 = vld [vmem:[#allocation5 + $0x400] sm:$0xf]
    %v2215 = vld [vmem:[#allocation5 + $0x404] sm:$0xf]
    %v2216 = vld [vmem:[#allocation5 + $0x408] sm:$0xf]
    %v2217 = vld [vmem:[#allocation5 + $0x40c] sm:$0xf]
    %v2218 = vld [vmem:[#allocation5 + $0x410] sm:$0xf]
    %v2219 = vld [vmem:[#allocation5 + $0x414] sm:$0xf]
    %v2220 = vld [vmem:[#allocation5 + $0x418] sm:$0xf]
    %v2221 = vld [vmem:[#allocation5 + $0x41c] sm:$0xf]
    %v2222 = vld [vmem:[#allocation5 + $0x420] sm:$0xf]
    %v2223 = vld [vmem:[#allocation5 + $0x424] sm:$0xf]
    %v2224 = vld [vmem:[#allocation5 + $0x428] sm:$0xf]
    %v2225 = vld [vmem:[#allocation5 + $0x42c] sm:$0xf]
    %v2226 = vld [vmem:[#allocation5 + $0x430] sm:$0xf]
    %v2227 = vld [vmem:[#allocation5 + $0x434] sm:$0xf]
    %v2228 = vld [vmem:[#allocation5 + $0x438] sm:$0xf]
    %v2229 = vld [vmem:[#allocation5 + $0x43c] sm:$0xf]
    %v2230 = vld [vmem:[#allocation5 + $0x440] sm:$0xf]
    %v2231 = vld [vmem:[#allocation5 + $0x444] sm:$0xf]
    %v2232 = vld [vmem:[#allocation5 + $0x448] sm:$0xf]
    %v2233 = vld [vmem:[#allocation5 + $0x44c] sm:$0xf]
    %v2234 = vld [vmem:[#allocation5 + $0x450] sm:$0xf]
    %v2235 = vld [vmem:[#allocation5 + $0x454] sm:$0xf]
    %v2236 = vld [vmem:[#allocation5 + $0x458] sm:$0xf]
    %v2237 = vld [vmem:[#allocation5 + $0x45c] sm:$0xf]
    %v2238 = vld [vmem:[#allocation5 + $0x460] sm:$0xf]
    %v2239 = vld [vmem:[#allocation5 + $0x464] sm:$0xf]
    %v2240 = vld [vmem:[#allocation5 + $0x468] sm:$0xf]
    %v2241 = vld [vmem:[#allocation5 + $0x46c] sm:$0xf]
    %v2242 = vld [vmem:[#allocation5 + $0x470] sm:$0xf]
    %v2243 = vld [vmem:[#allocation5 + $0x474] sm:$0xf]
    %v2244 = vld [vmem:[#allocation5 + $0x478] sm:$0xf]
    %v2245 = vld [vmem:[#allocation5 + $0x47c] sm:$0xf]
    %v2246 = vld [vmem:[%s8] sm:$0x1]
    %v2247 = vld [vmem:[#allocation2] sm:$0x1]
    %v2248 = vld [vmem:[%s1] sm:$0xff]
    %v2249 = vld [vmem:[%s1 + $0x8] sm:$0xff]
    %v2250 = vld [vmem:[%s1 + $0x10] sm:$0xff]
    %v2251 = vld [vmem:[%s1 + $0x18] sm:$0xff]
    %v2252 = vld [vmem:[%s1 + $0x20] sm:$0xff]
    %v2253 = vld [vmem:[%s1 + $0x28] sm:$0xff]
    %v2254 = vld [vmem:[%s1 + $0x30] sm:$0xff]
    %v2255 = vld [vmem:[%s1 + $0x38] sm:$0xff]
    %v2256 = vld [vmem:[%s1 + $0x40] sm:$0xff]
    %v2257 = vunpack.c.l.bf16 %v2248
    %v2258 = vunpack.c.h.bf16 %v2248
    %v2259 = vunpack.c.l.bf16 %v2249
    %v2260 = vunpack.c.h.bf16 %v2249
    %v2261 = vunpack.c.l.bf16 %v2250
    %v2262 = vunpack.c.h.bf16 %v2250
    %v2263 = vunpack.c.l.bf16 %v2251
    %v2264 = vunpack.c.h.bf16 %v2251
    %v2265 = vunpack.c.l.bf16 %v2252
    %v2266 = vunpack.c.h.bf16 %v2252
    %v2267 = vunpack.c.l.bf16 %v2253
    %v2268 = vunpack.c.h.bf16 %v2253
    %v2269 = vunpack.c.l.bf16 %v2254
    %v2270 = vunpack.c.h.bf16 %v2254
    %v2271 = vunpack.c.l.bf16 %v2255
    %v2272 = vunpack.c.h.bf16 %v2255
    %v2273 = vunpack.c.l.bf16 %v2256
    %v2274 = vunpack.c.h.bf16 %v2256
    %v2275 = vmul.f32 %v2257, %v2257
    %v2276 = vmul.f32 %v2258, %v2258
    %v2277 = vmul.f32 %v2259, %v2259
    %v2278 = vmul.f32 %v2260, %v2260
    %v2279 = vmul.f32 %v2261, %v2261
    %v2280 = vmul.f32 %v2262, %v2262
    %v2281 = vmul.f32 %v2263, %v2263
    %v2282 = vmul.f32 %v2264, %v2264
    %v2283 = vmul.f32 %v2265, %v2265
    %v2284 = vmul.f32 %v2266, %v2266
    %v2285 = vmul.f32 %v2267, %v2267
    %v2286 = vmul.f32 %v2268, %v2268
    %v2287 = vmul.f32 %v2269, %v2269
    %v2288 = vmul.f32 %v2270, %v2270
    %v2289 = vmul.f32 %v2271, %v2271
    %v2290 = vmul.f32 %v2272, %v2272
    %v2291 = vmul.f32 %v2273, %v2273
    %v2292 = vmul.f32 %v2274, %v2274
    %v2293 = vadd.f32 %v2275, %v2276
    %v2294 = vadd.f32 %v2293, %v2277
    %v2295 = vadd.f32 %v2294, %v2278
    %v2296 = vadd.f32 %v2295, %v2279
    %v2297 = vadd.f32 %v2296, %v2280
    %v2298 = vadd.f32 %v2297, %v2281
    %v2299 = vadd.f32 %v2298, %v2282
    %v2300 = vadd.f32 %v2299, %v2283
    %v2301 = vadd.f32 %v2300, %v2284
    %v2302 = vadd.f32 %v2301, %v2285
    %v2303 = vadd.f32 %v2302, %v2286
    %v2304 = vadd.f32 %v2303, %v2287
    %v2305 = vadd.f32 %v2304, %v2288
    %v2306 = vadd.f32 %v2305, %v2289
    %v2307 = vadd.f32 %v2306, %v2290
    %v2308 = vadd.f32 %v2307, %v2291
    %v2309 = vadd.f32 %v2308, %v2292
    %2310 = vadd.xlane.f32.xlu0 %v2309
    %v2311 = vpop.xlane.xlu0 %2310
    %v2312 = vmax.f32 %v2311, 1e-24
    %v2313 = vrsqrt.pop %v2312
    %v2314 = vmul.f32 %v2257, %v2313
    %v2315 = vmul.f32 %v2258, %v2313
    %v2316 = vmul.f32 %v2259, %v2313
    %v2317 = vmul.f32 %v2260, %v2313
    %v2318 = vmul.f32 %v2261, %v2313
    %v2319 = vmul.f32 %v2262, %v2313
    %v2320 = vmul.f32 %v2263, %v2313
    %v2321 = vmul.f32 %v2264, %v2313
    %v2322 = vmul.f32 %v2265, %v2313
    %v2323 = vmul.f32 %v2266, %v2313
    %v2324 = vmul.f32 %v2267, %v2313
    %v2325 = vmul.f32 %v2268, %v2313
    %v2326 = vmul.f32 %v2269, %v2313
    %v2327 = vmul.f32 %v2270, %v2313
    %v2328 = vmul.f32 %v2271, %v2313
    %v2329 = vmul.f32 %v2272, %v2313
    %v2330 = vmul.f32 %v2273, %v2313
    %v2331 = vmul.f32 %v2274, %v2313
    %v2332 = vmul.f32 %v77, %v2314
    %v2333 = vmul.f32 %v78, %v2315
    %v2334 = vmul.f32 %v79, %v2316
    %v2335 = vmul.f32 %v80, %v2317
    %v2336 = vmul.f32 %v81, %v2318
    %v2337 = vmul.f32 %v82, %v2319
    %v2338 = vmul.f32 %v83, %v2320
    %v2339 = vmul.f32 %v84, %v2321
    %v2340 = vmul.f32 %v85, %v2322
    %v2341 = vmul.f32 %v86, %v2323
    %v2342 = vmul.f32 %v87, %v2324
    %v2343 = vmul.f32 %v88, %v2325
    %v2344 = vmul.f32 %v89, %v2326
    %v2345 = vmul.f32 %v90, %v2327
    %v2346 = vmul.f32 %v91, %v2328
    %v2347 = vmul.f32 %v92, %v2329
    %v2348 = vmul.f32 %v93, %v2330
    %v2349 = vmul.f32 %v94, %v2331
    %v2350 = vpack.c.bf16 %v2314, %v2314
    %v2351 = vpack.c.bf16 %v2315, %v2315
    %v2352 = vpack.c.bf16 %v2316, %v2316
    %v2353 = vpack.c.bf16 %v2317, %v2317
    %v2354 = vpack.c.bf16 %v2318, %v2318
    %v2355 = vpack.c.bf16 %v2319, %v2319
    %v2356 = vpack.c.bf16 %v2320, %v2320
    %v2357 = vpack.c.bf16 %v2321, %v2321
    %v2358 = vpack.c.bf16 %v2322, %v2322
    %v2359 = vpack.c.bf16 %v2323, %v2323
    %v2360 = vpack.c.bf16 %v2324, %v2324
    %v2361 = vpack.c.bf16 %v2325, %v2325
    %v2362 = vpack.c.bf16 %v2326, %v2326
    %v2363 = vpack.c.bf16 %v2327, %v2327
    %v2364 = vpack.c.bf16 %v2328, %v2328
    %v2365 = vpack.c.bf16 %v2329, %v2329
    %v2366 = vpack.c.bf16 %v2330, %v2330
    %v2367 = vpack.c.bf16 %v2331, %v2331
    %v2656 = vunpack.c.l.b16 %v1670
    %v2657 = vunpack.c.l.b16 %v1671
    %v2658 = vunpack.c.l.b16 %v1672
    %v2659 = vunpack.c.l.b16 %v1673
    %v2660 = vunpack.c.l.b16 %v1674
    %v2661 = vunpack.c.l.b16 %v1675
    %v2662 = vunpack.c.l.b16 %v1676
    %v2663 = vunpack.c.l.b16 %v1677
    %v2664 = vunpack.c.l.b16 %v1678
    %v2665 = vunpack.c.l.b16 %v1679
    %v2666 = vunpack.c.l.b16 %v1680
    %v2667 = vunpack.c.l.b16 %v1681
    %v2668 = vunpack.c.l.b16 %v1682
    %v2669 = vunpack.c.l.b16 %v1683
    %v2670 = vunpack.c.l.b16 %v1684
    %v2671 = vunpack.c.l.b16 %v1685
    %v2672 = vunpack.c.l.b16 %v1686
    %v2673 = vunpack.c.l.b16 %v1687
    %v2674 = vunpack.c.l.b16 %v1688
    %v2675 = vunpack.c.l.b16 %v1689
    %v2676 = vunpack.c.l.b16 %v1690
    %v2677 = vunpack.c.l.b16 %v1691
    %v2678 = vunpack.c.l.b16 %v1692
    %v2679 = vunpack.c.l.b16 %v1693
    %v2680 = vunpack.c.l.b16 %v1694
    %v2681 = vunpack.c.l.b16 %v1695
    %v2682 = vunpack.c.l.b16 %v1696
    %v2683 = vunpack.c.l.b16 %v1697
    %v2684 = vunpack.c.l.b16 %v1698
    %v2685 = vunpack.c.l.b16 %v1699
    %v2686 = vunpack.c.l.b16 %v1700
    %v2687 = vunpack.c.l.b16 %v1701
    %v2688 = vunpack.c.l.b16 %v1702
    %v2689 = vunpack.c.l.b16 %v1703
    %v2690 = vunpack.c.l.b16 %v1704
    %v2691 = vunpack.c.l.b16 %v1705
    %v2692 = vunpack.c.l.b16 %v1706
    %v2693 = vunpack.c.l.b16 %v1707
    %v2694 = vunpack.c.l.b16 %v1708
    %v2695 = vunpack.c.l.b16 %v1709
    %v2696 = vunpack.c.l.b16 %v1710
    %v2697 = vunpack.c.l.b16 %v1711
    %v2698 = vunpack.c.l.b16 %v1712
    %v2699 = vunpack.c.l.b16 %v1713
    %v2700 = vunpack.c.l.b16 %v1714
    %v2701 = vunpack.c.l.b16 %v1715
    %v2702 = vunpack.c.l.b16 %v1716
    %v2703 = vunpack.c.l.b16 %v1717
    %v2704 = vunpack.c.l.b16 %v1718
    %v2705 = vunpack.c.l.b16 %v1719
    %v2706 = vunpack.c.l.b16 %v1720
    %v2707 = vunpack.c.l.b16 %v1721
    %v2708 = vunpack.c.l.b16 %v1722
    %v2709 = vunpack.c.l.b16 %v1723
    %v2710 = vunpack.c.l.b16 %v1724
    %v2711 = vunpack.c.l.b16 %v1725
    %v2712 = vunpack.c.l.b16 %v1726
    %v2713 = vunpack.c.l.b16 %v1727
    %v2714 = vunpack.c.l.b16 %v1728
    %v2715 = vunpack.c.l.b16 %v1729
    %v2716 = vunpack.c.l.b16 %v1730
    %v2717 = vunpack.c.l.b16 %v1731
    %v2718 = vunpack.c.l.b16 %v1732
    %v2719 = vunpack.c.l.b16 %v1733
    %v2720 = vunpack.c.l.b16 %v1734
    %v2721 = vunpack.c.l.b16 %v1735
    %v2722 = vunpack.c.l.b16 %v1736
    %v2723 = vunpack.c.l.b16 %v1737
    %v2724 = vunpack.c.l.b16 %v1738
    %v2725 = vunpack.c.l.b16 %v1739
    %v2726 = vunpack.c.l.b16 %v1740
    %v2727 = vunpack.c.l.b16 %v1741
    %v2728 = vunpack.c.l.b16 %v1742
    %v2729 = vunpack.c.l.b16 %v1743
    %v2730 = vunpack.c.l.b16 %v1744
    %v2731 = vunpack.c.l.b16 %v1745
    %v2732 = vunpack.c.l.b16 %v1746
    %v2733 = vunpack.c.l.b16 %v1747
    %v2734 = vunpack.c.l.b16 %v1748
    %v2735 = vunpack.c.l.b16 %v1749
    %v2736 = vunpack.c.l.b16 %v1750
    %v2737 = vunpack.c.l.b16 %v1751
    %v2738 = vunpack.c.l.b16 %v1752
    %v2739 = vunpack.c.l.b16 %v1753
    %v2740 = vunpack.c.l.b16 %v1754
    %v2741 = vunpack.c.l.b16 %v1755
    %v2742 = vunpack.c.l.b16 %v1756
    %v2743 = vunpack.c.l.b16 %v1757
    %v2744 = vunpack.c.l.b16 %v1758
    %v2745 = vunpack.c.l.b16 %v1759
    %v2746 = vunpack.c.l.b16 %v1760
    %v2747 = vunpack.c.l.b16 %v1761
    %v2748 = vunpack.c.l.b16 %v1762
    %v2749 = vunpack.c.l.b16 %v1763
    %v2750 = vunpack.c.l.b16 %v1764
    %v2751 = vunpack.c.l.b16 %v1765
    %v2752 = vunpack.c.l.b16 %v1766
    %v2753 = vunpack.c.l.b16 %v1767
    %v2754 = vunpack.c.l.b16 %v1768
    %v2755 = vunpack.c.l.b16 %v1769
    %v2756 = vunpack.c.l.b16 %v1770
    %v2757 = vunpack.c.l.b16 %v1771
    %v2758 = vunpack.c.l.b16 %v1772
    %v2759 = vunpack.c.l.b16 %v1773
    %v2760 = vunpack.c.l.b16 %v1774
    %v2761 = vunpack.c.l.b16 %v1775
    %v2762 = vunpack.c.l.b16 %v1776
    %v2763 = vunpack.c.l.b16 %v1777
    %v2764 = vunpack.c.l.b16 %v1778
    %v2765 = vunpack.c.l.b16 %v1779
    %v2766 = vunpack.c.l.b16 %v1780
    %v2767 = vunpack.c.l.b16 %v1781
    %v2768 = vunpack.c.l.b16 %v1782
    %v2769 = vunpack.c.l.b16 %v1783
    %v2770 = vunpack.c.l.b16 %v1784
    %v2771 = vunpack.c.l.b16 %v1785
    %v2772 = vunpack.c.l.b16 %v1786
    %v2773 = vunpack.c.l.b16 %v1787
    %v2774 = vunpack.c.l.b16 %v1788
    %v2775 = vunpack.c.l.b16 %v1789
    %v2776 = vunpack.c.l.b16 %v1790
    %v2777 = vunpack.c.l.b16 %v1791
    %v2778 = vunpack.c.l.b16 %v1792
    %v2779 = vunpack.c.l.b16 %v1793
    %v2780 = vunpack.c.l.b16 %v1794
    %v2781 = vunpack.c.l.b16 %v1795
    %v2782 = vunpack.c.l.b16 %v1796
    %v2783 = vunpack.c.l.b16 %v1797
    %v2784 = vunpack.c.l.b16 %v1798
    %v2785 = vunpack.c.l.b16 %v1799
    %v2786 = vunpack.c.l.b16 %v1800
    %v2787 = vunpack.c.l.b16 %v1801
    %v2788 = vunpack.c.l.b16 %v1802
    %v2789 = vunpack.c.l.b16 %v1803
    %v2790 = vunpack.c.l.b16 %v1804
    %v2791 = vunpack.c.l.b16 %v1805
    %v2792 = vunpack.c.l.b16 %v1806
    %v2793 = vunpack.c.l.b16 %v1807
    %v2794 = vunpack.c.l.b16 %v1808
    %v2795 = vunpack.c.l.b16 %v1809
    %v2796 = vunpack.c.l.b16 %v1810
    %v2797 = vunpack.c.l.b16 %v1811
    %v2798 = vunpack.c.l.b16 %v1812
    %v2799 = vunpack.c.l.b16 %v1813
    %v2800 = vunpack.c.l.b16 %v1814
    %v2801 = vunpack.c.l.b16 %v1815
    %v2802 = vunpack.c.l.b16 %v1816
    %v2803 = vunpack.c.l.b16 %v1817
    %v2804 = vunpack.c.l.b16 %v1818
    %v2805 = vunpack.c.l.b16 %v1819
    %v2806 = vunpack.c.l.b16 %v1820
    %v2807 = vunpack.c.l.b16 %v1821
    %v2808 = vunpack.c.l.b16 %v1822
    %v2809 = vunpack.c.l.b16 %v1823
    %v2810 = vunpack.c.l.b16 %v1824
    %v2811 = vunpack.c.l.b16 %v1825
    %v2812 = vunpack.c.l.b16 %v1826
    %v2813 = vunpack.c.l.b16 %v1827
    %v2814 = vunpack.c.l.b16 %v1828
    %v2815 = vunpack.c.l.b16 %v1829
    %v2816 = vunpack.c.l.b16 %v1830
    %v2817 = vunpack.c.l.b16 %v1831
    %v2818 = vunpack.c.l.b16 %v1832
    %v2819 = vunpack.c.l.b16 %v1833
    %v2820 = vunpack.c.l.b16 %v1834
    %v2821 = vunpack.c.l.b16 %v1835
    %v2822 = vunpack.c.l.b16 %v1836
    %v2823 = vunpack.c.l.b16 %v1837
    %v2824 = vunpack.c.l.b16 %v1838
    %v2825 = vunpack.c.l.b16 %v1839
    %v2826 = vunpack.c.l.b16 %v1840
    %v2827 = vunpack.c.l.b16 %v1841
    %v2828 = vunpack.c.l.b16 %v1842
    %v2829 = vunpack.c.l.b16 %v1843
    %v2830 = vunpack.c.l.b16 %v1844
    %v2831 = vunpack.c.l.b16 %v1845
    %v2832 = vunpack.c.l.b16 %v1846
    %v2833 = vunpack.c.l.b16 %v1847
    %v2834 = vunpack.c.l.b16 %v1848
    %v2835 = vunpack.c.l.b16 %v1849
    %v2836 = vunpack.c.l.b16 %v1850
    %v2837 = vunpack.c.l.b16 %v1851
    %v2838 = vunpack.c.l.b16 %v1852
    %v2839 = vunpack.c.l.b16 %v1853
    %v2840 = vunpack.c.l.b16 %v1854
    %v2841 = vunpack.c.l.b16 %v1855
    %v2842 = vunpack.c.l.b16 %v1856
    %v2843 = vunpack.c.l.b16 %v1857
    %v2844 = vunpack.c.l.b16 %v1858
    %v2845 = vunpack.c.l.b16 %v1859
    %v2846 = vunpack.c.l.b16 %v1860
    %v2847 = vunpack.c.l.b16 %v1861
    %v2848 = vunpack.c.l.b16 %v1862
    %v2849 = vunpack.c.l.b16 %v1863
    %v2850 = vunpack.c.l.b16 %v1864
    %v2851 = vunpack.c.l.b16 %v1865
    %v2852 = vunpack.c.l.b16 %v1866
    %v2853 = vunpack.c.l.b16 %v1867
    %v2854 = vunpack.c.l.b16 %v1868
    %v2855 = vunpack.c.l.b16 %v1869
    %v2856 = vunpack.c.l.b16 %v1870
    %v2857 = vunpack.c.l.b16 %v1871
    %v2858 = vunpack.c.l.b16 %v1872
    %v2859 = vunpack.c.l.b16 %v1873
    %v2860 = vunpack.c.l.b16 %v1874
    %v2861 = vunpack.c.l.b16 %v1875
    %v2862 = vunpack.c.l.b16 %v1876
    %v2863 = vunpack.c.l.b16 %v1877
    %v2864 = vunpack.c.l.b16 %v1878
    %v2865 = vunpack.c.l.b16 %v1879
    %v2866 = vunpack.c.l.b16 %v1880
    %v2867 = vunpack.c.l.b16 %v1881
    %v2868 = vunpack.c.l.b16 %v1882
    %v2869 = vunpack.c.l.b16 %v1883
    %v2870 = vunpack.c.l.b16 %v1884
    %v2871 = vunpack.c.l.b16 %v1885
    %v2872 = vunpack.c.l.b16 %v1886
    %v2873 = vunpack.c.l.b16 %v1887
    %v2874 = vunpack.c.l.b16 %v1888
    %v2875 = vunpack.c.l.b16 %v1889
    %v2876 = vunpack.c.l.b16 %v1890
    %v2877 = vunpack.c.l.b16 %v1891
    %v2878 = vunpack.c.l.b16 %v1892
    %v2879 = vunpack.c.l.b16 %v1893
    %v2880 = vunpack.c.l.b16 %v1894
    %v2881 = vunpack.c.l.b16 %v1895
    %v2882 = vunpack.c.l.b16 %v1896
    %v2883 = vunpack.c.l.b16 %v1897
    %v2884 = vunpack.c.l.b16 %v1898
    %v2885 = vunpack.c.l.b16 %v1899
    %v2886 = vunpack.c.l.b16 %v1900
    %v2887 = vunpack.c.l.b16 %v1901
    %v2888 = vunpack.c.l.b16 %v1902
    %v2889 = vunpack.c.l.b16 %v1903
    %v2890 = vunpack.c.l.b16 %v1904
    %v2891 = vunpack.c.l.b16 %v1905
    %v2892 = vunpack.c.l.b16 %v1906
    %v2893 = vunpack.c.l.b16 %v1907
    %v2894 = vunpack.c.l.b16 %v1908
    %v2895 = vunpack.c.l.b16 %v1909
    %v2896 = vunpack.c.l.b16 %v1910
    %v2897 = vunpack.c.l.b16 %v1911
    %v2898 = vunpack.c.l.b16 %v1912
    %v2899 = vunpack.c.l.b16 %v1913
    %v2900 = vunpack.c.l.b16 %v1914
    %v2901 = vunpack.c.l.b16 %v1915
    %v2902 = vunpack.c.l.b16 %v1916
    %v2903 = vunpack.c.l.b16 %v1917
    %v2904 = vunpack.c.l.b16 %v1918
    %v2905 = vunpack.c.l.b16 %v1919
    %v2906 = vunpack.c.l.b16 %v1920
    %v2907 = vunpack.c.l.b16 %v1921
    %v2908 = vunpack.c.l.b16 %v1922
    %v2909 = vunpack.c.l.b16 %v1923
    %v2910 = vunpack.c.l.b16 %v1924
    %v2911 = vunpack.c.l.b16 %v1925
    %v2912 = vunpack.c.l.b16 %v1926
    %v2913 = vunpack.c.l.b16 %v1927
    %v2914 = vunpack.c.l.b16 %v1928
    %v2915 = vunpack.c.l.b16 %v1929
    %v2916 = vunpack.c.l.b16 %v1930
    %v2917 = vunpack.c.l.b16 %v1931
    %v2918 = vunpack.c.l.b16 %v1932
    %v2919 = vunpack.c.l.b16 %v1933
    %v2920 = vunpack.c.l.b16 %v1934
    %v2921 = vunpack.c.l.b16 %v1935
    %v2922 = vunpack.c.l.b16 %v1936
    %v2923 = vunpack.c.l.b16 %v1937
    %v2924 = vunpack.c.l.b16 %v1938
    %v2925 = vunpack.c.l.b16 %v1939
    %v2926 = vunpack.c.l.b16 %v1940
    %v2927 = vunpack.c.l.b16 %v1941
    %v2928 = vunpack.c.l.b16 %v1942
    %v2929 = vunpack.c.l.b16 %v1943
    %v2930 = vunpack.c.l.b16 %v1944
    %v2931 = vunpack.c.l.b16 %v1945
    %v2932 = vunpack.c.l.b16 %v1946
    %v2933 = vunpack.c.l.b16 %v1947
    %v2934 = vunpack.c.l.b16 %v1948
    %v2935 = vunpack.c.l.b16 %v1949
    %v2936 = vunpack.c.l.b16 %v1950
    %v2937 = vunpack.c.l.b16 %v1951
    %v2938 = vunpack.c.l.b16 %v1952
    %v2939 = vunpack.c.l.b16 %v1953
    %v2940 = vunpack.c.l.b16 %v1954
    %v2941 = vunpack.c.l.b16 %v1955
    %v2942 = vunpack.c.l.b16 %v1956
    %v2943 = vunpack.c.l.b16 %v1957
    %v2944 = vpack.c.b16 %v2657, %v2656
    %v2945 = vpack.c.b16 %v2659, %v2658
    %v2946 = vpack.c.b16 %v2661, %v2660
    %v2947 = vpack.c.b16 %v2663, %v2662
    %v2948 = vpack.c.b16 %v2665, %v2664
    %v2949 = vpack.c.b16 %v2667, %v2666
    %v2950 = vpack.c.b16 %v2669, %v2668
    %v2951 = vpack.c.b16 %v2671, %v2670
    %v2952 = vpack.c.b16 %v2673, %v2672
    %v2953 = vpack.c.b16 %v2675, %v2674
    %v2954 = vpack.c.b16 %v2677, %v2676
    %v2955 = vpack.c.b16 %v2679, %v2678
    %v2956 = vpack.c.b16 %v2681, %v2680
    %v2957 = vpack.c.b16 %v2683, %v2682
    %v2958 = vpack.c.b16 %v2685, %v2684
    %v2959 = vpack.c.b16 %v2687, %v2686
    %v2960 = vpack.c.b16 %v2689, %v2688
    %v2961 = vpack.c.b16 %v2691, %v2690
    %v2962 = vpack.c.b16 %v2693, %v2692
    %v2963 = vpack.c.b16 %v2695, %v2694
    %v2964 = vpack.c.b16 %v2697, %v2696
    %v2965 = vpack.c.b16 %v2699, %v2698
    %v2966 = vpack.c.b16 %v2701, %v2700
    %v2967 = vpack.c.b16 %v2703, %v2702
    %v2968 = vpack.c.b16 %v2705, %v2704
    %v2969 = vpack.c.b16 %v2707, %v2706
    %v2970 = vpack.c.b16 %v2709, %v2708
    %v2971 = vpack.c.b16 %v2711, %v2710
    %v2972 = vpack.c.b16 %v2713, %v2712
    %v2973 = vpack.c.b16 %v2715, %v2714
    %v2974 = vpack.c.b16 %v2717, %v2716
    %v2975 = vpack.c.b16 %v2719, %v2718
    %v2976 = vpack.c.b16 %v2721, %v2720
    %v2977 = vpack.c.b16 %v2723, %v2722
    %v2978 = vpack.c.b16 %v2725, %v2724
    %v2979 = vpack.c.b16 %v2727, %v2726
    %v2980 = vpack.c.b16 %v2729, %v2728
    %v2981 = vpack.c.b16 %v2731, %v2730
    %v2982 = vpack.c.b16 %v2733, %v2732
    %v2983 = vpack.c.b16 %v2735, %v2734
    %v2984 = vpack.c.b16 %v2737, %v2736
    %v2985 = vpack.c.b16 %v2739, %v2738
    %v2986 = vpack.c.b16 %v2741, %v2740
    %v2987 = vpack.c.b16 %v2743, %v2742
    %v2988 = vpack.c.b16 %v2745, %v2744
    %v2989 = vpack.c.b16 %v2747, %v2746
    %v2990 = vpack.c.b16 %v2749, %v2748
    %v2991 = vpack.c.b16 %v2751, %v2750
    %v2992 = vpack.c.b16 %v2753, %v2752
    %v2993 = vpack.c.b16 %v2755, %v2754
    %v2994 = vpack.c.b16 %v2757, %v2756
    %v2995 = vpack.c.b16 %v2759, %v2758
    %v2996 = vpack.c.b16 %v2761, %v2760
    %v2997 = vpack.c.b16 %v2763, %v2762
    %v2998 = vpack.c.b16 %v2765, %v2764
    %v2999 = vpack.c.b16 %v2767, %v2766
    %v3000 = vpack.c.b16 %v2769, %v2768
    %v3001 = vpack.c.b16 %v2771, %v2770
    %v3002 = vpack.c.b16 %v2773, %v2772
    %v3003 = vpack.c.b16 %v2775, %v2774
    %v3004 = vpack.c.b16 %v2777, %v2776
    %v3005 = vpack.c.b16 %v2779, %v2778
    %v3006 = vpack.c.b16 %v2781, %v2780
    %v3007 = vpack.c.b16 %v2783, %v2782
    %v3008 = vpack.c.b16 %v2785, %v2784
    %v3009 = vpack.c.b16 %v2787, %v2786
    %v3010 = vpack.c.b16 %v2789, %v2788
    %v3011 = vpack.c.b16 %v2791, %v2790
    %v3012 = vpack.c.b16 %v2793, %v2792
    %v3013 = vpack.c.b16 %v2795, %v2794
    %v3014 = vpack.c.b16 %v2797, %v2796
    %v3015 = vpack.c.b16 %v2799, %v2798
    %v3016 = vpack.c.b16 %v2801, %v2800
    %v3017 = vpack.c.b16 %v2803, %v2802
    %v3018 = vpack.c.b16 %v2805, %v2804
    %v3019 = vpack.c.b16 %v2807, %v2806
    %v3020 = vpack.c.b16 %v2809, %v2808
    %v3021 = vpack.c.b16 %v2811, %v2810
    %v3022 = vpack.c.b16 %v2813, %v2812
    %v3023 = vpack.c.b16 %v2815, %v2814
    %v3024 = vpack.c.b16 %v2817, %v2816
    %v3025 = vpack.c.b16 %v2819, %v2818
    %v3026 = vpack.c.b16 %v2821, %v2820
    %v3027 = vpack.c.b16 %v2823, %v2822
    %v3028 = vpack.c.b16 %v2825, %v2824
    %v3029 = vpack.c.b16 %v2827, %v2826
    %v3030 = vpack.c.b16 %v2829, %v2828
    %v3031 = vpack.c.b16 %v2831, %v2830
    %v3032 = vpack.c.b16 %v2833, %v2832
    %v3033 = vpack.c.b16 %v2835, %v2834
    %v3034 = vpack.c.b16 %v2837, %v2836
    %v3035 = vpack.c.b16 %v2839, %v2838
    %v3036 = vpack.c.b16 %v2841, %v2840
    %v3037 = vpack.c.b16 %v2843, %v2842
    %v3038 = vpack.c.b16 %v2845, %v2844
    %v3039 = vpack.c.b16 %v2847, %v2846
    %v3040 = vpack.c.b16 %v2849, %v2848
    %v3041 = vpack.c.b16 %v2851, %v2850
    %v3042 = vpack.c.b16 %v2853, %v2852
    %v3043 = vpack.c.b16 %v2855, %v2854
    %v3044 = vpack.c.b16 %v2857, %v2856
    %v3045 = vpack.c.b16 %v2859, %v2858
    %v3046 = vpack.c.b16 %v2861, %v2860
    %v3047 = vpack.c.b16 %v2863, %v2862
    %v3048 = vpack.c.b16 %v2865, %v2864
    %v3049 = vpack.c.b16 %v2867, %v2866
    %v3050 = vpack.c.b16 %v2869, %v2868
    %v3051 = vpack.c.b16 %v2871, %v2870
    %v3052 = vpack.c.b16 %v2873, %v2872
    %v3053 = vpack.c.b16 %v2875, %v2874
    %v3054 = vpack.c.b16 %v2877, %v2876
    %v3055 = vpack.c.b16 %v2879, %v2878
    %v3056 = vpack.c.b16 %v2881, %v2880
    %v3057 = vpack.c.b16 %v2883, %v2882
    %v3058 = vpack.c.b16 %v2885, %v2884
    %v3059 = vpack.c.b16 %v2887, %v2886
    %v3060 = vpack.c.b16 %v2889, %v2888
    %v3061 = vpack.c.b16 %v2891, %v2890
    %v3062 = vpack.c.b16 %v2893, %v2892
    %v3063 = vpack.c.b16 %v2895, %v2894
    %v3064 = vpack.c.b16 %v2897, %v2896
    %v3065 = vpack.c.b16 %v2899, %v2898
    %v3066 = vpack.c.b16 %v2901, %v2900
    %v3067 = vpack.c.b16 %v2903, %v2902
    %v3068 = vpack.c.b16 %v2905, %v2904
    %v3069 = vpack.c.b16 %v2907, %v2906
    %v3070 = vpack.c.b16 %v2909, %v2908
    %v3071 = vpack.c.b16 %v2911, %v2910
    %v3072 = vpack.c.b16 %v2913, %v2912
    %v3073 = vpack.c.b16 %v2915, %v2914
    %v3074 = vpack.c.b16 %v2917, %v2916
    %v3075 = vpack.c.b16 %v2919, %v2918
    %v3076 = vpack.c.b16 %v2921, %v2920
    %v3077 = vpack.c.b16 %v2923, %v2922
    %v3078 = vpack.c.b16 %v2925, %v2924
    %v3079 = vpack.c.b16 %v2927, %v2926
    %v3080 = vpack.c.b16 %v2929, %v2928
    %v3081 = vpack.c.b16 %v2931, %v2930
    %v3082 = vpack.c.b16 %v2933, %v2932
    %v3083 = vpack.c.b16 %v2935, %v2934
    %v3084 = vpack.c.b16 %v2937, %v2936
    %v3085 = vpack.c.b16 %v2939, %v2938
    %v3086 = vpack.c.b16 %v2941, %v2940
    %v3087 = vpack.c.b16 %v2943, %v2942
    %3232 = vmatprep.subr.bf16.mxu0 0
    %3233 = vmatpush1.bf16.msra.mxu0 %v2944
    %3234 = vmatprep.subr.bf16.mxu0 0
    %3235 = vmatpush1.bf16.msra.mxu0 %v2945
    %3236 = vmatprep.subr.bf16.mxu0 0
    %3237 = vmatpush1.bf16.msra.mxu0 %v2946
    %3238 = vmatprep.subr.bf16.mxu0 0
    %3239 = vmatpush1.bf16.msra.mxu0 %v2947
    %3240 = vmatprep.subr.bf16.mxu0 0
    %3241 = vmatpush1.bf16.msra.mxu0 %v2948
    %3242 = vmatprep.subr.bf16.mxu0 0
    %3243 = vmatpush1.bf16.msra.mxu0 %v2949
    %3244 = vmatprep.subr.bf16.mxu0 0
    %3245 = vmatpush1.bf16.msra.mxu0 %v2950
    %3246 = vmatprep.subr.bf16.mxu0 0
    %3247 = vmatpush1.bf16.msra.mxu0 %v2951
    %3248 = vmatprep.subr.bf16.mxu0 0
    %3249 = vmatpush1.bf16.msra.mxu0 %v2952
    %3250 = vmatprep.subr.bf16.mxu0 0
    %3251 = vmatpush1.bf16.msra.mxu0 %v2953
    %3252 = vmatprep.subr.bf16.mxu0 0
    %3253 = vmatpush1.bf16.msra.mxu0 %v2954
    %3254 = vmatprep.subr.bf16.mxu0 0
    %3255 = vmatpush1.bf16.msra.mxu0 %v2955
    %3256 = vmatprep.subr.bf16.mxu0 0
    %3257 = vmatpush1.bf16.msra.mxu0 %v2956
    %3258 = vmatprep.subr.bf16.mxu0 0
    %3259 = vmatpush1.bf16.msra.mxu0 %v2957
    %3260 = vmatprep.subr.bf16.mxu0 0
    %3261 = vmatpush1.bf16.msra.mxu0 %v2958
    %3262 = vmatprep.subr.bf16.mxu0 0
    %3263 = vmatpush1.bf16.msra.mxu0 %v2959
    %3264 = vmatprep.mubr.bf16.mxu0 %v2351
    %3265 = vmatmul.mubr.bf16.gmra.mrb[0].mxu0 %v2350
    %v3266 = vpop.f32.mrb[0].mxu0
    %v3267 = vadd.f32 0.0, %v3266
    %v3268 = vpop.f32.mrb[0].mxu0
    %v3269 = vpop.f32.mrb[0].mxu0
    %v3270 = vpop.f32.mrb[0].mxu0
    %3271 = vdwg.mxu0
    %3272 = vmatprep.subr.bf16.mxu0 0
    %3273 = vmatpush1.bf16.msra.mxu0 %v2960
    %3274 = vmatprep.subr.bf16.mxu0 0
    %3275 = vmatpush1.bf16.msra.mxu0 %v2961
    %3276 = vmatprep.subr.bf16.mxu0 0
    %3277 = vmatpush1.bf16.msra.mxu0 %v2962
    %3278 = vmatprep.subr.bf16.mxu0 0
    %3279 = vmatpush1.bf16.msra.mxu0 %v2963
    %3280 = vmatprep.subr.bf16.mxu0 0
    %3281 = vmatpush1.bf16.msra.mxu0 %v2964
    %3282 = vmatprep.subr.bf16.mxu0 0
    %3283 = vmatpush1.bf16.msra.mxu0 %v2965
    %3284 = vmatprep.subr.bf16.mxu0 0
    %3285 = vmatpush1.bf16.msra.mxu0 %v2966
    %3286 = vmatprep.subr.bf16.mxu0 0
    %3287 = vmatpush1.bf16.msra.mxu0 %v2967
    %3288 = vmatprep.subr.bf16.mxu0 0
    %3289 = vmatpush1.bf16.msra.mxu0 %v2968
    %3290 = vmatprep.subr.bf16.mxu0 0
    %3291 = vmatpush1.bf16.msra.mxu0 %v2969
    %3292 = vmatprep.subr.bf16.mxu0 0
    %3293 = vmatpush1.bf16.msra.mxu0 %v2970
    %3294 = vmatprep.subr.bf16.mxu0 0
    %3295 = vmatpush1.bf16.msra.mxu0 %v2971
    %3296 = vmatprep.subr.bf16.mxu0 0
    %3297 = vmatpush1.bf16.msra.mxu0 %v2972
    %3298 = vmatprep.subr.bf16.mxu0 0
    %3299 = vmatpush1.bf16.msra.mxu0 %v2973
    %3300 = vmatprep.subr.bf16.mxu0 0
    %3301 = vmatpush1.bf16.msra.mxu0 %v2974
    %3302 = vmatprep.subr.bf16.mxu0 0
    %3303 = vmatpush1.bf16.msra.mxu0 %v2975
    %3304 = vmatprep.mubr.bf16.mxu0 %v2353
    %3305 = vmatmul.mubr.bf16.gmra.mrb[0].mxu0 %v2352
    %v3306 = vpop.f32.mrb[0].mxu0
    %v3307 = vadd.f32 %v3267, %v3306
    %v3308 = vpop.f32.mrb[0].mxu0
    %v3309 = vpop.f32.mrb[0].mxu0
    %v3310 = vpop.f32.mrb[0].mxu0
    %3311 = vdwg.mxu0
    %3312 = vmatprep.subr.bf16.mxu0 0
    %3313 = vmatpush1.bf16.msra.mxu0 %v2976
    %3314 = vmatprep.subr.bf16.mxu0 0
    %3315 = vmatpush1.bf16.msra.mxu0 %v2977
    %3316 = vmatprep.subr.bf16.mxu0 0
    %3317 = vmatpush1.bf16.msra.mxu0 %v2978
    %3318 = vmatprep.subr.bf16.mxu0 0
    %3319 = vmatpush1.bf16.msra.mxu0 %v2979
    %3320 = vmatprep.subr.bf16.mxu0 0
    %3321 = vmatpush1.bf16.msra.mxu0 %v2980
    %3322 = vmatprep.subr.bf16.mxu0 0
    %3323 = vmatpush1.bf16.msra.mxu0 %v2981
    %3324 = vmatprep.subr.bf16.mxu0 0
    %3325 = vmatpush1.bf16.msra.mxu0 %v2982
    %3326 = vmatprep.subr.bf16.mxu0 0
    %3327 = vmatpush1.bf16.msra.mxu0 %v2983
    %3328 = vmatprep.subr.bf16.mxu0 0
    %3329 = vmatpush1.bf16.msra.mxu0 %v2984
    %3330 = vmatprep.subr.bf16.mxu0 0
    %3331 = vmatpush1.bf16.msra.mxu0 %v2985
    %3332 = vmatprep.subr.bf16.mxu0 0
    %3333 = vmatpush1.bf16.msra.mxu0 %v2986
    %3334 = vmatprep.subr.bf16.mxu0 0
    %3335 = vmatpush1.bf16.msra.mxu0 %v2987
    %3336 = vmatprep.subr.bf16.mxu0 0
    %3337 = vmatpush1.bf16.msra.mxu0 %v2988
    %3338 = vmatprep.subr.bf16.mxu0 0
    %3339 = vmatpush1.bf16.msra.mxu0 %v2989
    %3340 = vmatprep.subr.bf16.mxu0 0
    %3341 = vmatpush1.bf16.msra.mxu0 %v2990
    %3342 = vmatprep.subr.bf16.mxu0 0
    %3343 = vmatpush1.bf16.msra.mxu0 %v2991
    %3344 = vmatprep.mubr.bf16.mxu0 %v2355
    %3345 = vmatmul.mubr.bf16.gmra.mrb[0].mxu0 %v2354
    %v3346 = vpop.f32.mrb[0].mxu0
    %v3347 = vadd.f32 %v3307, %v3346
    %v3348 = vpop.f32.mrb[0].mxu0
    %v3349 = vpop.f32.mrb[0].mxu0
    %v3350 = vpop.f32.mrb[0].mxu0
    %3351 = vdwg.mxu0
    %3352 = vmatprep.subr.bf16.mxu0 0
    %3353 = vmatpush1.bf16.msra.mxu0 %v2992
    %3354 = vmatprep.subr.bf16.mxu0 0
    %3355 = vmatpush1.bf16.msra.mxu0 %v2993
    %3356 = vmatprep.subr.bf16.mxu0 0
    %3357 = vmatpush1.bf16.msra.mxu0 %v2994
    %3358 = vmatprep.subr.bf16.mxu0 0
    %3359 = vmatpush1.bf16.msra.mxu0 %v2995
    %3360 = vmatprep.subr.bf16.mxu0 0
    %3361 = vmatpush1.bf16.msra.mxu0 %v2996
    %3362 = vmatprep.subr.bf16.mxu0 0
    %3363 = vmatpush1.bf16.msra.mxu0 %v2997
    %3364 = vmatprep.subr.bf16.mxu0 0
    %3365 = vmatpush1.bf16.msra.mxu0 %v2998
    %3366 = vmatprep.subr.bf16.mxu0 0
    %3367 = vmatpush1.bf16.msra.mxu0 %v2999
    %3368 = vmatprep.subr.bf16.mxu0 0
    %3369 = vmatpush1.bf16.msra.mxu0 %v3000
    %3370 = vmatprep.subr.bf16.mxu0 0
    %3371 = vmatpush1.bf16.msra.mxu0 %v3001
    %3372 = vmatprep.subr.bf16.mxu0 0
    %3373 = vmatpush1.bf16.msra.mxu0 %v3002
    %3374 = vmatprep.subr.bf16.mxu0 0
    %3375 = vmatpush1.bf16.msra.mxu0 %v3003
    %3376 = vmatprep.subr.bf16.mxu0 0
    %3377 = vmatpush1.bf16.msra.mxu0 %v3004
    %3378 = vmatprep.subr.bf16.mxu0 0
    %3379 = vmatpush1.bf16.msra.mxu0 %v3005
    %3380 = vmatprep.subr.bf16.mxu0 0
    %3381 = vmatpush1.bf16.msra.mxu0 %v3006
    %3382 = vmatprep.subr.bf16.mxu0 0
    %3383 = vmatpush1.bf16.msra.mxu0 %v3007
    %3384 = vmatprep.mubr.bf16.mxu0 %v2357
    %3385 = vmatmul.mubr.bf16.gmra.mrb[0].mxu0 %v2356
    %v3386 = vpop.f32.mrb[0].mxu0
    %v3387 = vadd.f32 %v3347, %v3386
    %v3388 = vpop.f32.mrb[0].mxu0
    %v3389 = vpop.f32.mrb[0].mxu0
    %v3390 = vpop.f32.mrb[0].mxu0
    %3391 = vdwg.mxu0
    %3392 = vmatprep.subr.bf16.mxu0 0
    %3393 = vmatpush1.bf16.msra.mxu0 %v3008
    %3394 = vmatprep.subr.bf16.mxu0 0
    %3395 = vmatpush1.bf16.msra.mxu0 %v3009
    %3396 = vmatprep.subr.bf16.mxu0 0
    %3397 = vmatpush1.bf16.msra.mxu0 %v3010
    %3398 = vmatprep.subr.bf16.mxu0 0
    %3399 = vmatpush1.bf16.msra.mxu0 %v3011
    %3400 = vmatprep.subr.bf16.mxu0 0
    %3401 = vmatpush1.bf16.msra.mxu0 %v3012
    %3402 = vmatprep.subr.bf16.mxu0 0
    %3403 = vmatpush1.bf16.msra.mxu0 %v3013
    %3404 = vmatprep.subr.bf16.mxu0 0
    %3405 = vmatpush1.bf16.msra.mxu0 %v3014
    %3406 = vmatprep.subr.bf16.mxu0 0
    %3407 = vmatpush1.bf16.msra.mxu0 %v3015
    %3408 = vmatprep.subr.bf16.mxu0 0
    %3409 = vmatpush1.bf16.msra.mxu0 %v3016
    %3410 = vmatprep.subr.bf16.mxu0 0
    %3411 = vmatpush1.bf16.msra.mxu0 %v3017
    %3412 = vmatprep.subr.bf16.mxu0 0
    %3413 = vmatpush1.bf16.msra.mxu0 %v3018
    %3414 = vmatprep.subr.bf16.mxu0 0
    %3415 = vmatpush1.bf16.msra.mxu0 %v3019
    %3416 = vmatprep.subr.bf16.mxu0 0
    %3417 = vmatpush1.bf16.msra.mxu0 %v3020
    %3418 = vmatprep.subr.bf16.mxu0 0
    %3419 = vmatpush1.bf16.msra.mxu0 %v3021
    %3420 = vmatprep.subr.bf16.mxu0 0
    %3421 = vmatpush1.bf16.msra.mxu0 %v3022
    %3422 = vmatprep.subr.bf16.mxu0 0
    %3423 = vmatpush1.bf16.msra.mxu0 %v3023
    %3424 = vmatprep.mubr.bf16.mxu0 %v2359
    %3425 = vmatmul.mubr.bf16.gmra.mrb[0].mxu0 %v2358
    %v3426 = vpop.f32.mrb[0].mxu0
    %v3427 = vadd.f32 %v3387, %v3426
    %v3428 = vpop.f32.mrb[0].mxu0
    %v3429 = vpop.f32.mrb[0].mxu0
    %v3430 = vpop.f32.mrb[0].mxu0
    %3431 = vdwg.mxu0
    %3432 = vmatprep.subr.bf16.mxu0 0
    %3433 = vmatpush1.bf16.msra.mxu0 %v3024
    %3434 = vmatprep.subr.bf16.mxu0 0
    %3435 = vmatpush1.bf16.msra.mxu0 %v3025
    %3436 = vmatprep.subr.bf16.mxu0 0
    %3437 = vmatpush1.bf16.msra.mxu0 %v3026
    %3438 = vmatprep.subr.bf16.mxu0 0
    %3439 = vmatpush1.bf16.msra.mxu0 %v3027
    %3440 = vmatprep.subr.bf16.mxu0 0
    %3441 = vmatpush1.bf16.msra.mxu0 %v3028
    %3442 = vmatprep.subr.bf16.mxu0 0
    %3443 = vmatpush1.bf16.msra.mxu0 %v3029
    %3444 = vmatprep.subr.bf16.mxu0 0
    %3445 = vmatpush1.bf16.msra.mxu0 %v3030
    %3446 = vmatprep.subr.bf16.mxu0 0
    %3447 = vmatpush1.bf16.msra.mxu0 %v3031
    %3448 = vmatprep.subr.bf16.mxu0 0
    %3449 = vmatpush1.bf16.msra.mxu0 %v3032
    %3450 = vmatprep.subr.bf16.mxu0 0
    %3451 = vmatpush1.bf16.msra.mxu0 %v3033
    %3452 = vmatprep.subr.bf16.mxu0 0
    %3453 = vmatpush1.bf16.msra.mxu0 %v3034
    %3454 = vmatprep.subr.bf16.mxu0 0
    %3455 = vmatpush1.bf16.msra.mxu0 %v3035
    %3456 = vmatprep.subr.bf16.mxu0 0
    %3457 = vmatpush1.bf16.msra.mxu0 %v3036
    %3458 = vmatprep.subr.bf16.mxu0 0
    %3459 = vmatpush1.bf16.msra.mxu0 %v3037
    %3460 = vmatprep.subr.bf16.mxu0 0
    %3461 = vmatpush1.bf16.msra.mxu0 %v3038
    %3462 = vmatprep.subr.bf16.mxu0 0
    %3463 = vmatpush1.bf16.msra.mxu0 %v3039
    %3464 = vmatprep.mubr.bf16.mxu0 %v2361
    %3465 = vmatmul.mubr.bf16.gmra.mrb[0].mxu0 %v2360
    %v3466 = vpop.f32.mrb[0].mxu0
    %v3467 = vadd.f32 %v3427, %v3466
    %v3468 = vpop.f32.mrb[0].mxu0
    %v3469 = vpop.f32.mrb[0].mxu0
    %v3470 = vpop.f32.mrb[0].mxu0
    %3471 = vdwg.mxu0
    %3472 = vmatprep.subr.bf16.mxu0 0
    %3473 = vmatpush1.bf16.msra.mxu0 %v3040
    %3474 = vmatprep.subr.bf16.mxu0 0
    %3475 = vmatpush1.bf16.msra.mxu0 %v3041
    %3476 = vmatprep.subr.bf16.mxu0 0
    %3477 = vmatpush1.bf16.msra.mxu0 %v3042
    %3478 = vmatprep.subr.bf16.mxu0 0
    %3479 = vmatpush1.bf16.msra.mxu0 %v3043
    %3480 = vmatprep.subr.bf16.mxu0 0
    %3481 = vmatpush1.bf16.msra.mxu0 %v3044
    %3482 = vmatprep.subr.bf16.mxu0 0
    %3483 = vmatpush1.bf16.msra.mxu0 %v3045
    %3484 = vmatprep.subr.bf16.mxu0 0
    %3485 = vmatpush1.bf16.msra.mxu0 %v3046
    %3486 = vmatprep.subr.bf16.mxu0 0
    %3487 = vmatpush1.bf16.msra.mxu0 %v3047
    %3488 = vmatprep.subr.bf16.mxu0 0
    %3489 = vmatpush1.bf16.msra.mxu0 %v3048
    %3490 = vmatprep.subr.bf16.mxu0 0
    %3491 = vmatpush1.bf16.msra.mxu0 %v3049
    %3492 = vmatprep.subr.bf16.mxu0 0
    %3493 = vmatpush1.bf16.msra.mxu0 %v3050
    %3494 = vmatprep.subr.bf16.mxu0 0
    %3495 = vmatpush1.bf16.msra.mxu0 %v3051
    %3496 = vmatprep.subr.bf16.mxu0 0
    %3497 = vmatpush1.bf16.msra.mxu0 %v3052
    %3498 = vmatprep.subr.bf16.mxu0 0
    %3499 = vmatpush1.bf16.msra.mxu0 %v3053
    %3500 = vmatprep.subr.bf16.mxu0 0
    %3501 = vmatpush1.bf16.msra.mxu0 %v3054
    %3502 = vmatprep.subr.bf16.mxu0 0
    %3503 = vmatpush1.bf16.msra.mxu0 %v3055
    %3504 = vmatprep.mubr.bf16.mxu0 %v2363
    %3505 = vmatmul.mubr.bf16.gmra.mrb[0].mxu0 %v2362
    %v3506 = vpop.f32.mrb[0].mxu0
    %v3507 = vadd.f32 %v3467, %v3506
    %v3508 = vpop.f32.mrb[0].mxu0
    %v3509 = vpop.f32.mrb[0].mxu0
    %v3510 = vpop.f32.mrb[0].mxu0
    %3511 = vdwg.mxu0
    %3512 = vmatprep.subr.bf16.mxu0 0
    %3513 = vmatpush1.bf16.msra.mxu0 %v3056
    %3514 = vmatprep.subr.bf16.mxu0 0
    %3515 = vmatpush1.bf16.msra.mxu0 %v3057
    %3516 = vmatprep.subr.bf16.mxu0 0
    %3517 = vmatpush1.bf16.msra.mxu0 %v3058
    %3518 = vmatprep.subr.bf16.mxu0 0
    %3519 = vmatpush1.bf16.msra.mxu0 %v3059
    %3520 = vmatprep.subr.bf16.mxu0 0
    %3521 = vmatpush1.bf16.msra.mxu0 %v3060
    %3522 = vmatprep.subr.bf16.mxu0 0
    %3523 = vmatpush1.bf16.msra.mxu0 %v3061
    %3524 = vmatprep.subr.bf16.mxu0 0
    %3525 = vmatpush1.bf16.msra.mxu0 %v3062
    %3526 = vmatprep.subr.bf16.mxu0 0
    %3527 = vmatpush1.bf16.msra.mxu0 %v3063
    %3528 = vmatprep.subr.bf16.mxu0 0
    %3529 = vmatpush1.bf16.msra.mxu0 %v3064
    %3530 = vmatprep.subr.bf16.mxu0 0
    %3531 = vmatpush1.bf16.msra.mxu0 %v3065
    %3532 = vmatprep.subr.bf16.mxu0 0
    %3533 = vmatpush1.bf16.msra.mxu0 %v3066
    %3534 = vmatprep.subr.bf16.mxu0 0
    %3535 = vmatpush1.bf16.msra.mxu0 %v3067
    %3536 = vmatprep.subr.bf16.mxu0 0
    %3537 = vmatpush1.bf16.msra.mxu0 %v3068
    %3538 = vmatprep.subr.bf16.mxu0 0
    %3539 = vmatpush1.bf16.msra.mxu0 %v3069
    %3540 = vmatprep.subr.bf16.mxu0 0
    %3541 = vmatpush1.bf16.msra.mxu0 %v3070
    %3542 = vmatprep.subr.bf16.mxu0 0
    %3543 = vmatpush1.bf16.msra.mxu0 %v3071
    %3544 = vmatprep.mubr.bf16.mxu0 %v2365
    %3545 = vmatmul.mubr.bf16.gmra.mrb[0].mxu0 %v2364
    %v3546 = vpop.f32.mrb[0].mxu0
    %v3547 = vadd.f32 %v3507, %v3546
    %v3548 = vpop.f32.mrb[0].mxu0
    %v3549 = vpop.f32.mrb[0].mxu0
    %v3550 = vpop.f32.mrb[0].mxu0
    %3551 = vdwg.mxu0
    %3552 = vmatprep.subr.bf16.mxu0 0
    %3553 = vmatpush1.bf16.msra.mxu0 %v3072
    %3554 = vmatprep.subr.bf16.mxu0 0
    %3555 = vmatpush1.bf16.msra.mxu0 %v3073
    %3556 = vmatprep.subr.bf16.mxu0 0
    %3557 = vmatpush1.bf16.msra.mxu0 %v3074
    %3558 = vmatprep.subr.bf16.mxu0 0
    %3559 = vmatpush1.bf16.msra.mxu0 %v3075
    %3560 = vmatprep.subr.bf16.mxu0 0
    %3561 = vmatpush1.bf16.msra.mxu0 %v3076
    %3562 = vmatprep.subr.bf16.mxu0 0
    %3563 = vmatpush1.bf16.msra.mxu0 %v3077
    %3564 = vmatprep.subr.bf16.mxu0 0
    %3565 = vmatpush1.bf16.msra.mxu0 %v3078
    %3566 = vmatprep.subr.bf16.mxu0 0
    %3567 = vmatpush1.bf16.msra.mxu0 %v3079
    %3568 = vmatprep.subr.bf16.mxu0 0
    %3569 = vmatpush1.bf16.msra.mxu0 %v3080
    %3570 = vmatprep.subr.bf16.mxu0 0
    %3571 = vmatpush1.bf16.msra.mxu0 %v3081
    %3572 = vmatprep.subr.bf16.mxu0 0
    %3573 = vmatpush1.bf16.msra.mxu0 %v3082
    %3574 = vmatprep.subr.bf16.mxu0 0
    %3575 = vmatpush1.bf16.msra.mxu0 %v3083
    %3576 = vmatprep.subr.bf16.mxu0 0
    %3577 = vmatpush1.bf16.msra.mxu0 %v3084
    %3578 = vmatprep.subr.bf16.mxu0 0
    %3579 = vmatpush1.bf16.msra.mxu0 %v3085
    %3580 = vmatprep.subr.bf16.mxu0 0
    %3581 = vmatpush1.bf16.msra.mxu0 %v3086
    %3582 = vmatprep.subr.bf16.mxu0 0
    %3583 = vmatpush1.bf16.msra.mxu0 %v3087
    %3584 = vmatprep.mubr.bf16.mxu0 %v2367
    %3585 = vmatmul.mubr.bf16.gmra.mrb[0].mxu0 %v2366
    %v3586 = vpop.f32.mrb[0].mxu0
    %v3587 = vadd.f32 %v3547, %v3586
    %v3588 = vpop.f32.mrb[0].mxu0
    %v3589 = vpop.f32.mrb[0].mxu0
    %v3590 = vpop.f32.mrb[0].mxu0
    %3591 = vdwg.mxu0
    %v3592 = vadd.f32 %v1665, %v3587
    %v3593 = vpack.c.bf16 %v2332, %v2332
    %v3594 = vpack.c.bf16 %v2333, %v2333
    %v3595 = vpack.c.bf16 %v2334, %v2334
    %v3596 = vpack.c.bf16 %v2335, %v2335
    %v3597 = vpack.c.bf16 %v2336, %v2336
    %v3598 = vpack.c.bf16 %v2337, %v2337
    %v3599 = vpack.c.bf16 %v2338, %v2338
    %v3600 = vpack.c.bf16 %v2339, %v2339
    %v3601 = vpack.c.bf16 %v2340, %v2340
    %v3602 = vpack.c.bf16 %v2341, %v2341
    %v3603 = vpack.c.bf16 %v2342, %v2342
    %v3604 = vpack.c.bf16 %v2343, %v2343
    %v3605 = vpack.c.bf16 %v2344, %v2344
    %v3606 = vpack.c.bf16 %v2345, %v2345
    %v3607 = vpack.c.bf16 %v2346, %v2346
    %v3608 = vpack.c.bf16 %v2347, %v2347
    %v3609 = vpack.c.bf16 %v2348, %v2348
    %v3610 = vpack.c.bf16 %v2349, %v2349
    %v3899 = vunpack.c.l.b16 %v1958
    %v3900 = vunpack.c.l.b16 %v1959
    %v3901 = vunpack.c.l.b16 %v1960
    %v3902 = vunpack.c.l.b16 %v1961
    %v3903 = vunpack.c.l.b16 %v1962
    %v3904 = vunpack.c.l.b16 %v1963
    %v3905 = vunpack.c.l.b16 %v1964
    %v3906 = vunpack.c.l.b16 %v1965
    %v3907 = vunpack.c.l.b16 %v1966
    %v3908 = vunpack.c.l.b16 %v1967
    %v3909 = vunpack.c.l.b16 %v1968
    %v3910 = vunpack.c.l.b16 %v1969
    %v3911 = vunpack.c.l.b16 %v1970
    %v3912 = vunpack.c.l.b16 %v1971
    %v3913 = vunpack.c.l.b16 %v1972
    %v3914 = vunpack.c.l.b16 %v1973
    %v3915 = vunpack.c.l.b16 %v1974
    %v3916 = vunpack.c.l.b16 %v1975
    %v3917 = vunpack.c.l.b16 %v1976
    %v3918 = vunpack.c.l.b16 %v1977
    %v3919 = vunpack.c.l.b16 %v1978
    %v3920 = vunpack.c.l.b16 %v1979
    %v3921 = vunpack.c.l.b16 %v1980
    %v3922 = vunpack.c.l.b16 %v1981
    %v3923 = vunpack.c.l.b16 %v1982
    %v3924 = vunpack.c.l.b16 %v1983
    %v3925 = vunpack.c.l.b16 %v1984
    %v3926 = vunpack.c.l.b16 %v1985
    %v3927 = vunpack.c.l.b16 %v1986
    %v3928 = vunpack.c.l.b16 %v1987
    %v3929 = vunpack.c.l.b16 %v1988
    %v3930 = vunpack.c.l.b16 %v1989
    %v3931 = vunpack.c.l.b16 %v1990
    %v3932 = vunpack.c.l.b16 %v1991
    %v3933 = vunpack.c.l.b16 %v1992
    %v3934 = vunpack.c.l.b16 %v1993
    %v3935 = vunpack.c.l.b16 %v1994
    %v3936 = vunpack.c.l.b16 %v1995
    %v3937 = vunpack.c.l.b16 %v1996
    %v3938 = vunpack.c.l.b16 %v1997
    %v3939 = vunpack.c.l.b16 %v1998
    %v3940 = vunpack.c.l.b16 %v1999
    %v3941 = vunpack.c.l.b16 %v2000
    %v3942 = vunpack.c.l.b16 %v2001
    %v3943 = vunpack.c.l.b16 %v2002
    %v3944 = vunpack.c.l.b16 %v2003
    %v3945 = vunpack.c.l.b16 %v2004
    %v3946 = vunpack.c.l.b16 %v2005
    %v3947 = vunpack.c.l.b16 %v2006
    %v3948 = vunpack.c.l.b16 %v2007
    %v3949 = vunpack.c.l.b16 %v2008
    %v3950 = vunpack.c.l.b16 %v2009
    %v3951 = vunpack.c.l.b16 %v2010
    %v3952 = vunpack.c.l.b16 %v2011
    %v3953 = vunpack.c.l.b16 %v2012
    %v3954 = vunpack.c.l.b16 %v2013
    %v3955 = vunpack.c.l.b16 %v2014
    %v3956 = vunpack.c.l.b16 %v2015
    %v3957 = vunpack.c.l.b16 %v2016
    %v3958 = vunpack.c.l.b16 %v2017
    %v3959 = vunpack.c.l.b16 %v2018
    %v3960 = vunpack.c.l.b16 %v2019
    %v3961 = vunpack.c.l.b16 %v2020
    %v3962 = vunpack.c.l.b16 %v2021
    %v3963 = vunpack.c.l.b16 %v2022
    %v3964 = vunpack.c.l.b16 %v2023
    %v3965 = vunpack.c.l.b16 %v2024
    %v3966 = vunpack.c.l.b16 %v2025
    %v3967 = vunpack.c.l.b16 %v2026
    %v3968 = vunpack.c.l.b16 %v2027
    %v3969 = vunpack.c.l.b16 %v2028
    %v3970 = vunpack.c.l.b16 %v2029
    %v3971 = vunpack.c.l.b16 %v2030
    %v3972 = vunpack.c.l.b16 %v2031
    %v3973 = vunpack.c.l.b16 %v2032
    %v3974 = vunpack.c.l.b16 %v2033
    %v3975 = vunpack.c.l.b16 %v2034
    %v3976 = vunpack.c.l.b16 %v2035
    %v3977 = vunpack.c.l.b16 %v2036
    %v3978 = vunpack.c.l.b16 %v2037
    %v3979 = vunpack.c.l.b16 %v2038
    %v3980 = vunpack.c.l.b16 %v2039
    %v3981 = vunpack.c.l.b16 %v2040
    %v3982 = vunpack.c.l.b16 %v2041
    %v3983 = vunpack.c.l.b16 %v2042
    %v3984 = vunpack.c.l.b16 %v2043
    %v3985 = vunpack.c.l.b16 %v2044
    %v3986 = vunpack.c.l.b16 %v2045
    %v3987 = vunpack.c.l.b16 %v2046
    %v3988 = vunpack.c.l.b16 %v2047
    %v3989 = vunpack.c.l.b16 %v2048
    %v3990 = vunpack.c.l.b16 %v2049
    %v3991 = vunpack.c.l.b16 %v2050
    %v3992 = vunpack.c.l.b16 %v2051
    %v3993 = vunpack.c.l.b16 %v2052
    %v3994 = vunpack.c.l.b16 %v2053
    %v3995 = vunpack.c.l.b16 %v2054
    %v3996 = vunpack.c.l.b16 %v2055
    %v3997 = vunpack.c.l.b16 %v2056
    %v3998 = vunpack.c.l.b16 %v2057
    %v3999 = vunpack.c.l.b16 %v2058
    %v4000 = vunpack.c.l.b16 %v2059
    %v4001 = vunpack.c.l.b16 %v2060
    %v4002 = vunpack.c.l.b16 %v2061
    %v4003 = vunpack.c.l.b16 %v2062
    %v4004 = vunpack.c.l.b16 %v2063
    %v4005 = vunpack.c.l.b16 %v2064
    %v4006 = vunpack.c.l.b16 %v2065
    %v4007 = vunpack.c.l.b16 %v2066
    %v4008 = vunpack.c.l.b16 %v2067
    %v4009 = vunpack.c.l.b16 %v2068
    %v4010 = vunpack.c.l.b16 %v2069
    %v4011 = vunpack.c.l.b16 %v2070
    %v4012 = vunpack.c.l.b16 %v2071
    %v4013 = vunpack.c.l.b16 %v2072
    %v4014 = vunpack.c.l.b16 %v2073
    %v4015 = vunpack.c.l.b16 %v2074
    %v4016 = vunpack.c.l.b16 %v2075
    %v4017 = vunpack.c.l.b16 %v2076
    %v4018 = vunpack.c.l.b16 %v2077
    %v4019 = vunpack.c.l.b16 %v2078
    %v4020 = vunpack.c.l.b16 %v2079
    %v4021 = vunpack.c.l.b16 %v2080
    %v4022 = vunpack.c.l.b16 %v2081
    %v4023 = vunpack.c.l.b16 %v2082
    %v4024 = vunpack.c.l.b16 %v2083
    %v4025 = vunpack.c.l.b16 %v2084
    %v4026 = vunpack.c.l.b16 %v2085
    %v4027 = vunpack.c.l.b16 %v2086
    %v4028 = vunpack.c.l.b16 %v2087
    %v4029 = vunpack.c.l.b16 %v2088
    %v4030 = vunpack.c.l.b16 %v2089
    %v4031 = vunpack.c.l.b16 %v2090
    %v4032 = vunpack.c.l.b16 %v2091
    %v4033 = vunpack.c.l.b16 %v2092
    %v4034 = vunpack.c.l.b16 %v2093
    %v4035 = vunpack.c.l.b16 %v2094
    %v4036 = vunpack.c.l.b16 %v2095
    %v4037 = vunpack.c.l.b16 %v2096
    %v4038 = vunpack.c.l.b16 %v2097
    %v4039 = vunpack.c.l.b16 %v2098
    %v4040 = vunpack.c.l.b16 %v2099
    %v4041 = vunpack.c.l.b16 %v2100
    %v4042 = vunpack.c.l.b16 %v2101
    %v4043 = vunpack.c.l.b16 %v2102
    %v4044 = vunpack.c.l.b16 %v2103
    %v4045 = vunpack.c.l.b16 %v2104
    %v4046 = vunpack.c.l.b16 %v2105
    %v4047 = vunpack.c.l.b16 %v2106
    %v4048 = vunpack.c.l.b16 %v2107
    %v4049 = vunpack.c.l.b16 %v2108
    %v4050 = vunpack.c.l.b16 %v2109
    %v4051 = vunpack.c.l.b16 %v2110
    %v4052 = vunpack.c.l.b16 %v2111
    %v4053 = vunpack.c.l.b16 %v2112
    %v4054 = vunpack.c.l.b16 %v2113
    %v4055 = vunpack.c.l.b16 %v2114
    %v4056 = vunpack.c.l.b16 %v2115
    %v4057 = vunpack.c.l.b16 %v2116
    %v4058 = vunpack.c.l.b16 %v2117
    %v4059 = vunpack.c.l.b16 %v2118
    %v4060 = vunpack.c.l.b16 %v2119
    %v4061 = vunpack.c.l.b16 %v2120
    %v4062 = vunpack.c.l.b16 %v2121
    %v4063 = vunpack.c.l.b16 %v2122
    %v4064 = vunpack.c.l.b16 %v2123
    %v4065 = vunpack.c.l.b16 %v2124
    %v4066 = vunpack.c.l.b16 %v2125
    %v4067 = vunpack.c.l.b16 %v2126
    %v4068 = vunpack.c.l.b16 %v2127
    %v4069 = vunpack.c.l.b16 %v2128
    %v4070 = vunpack.c.l.b16 %v2129
    %v4071 = vunpack.c.l.b16 %v2130
    %v4072 = vunpack.c.l.b16 %v2131
    %v4073 = vunpack.c.l.b16 %v2132
    %v4074 = vunpack.c.l.b16 %v2133
    %v4075 = vunpack.c.l.b16 %v2134
    %v4076 = vunpack.c.l.b16 %v2135
    %v4077 = vunpack.c.l.b16 %v2136
    %v4078 = vunpack.c.l.b16 %v2137
    %v4079 = vunpack.c.l.b16 %v2138
    %v4080 = vunpack.c.l.b16 %v2139
    %v4081 = vunpack.c.l.b16 %v2140
    %v4082 = vunpack.c.l.b16 %v2141
    %v4083 = vunpack.c.l.b16 %v2142
    %v4084 = vunpack.c.l.b16 %v2143
    %v4085 = vunpack.c.l.b16 %v2144
    %v4086 = vunpack.c.l.b16 %v2145
    %v4087 = vunpack.c.l.b16 %v2146
    %v4088 = vunpack.c.l.b16 %v2147
    %v4089 = vunpack.c.l.b16 %v2148
    %v4090 = vunpack.c.l.b16 %v2149
    %v4091 = vunpack.c.l.b16 %v2150
    %v4092 = vunpack.c.l.b16 %v2151
    %v4093 = vunpack.c.l.b16 %v2152
    %v4094 = vunpack.c.l.b16 %v2153
    %v4095 = vunpack.c.l.b16 %v2154
    %v4096 = vunpack.c.l.b16 %v2155
    %v4097 = vunpack.c.l.b16 %v2156
    %v4098 = vunpack.c.l.b16 %v2157
    %v4099 = vunpack.c.l.b16 %v2158
    %v4100 = vunpack.c.l.b16 %v2159
    %v4101 = vunpack.c.l.b16 %v2160
    %v4102 = vunpack.c.l.b16 %v2161
    %v4103 = vunpack.c.l.b16 %v2162
    %v4104 = vunpack.c.l.b16 %v2163
    %v4105 = vunpack.c.l.b16 %v2164
    %v4106 = vunpack.c.l.b16 %v2165
    %v4107 = vunpack.c.l.b16 %v2166
    %v4108 = vunpack.c.l.b16 %v2167
    %v4109 = vunpack.c.l.b16 %v2168
    %v4110 = vunpack.c.l.b16 %v2169
    %v4111 = vunpack.c.l.b16 %v2170
    %v4112 = vunpack.c.l.b16 %v2171
    %v4113 = vunpack.c.l.b16 %v2172
    %v4114 = vunpack.c.l.b16 %v2173
    %v4115 = vunpack.c.l.b16 %v2174
    %v4116 = vunpack.c.l.b16 %v2175
    %v4117 = vunpack.c.l.b16 %v2176
    %v4118 = vunpack.c.l.b16 %v2177
    %v4119 = vunpack.c.l.b16 %v2178
    %v4120 = vunpack.c.l.b16 %v2179
    %v4121 = vunpack.c.l.b16 %v2180
    %v4122 = vunpack.c.l.b16 %v2181
    %v4123 = vunpack.c.l.b16 %v2182
    %v4124 = vunpack.c.l.b16 %v2183
    %v4125 = vunpack.c.l.b16 %v2184
    %v4126 = vunpack.c.l.b16 %v2185
    %v4127 = vunpack.c.l.b16 %v2186
    %v4128 = vunpack.c.l.b16 %v2187
    %v4129 = vunpack.c.l.b16 %v2188
    %v4130 = vunpack.c.l.b16 %v2189
    %v4131 = vunpack.c.l.b16 %v2190
    %v4132 = vunpack.c.l.b16 %v2191
    %v4133 = vunpack.c.l.b16 %v2192
    %v4134 = vunpack.c.l.b16 %v2193
    %v4135 = vunpack.c.l.b16 %v2194
    %v4136 = vunpack.c.l.b16 %v2195
    %v4137 = vunpack.c.l.b16 %v2196
    %v4138 = vunpack.c.l.b16 %v2197
    %v4139 = vunpack.c.l.b16 %v2198
    %v4140 = vunpack.c.l.b16 %v2199
    %v4141 = vunpack.c.l.b16 %v2200
    %v4142 = vunpack.c.l.b16 %v2201
    %v4143 = vunpack.c.l.b16 %v2202
    %v4144 = vunpack.c.l.b16 %v2203
    %v4145 = vunpack.c.l.b16 %v2204
    %v4146 = vunpack.c.l.b16 %v2205
    %v4147 = vunpack.c.l.b16 %v2206
    %v4148 = vunpack.c.l.b16 %v2207
    %v4149 = vunpack.c.l.b16 %v2208
    %v4150 = vunpack.c.l.b16 %v2209
    %v4151 = vunpack.c.l.b16 %v2210
    %v4152 = vunpack.c.l.b16 %v2211
    %v4153 = vunpack.c.l.b16 %v2212
    %v4154 = vunpack.c.l.b16 %v2213
    %v4155 = vunpack.c.l.b16 %v2214
    %v4156 = vunpack.c.l.b16 %v2215
    %v4157 = vunpack.c.l.b16 %v2216
    %v4158 = vunpack.c.l.b16 %v2217
    %v4159 = vunpack.c.l.b16 %v2218
    %v4160 = vunpack.c.l.b16 %v2219
    %v4161 = vunpack.c.l.b16 %v2220
    %v4162 = vunpack.c.l.b16 %v2221
    %v4163 = vunpack.c.l.b16 %v2222
    %v4164 = vunpack.c.l.b16 %v2223
    %v4165 = vunpack.c.l.b16 %v2224
    %v4166 = vunpack.c.l.b16 %v2225
    %v4167 = vunpack.c.l.b16 %v2226
    %v4168 = vunpack.c.l.b16 %v2227
    %v4169 = vunpack.c.l.b16 %v2228
    %v4170 = vunpack.c.l.b16 %v2229
    %v4171 = vunpack.c.l.b16 %v2230
    %v4172 = vunpack.c.l.b16 %v2231
    %v4173 = vunpack.c.l.b16 %v2232
    %v4174 = vunpack.c.l.b16 %v2233
    %v4175 = vunpack.c.l.b16 %v2234
    %v4176 = vunpack.c.l.b16 %v2235
    %v4177 = vunpack.c.l.b16 %v2236
    %v4178 = vunpack.c.l.b16 %v2237
    %v4179 = vunpack.c.l.b16 %v2238
    %v4180 = vunpack.c.l.b16 %v2239
    %v4181 = vunpack.c.l.b16 %v2240
    %v4182 = vunpack.c.l.b16 %v2241
    %v4183 = vunpack.c.l.b16 %v2242
    %v4184 = vunpack.c.l.b16 %v2243
    %v4185 = vunpack.c.l.b16 %v2244
    %v4186 = vunpack.c.l.b16 %v2245
    %v4187 = vpack.c.b16 %v3900, %v3899
    %v4188 = vpack.c.b16 %v3902, %v3901
    %v4189 = vpack.c.b16 %v3904, %v3903
    %v4190 = vpack.c.b16 %v3906, %v3905
    %v4191 = vpack.c.b16 %v3908, %v3907
    %v4192 = vpack.c.b16 %v3910, %v3909
    %v4193 = vpack.c.b16 %v3912, %v3911
    %v4194 = vpack.c.b16 %v3914, %v3913
    %v4195 = vpack.c.b16 %v3916, %v3915
    %v4196 = vpack.c.b16 %v3918, %v3917
    %v4197 = vpack.c.b16 %v3920, %v3919
    %v4198 = vpack.c.b16 %v3922, %v3921
    %v4199 = vpack.c.b16 %v3924, %v3923
    %v4200 = vpack.c.b16 %v3926, %v3925
    %v4201 = vpack.c.b16 %v3928, %v3927
    %v4202 = vpack.c.b16 %v3930, %v3929
    %v4203 = vpack.c.b16 %v3932, %v3931
    %v4204 = vpack.c.b16 %v3934, %v3933
    %v4205 = vpack.c.b16 %v3936, %v3935
    %v4206 = vpack.c.b16 %v3938, %v3937
    %v4207 = vpack.c.b16 %v3940, %v3939
    %v4208 = vpack.c.b16 %v3942, %v3941
    %v4209 = vpack.c.b16 %v3944, %v3943
    %v4210 = vpack.c.b16 %v3946, %v3945
    %v4211 = vpack.c.b16 %v3948, %v3947
    %v4212 = vpack.c.b16 %v3950, %v3949
    %v4213 = vpack.c.b16 %v3952, %v3951
    %v4214 = vpack.c.b16 %v3954, %v3953
    %v4215 = vpack.c.b16 %v3956, %v3955
    %v4216 = vpack.c.b16 %v3958, %v3957
    %v4217 = vpack.c.b16 %v3960, %v3959
    %v4218 = vpack.c.b16 %v3962, %v3961
    %v4219 = vpack.c.b16 %v3964, %v3963
    %v4220 = vpack.c.b16 %v3966, %v3965
    %v4221 = vpack.c.b16 %v3968, %v3967
    %v4222 = vpack.c.b16 %v3970, %v3969
    %v4223 = vpack.c.b16 %v3972, %v3971
    %v4224 = vpack.c.b16 %v3974, %v3973
    %v4225 = vpack.c.b16 %v3976, %v3975
    %v4226 = vpack.c.b16 %v3978, %v3977
    %v4227 = vpack.c.b16 %v3980, %v3979
    %v4228 = vpack.c.b16 %v3982, %v3981
    %v4229 = vpack.c.b16 %v3984, %v3983
    %v4230 = vpack.c.b16 %v3986, %v3985
    %v4231 = vpack.c.b16 %v3988, %v3987
    %v4232 = vpack.c.b16 %v3990, %v3989
    %v4233 = vpack.c.b16 %v3992, %v3991
    %v4234 = vpack.c.b16 %v3994, %v3993
    %v4235 = vpack.c.b16 %v3996, %v3995
    %v4236 = vpack.c.b16 %v3998, %v3997
    %v4237 = vpack.c.b16 %v4000, %v3999
    %v4238 = vpack.c.b16 %v4002, %v4001
    %v4239 = vpack.c.b16 %v4004, %v4003
    %v4240 = vpack.c.b16 %v4006, %v4005
    %v4241 = vpack.c.b16 %v4008, %v4007
    %v4242 = vpack.c.b16 %v4010, %v4009
    %v4243 = vpack.c.b16 %v4012, %v4011
    %v4244 = vpack.c.b16 %v4014, %v4013
    %v4245 = vpack.c.b16 %v4016, %v4015
    %v4246 = vpack.c.b16 %v4018, %v4017
    %v4247 = vpack.c.b16 %v4020, %v4019
    %v4248 = vpack.c.b16 %v4022, %v4021
    %v4249 = vpack.c.b16 %v4024, %v4023
    %v4250 = vpack.c.b16 %v4026, %v4025
    %v4251 = vpack.c.b16 %v4028, %v4027
    %v4252 = vpack.c.b16 %v4030, %v4029
    %v4253 = vpack.c.b16 %v4032, %v4031
    %v4254 = vpack.c.b16 %v4034, %v4033
    %v4255 = vpack.c.b16 %v4036, %v4035
    %v4256 = vpack.c.b16 %v4038, %v4037
    %v4257 = vpack.c.b16 %v4040, %v4039
    %v4258 = vpack.c.b16 %v4042, %v4041
    %v4259 = vpack.c.b16 %v4044, %v4043
    %v4260 = vpack.c.b16 %v4046, %v4045
    %v4261 = vpack.c.b16 %v4048, %v4047
    %v4262 = vpack.c.b16 %v4050, %v4049
    %v4263 = vpack.c.b16 %v4052, %v4051
    %v4264 = vpack.c.b16 %v4054, %v4053
    %v4265 = vpack.c.b16 %v4056, %v4055
    %v4266 = vpack.c.b16 %v4058, %v4057
    %v4267 = vpack.c.b16 %v4060, %v4059
    %v4268 = vpack.c.b16 %v4062, %v4061
    %v4269 = vpack.c.b16 %v4064, %v4063
    %v4270 = vpack.c.b16 %v4066, %v4065
    %v4271 = vpack.c.b16 %v4068, %v4067
    %v4272 = vpack.c.b16 %v4070, %v4069
    %v4273 = vpack.c.b16 %v4072, %v4071
    %v4274 = vpack.c.b16 %v4074, %v4073
    %v4275 = vpack.c.b16 %v4076, %v4075
    %v4276 = vpack.c.b16 %v4078, %v4077
    %v4277 = vpack.c.b16 %v4080, %v4079
    %v4278 = vpack.c.b16 %v4082, %v4081
    %v4279 = vpack.c.b16 %v4084, %v4083
    %v4280 = vpack.c.b16 %v4086, %v4085
    %v4281 = vpack.c.b16 %v4088, %v4087
    %v4282 = vpack.c.b16 %v4090, %v4089
    %v4283 = vpack.c.b16 %v4092, %v4091
    %v4284 = vpack.c.b16 %v4094, %v4093
    %v4285 = vpack.c.b16 %v4096, %v4095
    %v4286 = vpack.c.b16 %v4098, %v4097
    %v4287 = vpack.c.b16 %v4100, %v4099
    %v4288 = vpack.c.b16 %v4102, %v4101
    %v4289 = vpack.c.b16 %v4104, %v4103
    %v4290 = vpack.c.b16 %v4106, %v4105
    %v4291 = vpack.c.b16 %v4108, %v4107
    %v4292 = vpack.c.b16 %v4110, %v4109
    %v4293 = vpack.c.b16 %v4112, %v4111
    %v4294 = vpack.c.b16 %v4114, %v4113
    %v4295 = vpack.c.b16 %v4116, %v4115
    %v4296 = vpack.c.b16 %v4118, %v4117
    %v4297 = vpack.c.b16 %v4120, %v4119
    %v4298 = vpack.c.b16 %v4122, %v4121
    %v4299 = vpack.c.b16 %v4124, %v4123
    %v4300 = vpack.c.b16 %v4126, %v4125
    %v4301 = vpack.c.b16 %v4128, %v4127
    %v4302 = vpack.c.b16 %v4130, %v4129
    %v4303 = vpack.c.b16 %v4132, %v4131
    %v4304 = vpack.c.b16 %v4134, %v4133
    %v4305 = vpack.c.b16 %v4136, %v4135
    %v4306 = vpack.c.b16 %v4138, %v4137
    %v4307 = vpack.c.b16 %v4140, %v4139
    %v4308 = vpack.c.b16 %v4142, %v4141
    %v4309 = vpack.c.b16 %v4144, %v4143
    %v4310 = vpack.c.b16 %v4146, %v4145
    %v4311 = vpack.c.b16 %v4148, %v4147
    %v4312 = vpack.c.b16 %v4150, %v4149
    %v4313 = vpack.c.b16 %v4152, %v4151
    %v4314 = vpack.c.b16 %v4154, %v4153
    %v4315 = vpack.c.b16 %v4156, %v4155
    %v4316 = vpack.c.b16 %v4158, %v4157
    %v4317 = vpack.c.b16 %v4160, %v4159
    %v4318 = vpack.c.b16 %v4162, %v4161
    %v4319 = vpack.c.b16 %v4164, %v4163
    %v4320 = vpack.c.b16 %v4166, %v4165
    %v4321 = vpack.c.b16 %v4168, %v4167
    %v4322 = vpack.c.b16 %v4170, %v4169
    %v4323 = vpack.c.b16 %v4172, %v4171
    %v4324 = vpack.c.b16 %v4174, %v4173
    %v4325 = vpack.c.b16 %v4176, %v4175
    %v4326 = vpack.c.b16 %v4178, %v4177
    %v4327 = vpack.c.b16 %v4180, %v4179
    %v4328 = vpack.c.b16 %v4182, %v4181
    %v4329 = vpack.c.b16 %v4184, %v4183
    %v4330 = vpack.c.b16 %v4186, %v4185
    %4475 = vmatprep.subr.bf16.mxu0 0
    %4476 = vmatpush1.bf16.msra.mxu0 %v4187
    %4477 = vmatprep.subr.bf16.mxu0 0
    %4478 = vmatpush1.bf16.msra.mxu0 %v4188
    %4479 = vmatprep.subr.bf16.mxu0 0
    %4480 = vmatpush1.bf16.msra.mxu0 %v4189
    %4481 = vmatprep.subr.bf16.mxu0 0
    %4482 = vmatpush1.bf16.msra.mxu0 %v4190
    %4483 = vmatprep.subr.bf16.mxu0 0
    %4484 = vmatpush1.bf16.msra.mxu0 %v4191
    %4485 = vmatprep.subr.bf16.mxu0 0
    %4486 = vmatpush1.bf16.msra.mxu0 %v4192
    %4487 = vmatprep.subr.bf16.mxu0 0
    %4488 = vmatpush1.bf16.msra.mxu0 %v4193
    %4489 = vmatprep.subr.bf16.mxu0 0
    %4490 = vmatpush1.bf16.msra.mxu0 %v4194
    %4491 = vmatprep.subr.bf16.mxu0 0
    %4492 = vmatpush1.bf16.msra.mxu0 %v4195
    %4493 = vmatprep.subr.bf16.mxu0 0
    %4494 = vmatpush1.bf16.msra.mxu0 %v4196
    %4495 = vmatprep.subr.bf16.mxu0 0
    %4496 = vmatpush1.bf16.msra.mxu0 %v4197
    %4497 = vmatprep.subr.bf16.mxu0 0
    %4498 = vmatpush1.bf16.msra.mxu0 %v4198
    %4499 = vmatprep.subr.bf16.mxu0 0
    %4500 = vmatpush1.bf16.msra.mxu0 %v4199
    %4501 = vmatprep.subr.bf16.mxu0 0
    %4502 = vmatpush1.bf16.msra.mxu0 %v4200
    %4503 = vmatprep.subr.bf16.mxu0 0
    %4504 = vmatpush1.bf16.msra.mxu0 %v4201
    %4505 = vmatprep.subr.bf16.mxu0 0
    %4506 = vmatpush1.bf16.msra.mxu0 %v4202
    %4507 = vmatprep.mubr.bf16.mxu0 %v3594
    %4508 = vmatmul.mubr.bf16.gmra.mrb[0].mxu0 %v3593
    %v4509 = vpop.f32.mrb[0].mxu0
    %v4510 = vadd.f32 0.0, %v4509
    %v4511 = vpop.f32.mrb[0].mxu0
    %v4512 = vpop.f32.mrb[0].mxu0
    %v4513 = vpop.f32.mrb[0].mxu0
    %4514 = vdwg.mxu0
    %4515 = vmatprep.subr.bf16.mxu0 0
    %4516 = vmatpush1.bf16.msra.mxu0 %v4203
    %4517 = vmatprep.subr.bf16.mxu0 0
    %4518 = vmatpush1.bf16.msra.mxu0 %v4204
    %4519 = vmatprep.subr.bf16.mxu0 0
    %4520 = vmatpush1.bf16.msra.mxu0 %v4205
    %4521 = vmatprep.subr.bf16.mxu0 0
    %4522 = vmatpush1.bf16.msra.mxu0 %v4206
    %4523 = vmatprep.subr.bf16.mxu0 0
    %4524 = vmatpush1.bf16.msra.mxu0 %v4207
    %4525 = vmatprep.subr.bf16.mxu0 0
    %4526 = vmatpush1.bf16.msra.mxu0 %v4208
    %4527 = vmatprep.subr.bf16.mxu0 0
    %4528 = vmatpush1.bf16.msra.mxu0 %v4209
    %4529 = vmatprep.subr.bf16.mxu0 0
    %4530 = vmatpush1.bf16.msra.mxu0 %v4210
    %4531 = vmatprep.subr.bf16.mxu0 0
    %4532 = vmatpush1.bf16.msra.mxu0 %v4211
    %4533 = vmatprep.subr.bf16.mxu0 0
    %4534 = vmatpush1.bf16.msra.mxu0 %v4212
    %4535 = vmatprep.subr.bf16.mxu0 0
    %4536 = vmatpush1.bf16.msra.mxu0 %v4213
    %4537 = vmatprep.subr.bf16.mxu0 0
    %4538 = vmatpush1.bf16.msra.mxu0 %v4214
    %4539 = vmatprep.subr.bf16.mxu0 0
    %4540 = vmatpush1.bf16.msra.mxu0 %v4215
    %4541 = vmatprep.subr.bf16.mxu0 0
    %4542 = vmatpush1.bf16.msra.mxu0 %v4216
    %4543 = vmatprep.subr.bf16.mxu0 0
    %4544 = vmatpush1.bf16.msra.mxu0 %v4217
    %4545 = vmatprep.subr.bf16.mxu0 0
    %4546 = vmatpush1.bf16.msra.mxu0 %v4218
    %4547 = vmatprep.mubr.bf16.mxu0 %v3596
    %4548 = vmatmul.mubr.bf16.gmra.mrb[0].mxu0 %v3595
    %v4549 = vpop.f32.mrb[0].mxu0
    %v4550 = vadd.f32 %v4510, %v4549
    %v4551 = vpop.f32.mrb[0].mxu0
    %v4552 = vpop.f32.mrb[0].mxu0
    %v4553 = vpop.f32.mrb[0].mxu0
    %4554 = vdwg.mxu0
    %4555 = vmatprep.subr.bf16.mxu0 0
    %4556 = vmatpush1.bf16.msra.mxu0 %v4219
    %4557 = vmatprep.subr.bf16.mxu0 0
    %4558 = vmatpush1.bf16.msra.mxu0 %v4220
    %4559 = vmatprep.subr.bf16.mxu0 0
    %4560 = vmatpush1.bf16.msra.mxu0 %v4221
    %4561 = vmatprep.subr.bf16.mxu0 0
    %4562 = vmatpush1.bf16.msra.mxu0 %v4222
    %4563 = vmatprep.subr.bf16.mxu0 0
    %4564 = vmatpush1.bf16.msra.mxu0 %v4223
    %4565 = vmatprep.subr.bf16.mxu0 0
    %4566 = vmatpush1.bf16.msra.mxu0 %v4224
    %4567 = vmatprep.subr.bf16.mxu0 0
    %4568 = vmatpush1.bf16.msra.mxu0 %v4225
    %4569 = vmatprep.subr.bf16.mxu0 0
    %4570 = vmatpush1.bf16.msra.mxu0 %v4226
    %4571 = vmatprep.subr.bf16.mxu0 0
    %4572 = vmatpush1.bf16.msra.mxu0 %v4227
    %4573 = vmatprep.subr.bf16.mxu0 0
    %4574 = vmatpush1.bf16.msra.mxu0 %v4228
    %4575 = vmatprep.subr.bf16.mxu0 0
    %4576 = vmatpush1.bf16.msra.mxu0 %v4229
    %4577 = vmatprep.subr.bf16.mxu0 0
    %4578 = vmatpush1.bf16.msra.mxu0 %v4230
    %4579 = vmatprep.subr.bf16.mxu0 0
    %4580 = vmatpush1.bf16.msra.mxu0 %v4231
    %4581 = vmatprep.subr.bf16.mxu0 0
    %4582 = vmatpush1.bf16.msra.mxu0 %v4232
    %4583 = vmatprep.subr.bf16.mxu0 0
    %4584 = vmatpush1.bf16.msra.mxu0 %v4233
    %4585 = vmatprep.subr.bf16.mxu0 0
    %4586 = vmatpush1.bf16.msra.mxu0 %v4234
    %4587 = vmatprep.mubr.bf16.mxu0 %v3598
    %4588 = vmatmul.mubr.bf16.gmra.mrb[0].mxu0 %v3597
    %v4589 = vpop.f32.mrb[0].mxu0
    %v4590 = vadd.f32 %v4550, %v4589
    %v4591 = vpop.f32.mrb[0].mxu0
    %v4592 = vpop.f32.mrb[0].mxu0
    %v4593 = vpop.f32.mrb[0].mxu0
    %4594 = vdwg.mxu0
    %4595 = vmatprep.subr.bf16.mxu0 0
    %4596 = vmatpush1.bf16.msra.mxu0 %v4235
    %4597 = vmatprep.subr.bf16.mxu0 0
    %4598 = vmatpush1.bf16.msra.mxu0 %v4236
    %4599 = vmatprep.subr.bf16.mxu0 0
    %4600 = vmatpush1.bf16.msra.mxu0 %v4237
    %4601 = vmatprep.subr.bf16.mxu0 0
    %4602 = vmatpush1.bf16.msra.mxu0 %v4238
    %4603 = vmatprep.subr.bf16.mxu0 0
    %4604 = vmatpush1.bf16.msra.mxu0 %v4239
    %4605 = vmatprep.subr.bf16.mxu0 0
    %4606 = vmatpush1.bf16.msra.mxu0 %v4240
    %4607 = vmatprep.subr.bf16.mxu0 0
    %4608 = vmatpush1.bf16.msra.mxu0 %v4241
    %4609 = vmatprep.subr.bf16.mxu0 0
    %4610 = vmatpush1.bf16.msra.mxu0 %v4242
    %4611 = vmatprep.subr.bf16.mxu0 0
    %4612 = vmatpush1.bf16.msra.mxu0 %v4243
    %4613 = vmatprep.subr.bf16.mxu0 0
    %4614 = vmatpush1.bf16.msra.mxu0 %v4244
    %4615 = vmatprep.subr.bf16.mxu0 0
    %4616 = vmatpush1.bf16.msra.mxu0 %v4245
    %4617 = vmatprep.subr.bf16.mxu0 0
    %4618 = vmatpush1.bf16.msra.mxu0 %v4246
    %4619 = vmatprep.subr.bf16.mxu0 0
    %4620 = vmatpush1.bf16.msra.mxu0 %v4247
    %4621 = vmatprep.subr.bf16.mxu0 0
    %4622 = vmatpush1.bf16.msra.mxu0 %v4248
    %4623 = vmatprep.subr.bf16.mxu0 0
    %4624 = vmatpush1.bf16.msra.mxu0 %v4249
    %4625 = vmatprep.subr.bf16.mxu0 0
    %4626 = vmatpush1.bf16.msra.mxu0 %v4250
    %4627 = vmatprep.mubr.bf16.mxu0 %v3600
    %4628 = vmatmul.mubr.bf16.gmra.mrb[0].mxu0 %v3599
    %v4629 = vpop.f32.mrb[0].mxu0
    %v4630 = vadd.f32 %v4590, %v4629
    %v4631 = vpop.f32.mrb[0].mxu0
    %v4632 = vpop.f32.mrb[0].mxu0
    %v4633 = vpop.f32.mrb[0].mxu0
    %4634 = vdwg.mxu0
    %4635 = vmatprep.subr.bf16.mxu0 0
    %4636 = vmatpush1.bf16.msra.mxu0 %v4251
    %4637 = vmatprep.subr.bf16.mxu0 0
    %4638 = vmatpush1.bf16.msra.mxu0 %v4252
    %4639 = vmatprep.subr.bf16.mxu0 0
    %4640 = vmatpush1.bf16.msra.mxu0 %v4253
    %4641 = vmatprep.subr.bf16.mxu0 0
    %4642 = vmatpush1.bf16.msra.mxu0 %v4254
    %4643 = vmatprep.subr.bf16.mxu0 0
    %4644 = vmatpush1.bf16.msra.mxu0 %v4255
    %4645 = vmatprep.subr.bf16.mxu0 0
    %4646 = vmatpush1.bf16.msra.mxu0 %v4256
    %4647 = vmatprep.subr.bf16.mxu0 0
    %4648 = vmatpush1.bf16.msra.mxu0 %v4257
    %4649 = vmatprep.subr.bf16.mxu0 0
    %4650 = vmatpush1.bf16.msra.mxu0 %v4258
    %4651 = vmatprep.subr.bf16.mxu0 0
    %4652 = vmatpush1.bf16.msra.mxu0 %v4259
    %4653 = vmatprep.subr.bf16.mxu0 0
    %4654 = vmatpush1.bf16.msra.mxu0 %v4260
    %4655 = vmatprep.subr.bf16.mxu0 0
    %4656 = vmatpush1.bf16.msra.mxu0 %v4261
    %4657 = vmatprep.subr.bf16.mxu0 0
    %4658 = vmatpush1.bf16.msra.mxu0 %v4262
    %4659 = vmatprep.subr.bf16.mxu0 0
    %4660 = vmatpush1.bf16.msra.mxu0 %v4263
    %4661 = vmatprep.subr.bf16.mxu0 0
    %4662 = vmatpush1.bf16.msra.mxu0 %v4264
    %4663 = vmatprep.subr.bf16.mxu0 0
    %4664 = vmatpush1.bf16.msra.mxu0 %v4265
    %4665 = vmatprep.subr.bf16.mxu0 0
    %4666 = vmatpush1.bf16.msra.mxu0 %v4266
    %4667 = vmatprep.mubr.bf16.mxu0 %v3602
    %4668 = vmatmul.mubr.bf16.gmra.mrb[0].mxu0 %v3601
    %v4669 = vpop.f32.mrb[0].mxu0
    %v4670 = vadd.f32 %v4630, %v4669
    %v4671 = vpop.f32.mrb[0].mxu0
    %v4672 = vpop.f32.mrb[0].mxu0
    %v4673 = vpop.f32.mrb[0].mxu0
    %4674 = vdwg.mxu0
    %4675 = vmatprep.subr.bf16.mxu0 0
    %4676 = vmatpush1.bf16.msra.mxu0 %v4267
    %4677 = vmatprep.subr.bf16.mxu0 0
    %4678 = vmatpush1.bf16.msra.mxu0 %v4268
    %4679 = vmatprep.subr.bf16.mxu0 0
    %4680 = vmatpush1.bf16.msra.mxu0 %v4269
    %4681 = vmatprep.subr.bf16.mxu0 0
    %4682 = vmatpush1.bf16.msra.mxu0 %v4270
    %4683 = vmatprep.subr.bf16.mxu0 0
    %4684 = vmatpush1.bf16.msra.mxu0 %v4271
    %4685 = vmatprep.subr.bf16.mxu0 0
    %4686 = vmatpush1.bf16.msra.mxu0 %v4272
    %4687 = vmatprep.subr.bf16.mxu0 0
    %4688 = vmatpush1.bf16.msra.mxu0 %v4273
    %4689 = vmatprep.subr.bf16.mxu0 0
    %4690 = vmatpush1.bf16.msra.mxu0 %v4274
    %4691 = vmatprep.subr.bf16.mxu0 0
    %4692 = vmatpush1.bf16.msra.mxu0 %v4275
    %4693 = vmatprep.subr.bf16.mxu0 0
    %4694 = vmatpush1.bf16.msra.mxu0 %v4276
    %4695 = vmatprep.subr.bf16.mxu0 0
    %4696 = vmatpush1.bf16.msra.mxu0 %v4277
    %4697 = vmatprep.subr.bf16.mxu0 0
    %4698 = vmatpush1.bf16.msra.mxu0 %v4278
    %4699 = vmatprep.subr.bf16.mxu0 0
    %4700 = vmatpush1.bf16.msra.mxu0 %v4279
    %4701 = vmatprep.subr.bf16.mxu0 0
    %4702 = vmatpush1.bf16.msra.mxu0 %v4280
    %4703 = vmatprep.subr.bf16.mxu0 0
    %4704 = vmatpush1.bf16.msra.mxu0 %v4281
    %4705 = vmatprep.subr.bf16.mxu0 0
    %4706 = vmatpush1.bf16.msra.mxu0 %v4282
    %4707 = vmatprep.mubr.bf16.mxu0 %v3604
    %4708 = vmatmul.mubr.bf16.gmra.mrb[0].mxu0 %v3603
    %v4709 = vpop.f32.mrb[0].mxu0
    %v4710 = vadd.f32 %v4670, %v4709
    %v4711 = vpop.f32.mrb[0].mxu0
    %v4712 = vpop.f32.mrb[0].mxu0
    %v4713 = vpop.f32.mrb[0].mxu0
    %4714 = vdwg.mxu0
    %4715 = vmatprep.subr.bf16.mxu0 0
    %4716 = vmatpush1.bf16.msra.mxu0 %v4283
    %4717 = vmatprep.subr.bf16.mxu0 0
    %4718 = vmatpush1.bf16.msra.mxu0 %v4284
    %4719 = vmatprep.subr.bf16.mxu0 0
    %4720 = vmatpush1.bf16.msra.mxu0 %v4285
    %4721 = vmatprep.subr.bf16.mxu0 0
    %4722 = vmatpush1.bf16.msra.mxu0 %v4286
    %4723 = vmatprep.subr.bf16.mxu0 0
    %4724 = vmatpush1.bf16.msra.mxu0 %v4287
    %4725 = vmatprep.subr.bf16.mxu0 0
    %4726 = vmatpush1.bf16.msra.mxu0 %v4288
    %4727 = vmatprep.subr.bf16.mxu0 0
    %4728 = vmatpush1.bf16.msra.mxu0 %v4289
    %4729 = vmatprep.subr.bf16.mxu0 0
    %4730 = vmatpush1.bf16.msra.mxu0 %v4290
    %4731 = vmatprep.subr.bf16.mxu0 0
    %4732 = vmatpush1.bf16.msra.mxu0 %v4291
    %4733 = vmatprep.subr.bf16.mxu0 0
    %4734 = vmatpush1.bf16.msra.mxu0 %v4292
    %4735 = vmatprep.subr.bf16.mxu0 0
    %4736 = vmatpush1.bf16.msra.mxu0 %v4293
    %4737 = vmatprep.subr.bf16.mxu0 0
    %4738 = vmatpush1.bf16.msra.mxu0 %v4294
    %4739 = vmatprep.subr.bf16.mxu0 0
    %4740 = vmatpush1.bf16.msra.mxu0 %v4295
    %4741 = vmatprep.subr.bf16.mxu0 0
    %4742 = vmatpush1.bf16.msra.mxu0 %v4296
    %4743 = vmatprep.subr.bf16.mxu0 0
    %4744 = vmatpush1.bf16.msra.mxu0 %v4297
    %4745 = vmatprep.subr.bf16.mxu0 0
    %4746 = vmatpush1.bf16.msra.mxu0 %v4298
    %4747 = vmatprep.mubr.bf16.mxu0 %v3606
    %4748 = vmatmul.mubr.bf16.gmra.mrb[0].mxu0 %v3605
    %v4749 = vpop.f32.mrb[0].mxu0
    %v4750 = vadd.f32 %v4710, %v4749
    %v4751 = vpop.f32.mrb[0].mxu0
    %v4752 = vpop.f32.mrb[0].mxu0
    %v4753 = vpop.f32.mrb[0].mxu0
    %4754 = vdwg.mxu0
    %4755 = vmatprep.subr.bf16.mxu0 0
    %4756 = vmatpush1.bf16.msra.mxu0 %v4299
    %4757 = vmatprep.subr.bf16.mxu0 0
    %4758 = vmatpush1.bf16.msra.mxu0 %v4300
    %4759 = vmatprep.subr.bf16.mxu0 0
    %4760 = vmatpush1.bf16.msra.mxu0 %v4301
    %4761 = vmatprep.subr.bf16.mxu0 0
    %4762 = vmatpush1.bf16.msra.mxu0 %v4302
    %4763 = vmatprep.subr.bf16.mxu0 0
    %4764 = vmatpush1.bf16.msra.mxu0 %v4303
    %4765 = vmatprep.subr.bf16.mxu0 0
    %4766 = vmatpush1.bf16.msra.mxu0 %v4304
    %4767 = vmatprep.subr.bf16.mxu0 0
    %4768 = vmatpush1.bf16.msra.mxu0 %v4305
    %4769 = vmatprep.subr.bf16.mxu0 0
    %4770 = vmatpush1.bf16.msra.mxu0 %v4306
    %4771 = vmatprep.subr.bf16.mxu0 0
    %4772 = vmatpush1.bf16.msra.mxu0 %v4307
    %4773 = vmatprep.subr.bf16.mxu0 0
    %4774 = vmatpush1.bf16.msra.mxu0 %v4308
    %4775 = vmatprep.subr.bf16.mxu0 0
    %4776 = vmatpush1.bf16.msra.mxu0 %v4309
    %4777 = vmatprep.subr.bf16.mxu0 0
    %4778 = vmatpush1.bf16.msra.mxu0 %v4310
    %4779 = vmatprep.subr.bf16.mxu0 0
    %4780 = vmatpush1.bf16.msra.mxu0 %v4311
    %4781 = vmatprep.subr.bf16.mxu0 0
    %4782 = vmatpush1.bf16.msra.mxu0 %v4312
    %4783 = vmatprep.subr.bf16.mxu0 0
    %4784 = vmatpush1.bf16.msra.mxu0 %v4313
    %4785 = vmatprep.subr.bf16.mxu0 0
    %4786 = vmatpush1.bf16.msra.mxu0 %v4314
    %4787 = vmatprep.mubr.bf16.mxu0 %v3608
    %4788 = vmatmul.mubr.bf16.gmra.mrb[0].mxu0 %v3607
    %v4789 = vpop.f32.mrb[0].mxu0
    %v4790 = vadd.f32 %v4750, %v4789
    %v4791 = vpop.f32.mrb[0].mxu0
    %v4792 = vpop.f32.mrb[0].mxu0
    %v4793 = vpop.f32.mrb[0].mxu0
    %4794 = vdwg.mxu0
    %4795 = vmatprep.subr.bf16.mxu0 0
    %4796 = vmatpush1.bf16.msra.mxu0 %v4315
    %4797 = vmatprep.subr.bf16.mxu0 0
    %4798 = vmatpush1.bf16.msra.mxu0 %v4316
    %4799 = vmatprep.subr.bf16.mxu0 0
    %4800 = vmatpush1.bf16.msra.mxu0 %v4317
    %4801 = vmatprep.subr.bf16.mxu0 0
    %4802 = vmatpush1.bf16.msra.mxu0 %v4318
    %4803 = vmatprep.subr.bf16.mxu0 0
    %4804 = vmatpush1.bf16.msra.mxu0 %v4319
    %4805 = vmatprep.subr.bf16.mxu0 0
    %4806 = vmatpush1.bf16.msra.mxu0 %v4320
    %4807 = vmatprep.subr.bf16.mxu0 0
    %4808 = vmatpush1.bf16.msra.mxu0 %v4321
    %4809 = vmatprep.subr.bf16.mxu0 0
    %4810 = vmatpush1.bf16.msra.mxu0 %v4322
    %4811 = vmatprep.subr.bf16.mxu0 0
    %4812 = vmatpush1.bf16.msra.mxu0 %v4323
    %4813 = vmatprep.subr.bf16.mxu0 0
    %4814 = vmatpush1.bf16.msra.mxu0 %v4324
    %4815 = vmatprep.subr.bf16.mxu0 0
    %4816 = vmatpush1.bf16.msra.mxu0 %v4325
    %4817 = vmatprep.subr.bf16.mxu0 0
    %4818 = vmatpush1.bf16.msra.mxu0 %v4326
    %4819 = vmatprep.subr.bf16.mxu0 0
    %4820 = vmatpush1.bf16.msra.mxu0 %v4327
    %4821 = vmatprep.subr.bf16.mxu0 0
    %4822 = vmatpush1.bf16.msra.mxu0 %v4328
    %4823 = vmatprep.subr.bf16.mxu0 0
    %4824 = vmatpush1.bf16.msra.mxu0 %v4329
    %4825 = vmatprep.subr.bf16.mxu0 0
    %4826 = vmatpush1.bf16.msra.mxu0 %v4330
    %4827 = vmatprep.mubr.bf16.mxu0 %v3610
    %4828 = vmatmul.mubr.bf16.gmra.mrb[0].mxu0 %v3609
    %v4829 = vpop.f32.mrb[0].mxu0
    %v4830 = vadd.f32 %v4790, %v4829
    %v4831 = vpop.f32.mrb[0].mxu0
    %v4832 = vpop.f32.mrb[0].mxu0
    %v4833 = vpop.f32.mrb[0].mxu0
    %4834 = vdwg.mxu0
    %v4835 = vadd.f32 %v3592, %v4830
    %v4836 = vld [vmem:[%s3] sm:$0xff]
    %v4837 = vadd.f32 %v4835, %v4836
    %v4838 = vmax.f32 %v4837, 0.0
    %v4840 = vlaneseq
    %v4841 = vshrl.u32 %v4840, 7
    %v4842 = vsub.s32 0, %v4841
    %v4843 = vrot.slane %v2246, %v4842
    %v4845 = vmul.f32 %v4838, %v4843
    %4846 = vadd.xlane.f32.xlu0 %v4845
    %v4847 = vpop.xlane.xlu0 %4846
    %v4849 = vlaneseq
    %v4850 = vshrl.u32 %v4849, 7
    %v4851 = vsub.s32 0, %v4850
    %v4852 = vrot.slane %v2247, %v4851
    %v4854 = vadd.f32 %v4847, %v4852
    %vm4855 = vcmask 7168
    %4856 = vst.msk [vmem:[%s10] sm:$0xff] %vm4855, %v4854
    %v4857 = vld [vmem:[%s2] sm:$0xff]
    %v4858 = vld [vmem:[%s2 + $0x8] sm:$0xff]
    %v4859 = vld [vmem:[%s2 + $0x10] sm:$0xff]
    %v4860 = vld [vmem:[%s2 + $0x18] sm:$0xff]
    %v4861 = vld [vmem:[%s2 + $0x20] sm:$0xff]
    %v4862 = vld [vmem:[%s2 + $0x28] sm:$0xff]
    %v4863 = vld [vmem:[%s2 + $0x30] sm:$0xff]
    %v4864 = vld [vmem:[%s2 + $0x38] sm:$0xff]
    %v4865 = vld [vmem:[%s2 + $0x40] sm:$0xff]
    %v4866 = vunpack.c.l.bf16 %v4857
    %v4867 = vunpack.c.h.bf16 %v4857
    %v4868 = vunpack.c.l.bf16 %v4858
    %v4869 = vunpack.c.h.bf16 %v4858
    %v4870 = vunpack.c.l.bf16 %v4859
    %v4871 = vunpack.c.h.bf16 %v4859
    %v4872 = vunpack.c.l.bf16 %v4860
    %v4873 = vunpack.c.h.bf16 %v4860
    %v4874 = vunpack.c.l.bf16 %v4861
    %v4875 = vunpack.c.h.bf16 %v4861
    %v4876 = vunpack.c.l.bf16 %v4862
    %v4877 = vunpack.c.h.bf16 %v4862
    %v4878 = vunpack.c.l.bf16 %v4863
    %v4879 = vunpack.c.h.bf16 %v4863
    %v4880 = vunpack.c.l.bf16 %v4864
    %v4881 = vunpack.c.h.bf16 %v4864
    %v4882 = vunpack.c.l.bf16 %v4865
    %v4883 = vunpack.c.h.bf16 %v4865
    %v4884 = vmul.f32 %v4866, %v4866
    %v4885 = vmul.f32 %v4867, %v4867
    %v4886 = vmul.f32 %v4868, %v4868
    %v4887 = vmul.f32 %v4869, %v4869
    %v4888 = vmul.f32 %v4870, %v4870
    %v4889 = vmul.f32 %v4871, %v4871
    %v4890 = vmul.f32 %v4872, %v4872
    %v4891 = vmul.f32 %v4873, %v4873
    %v4892 = vmul.f32 %v4874, %v4874
    %v4893 = vmul.f32 %v4875, %v4875
    %v4894 = vmul.f32 %v4876, %v4876
    %v4895 = vmul.f32 %v4877, %v4877
    %v4896 = vmul.f32 %v4878, %v4878
    %v4897 = vmul.f32 %v4879, %v4879
    %v4898 = vmul.f32 %v4880, %v4880
    %v4899 = vmul.f32 %v4881, %v4881
    %v4900 = vmul.f32 %v4882, %v4882
    %v4901 = vmul.f32 %v4883, %v4883
    %v4902 = vadd.f32 %v4884, %v4885
    %v4903 = vadd.f32 %v4902, %v4886
    %v4904 = vadd.f32 %v4903, %v4887
    %v4905 = vadd.f32 %v4904, %v4888
    %v4906 = vadd.f32 %v4905, %v4889
    %v4907 = vadd.f32 %v4906, %v4890
    %v4908 = vadd.f32 %v4907, %v4891
    %v4909 = vadd.f32 %v4908, %v4892
    %v4910 = vadd.f32 %v4909, %v4893
    %v4911 = vadd.f32 %v4910, %v4894
    %v4912 = vadd.f32 %v4911, %v4895
    %v4913 = vadd.f32 %v4912, %v4896
    %v4914 = vadd.f32 %v4913, %v4897
    %v4915 = vadd.f32 %v4914, %v4898
    %v4916 = vadd.f32 %v4915, %v4899
    %v4917 = vadd.f32 %v4916, %v4900
    %v4918 = vadd.f32 %v4917, %v4901
    %4919 = vadd.xlane.f32.xlu0 %v4918
    %v4920 = vpop.xlane.xlu0 %4919
    %v4921 = vmax.f32 %v4920, 1e-24
    %v4922 = vrsqrt.pop %v4921
    %v4923 = vmul.f32 %v4866, %v4922
    %v4924 = vmul.f32 %v4867, %v4922
    %v4925 = vmul.f32 %v4868, %v4922
    %v4926 = vmul.f32 %v4869, %v4922
    %v4927 = vmul.f32 %v4870, %v4922
    %v4928 = vmul.f32 %v4871, %v4922
    %v4929 = vmul.f32 %v4872, %v4922
    %v4930 = vmul.f32 %v4873, %v4922
    %v4931 = vmul.f32 %v4874, %v4922
    %v4932 = vmul.f32 %v4875, %v4922
    %v4933 = vmul.f32 %v4876, %v4922
    %v4934 = vmul.f32 %v4877, %v4922
    %v4935 = vmul.f32 %v4878, %v4922
    %v4936 = vmul.f32 %v4879, %v4922
    %v4937 = vmul.f32 %v4880, %v4922
    %v4938 = vmul.f32 %v4881, %v4922
    %v4939 = vmul.f32 %v4882, %v4922
    %v4940 = vmul.f32 %v4883, %v4922
    %v4941 = vmul.f32 %v77, %v4923
    %v4942 = vmul.f32 %v78, %v4924
    %v4943 = vmul.f32 %v79, %v4925
    %v4944 = vmul.f32 %v80, %v4926
    %v4945 = vmul.f32 %v81, %v4927
    %v4946 = vmul.f32 %v82, %v4928
    %v4947 = vmul.f32 %v83, %v4929
    %v4948 = vmul.f32 %v84, %v4930
    %v4949 = vmul.f32 %v85, %v4931
    %v4950 = vmul.f32 %v86, %v4932
    %v4951 = vmul.f32 %v87, %v4933
    %v4952 = vmul.f32 %v88, %v4934
    %v4953 = vmul.f32 %v89, %v4935
    %v4954 = vmul.f32 %v90, %v4936
    %v4955 = vmul.f32 %v91, %v4937
    %v4956 = vmul.f32 %v92, %v4938
    %v4957 = vmul.f32 %v93, %v4939
    %v4958 = vmul.f32 %v94, %v4940
    %v4959 = vpack.c.bf16 %v4923, %v4923
    %v4960 = vpack.c.bf16 %v4924, %v4924
    %v4961 = vpack.c.bf16 %v4925, %v4925
    %v4962 = vpack.c.bf16 %v4926, %v4926
    %v4963 = vpack.c.bf16 %v4927, %v4927
    %v4964 = vpack.c.bf16 %v4928, %v4928
    %v4965 = vpack.c.bf16 %v4929, %v4929
    %v4966 = vpack.c.bf16 %v4930, %v4930
    %v4967 = vpack.c.bf16 %v4931, %v4931
    %v4968 = vpack.c.bf16 %v4932, %v4932
    %v4969 = vpack.c.bf16 %v4933, %v4933
    %v4970 = vpack.c.bf16 %v4934, %v4934
    %v4971 = vpack.c.bf16 %v4935, %v4935
    %v4972 = vpack.c.bf16 %v4936, %v4936
    %v4973 = vpack.c.bf16 %v4937, %v4937
    %v4974 = vpack.c.bf16 %v4938, %v4938
    %v4975 = vpack.c.bf16 %v4939, %v4939
    %v4976 = vpack.c.bf16 %v4940, %v4940
    %4977 = vmatprep.subr.bf16.mxu0 0
    %4978 = vmatpush1.bf16.msra.mxu0 %v2944
    %4979 = vmatprep.subr.bf16.mxu0 0
    %4980 = vmatpush1.bf16.msra.mxu0 %v2945
    %4981 = vmatprep.subr.bf16.mxu0 0
    %4982 = vmatpush1.bf16.msra.mxu0 %v2946
    %4983 = vmatprep.subr.bf16.mxu0 0
    %4984 = vmatpush1.bf16.msra.mxu0 %v2947
    %4985 = vmatprep.subr.bf16.mxu0 0
    %4986 = vmatpush1.bf16.msra.mxu0 %v2948
    %4987 = vmatprep.subr.bf16.mxu0 0
    %4988 = vmatpush1.bf16.msra.mxu0 %v2949
    %4989 = vmatprep.subr.bf16.mxu0 0
    %4990 = vmatpush1.bf16.msra.mxu0 %v2950
    %4991 = vmatprep.subr.bf16.mxu0 0
    %4992 = vmatpush1.bf16.msra.mxu0 %v2951
    %4993 = vmatprep.subr.bf16.mxu0 0
    %4994 = vmatpush1.bf16.msra.mxu0 %v2952
    %4995 = vmatprep.subr.bf16.mxu0 0
    %4996 = vmatpush1.bf16.msra.mxu0 %v2953
    %4997 = vmatprep.subr.bf16.mxu0 0
    %4998 = vmatpush1.bf16.msra.mxu0 %v2954
    %4999 = vmatprep.subr.bf16.mxu0 0
    %5000 = vmatpush1.bf16.msra.mxu0 %v2955
    %5001 = vmatprep.subr.bf16.mxu0 0
    %5002 = vmatpush1.bf16.msra.mxu0 %v2956
    %5003 = vmatprep.subr.bf16.mxu0 0
    %5004 = vmatpush1.bf16.msra.mxu0 %v2957
    %5005 = vmatprep.subr.bf16.mxu0 0
    %5006 = vmatpush1.bf16.msra.mxu0 %v2958
    %5007 = vmatprep.subr.bf16.mxu0 0
    %5008 = vmatpush1.bf16.msra.mxu0 %v2959
    %5009 = vmatprep.mubr.bf16.mxu0 %v4960
    %5010 = vmatmul.mubr.bf16.gmra.mrb[0].mxu0 %v4959
    %v5011 = vpop.f32.mrb[0].mxu0
    %v5012 = vadd.f32 0.0, %v5011
    %v5013 = vpop.f32.mrb[0].mxu0
    %v5014 = vpop.f32.mrb[0].mxu0
    %v5015 = vpop.f32.mrb[0].mxu0
    %5016 = vdwg.mxu0
    %5017 = vmatprep.subr.bf16.mxu0 0
    %5018 = vmatpush1.bf16.msra.mxu0 %v2960
    %5019 = vmatprep.subr.bf16.mxu0 0
    %5020 = vmatpush1.bf16.msra.mxu0 %v2961
    %5021 = vmatprep.subr.bf16.mxu0 0
    %5022 = vmatpush1.bf16.msra.mxu0 %v2962
    %5023 = vmatprep.subr.bf16.mxu0 0
    %5024 = vmatpush1.bf16.msra.mxu0 %v2963
    %5025 = vmatprep.subr.bf16.mxu0 0
    %5026 = vmatpush1.bf16.msra.mxu0 %v2964
    %5027 = vmatprep.subr.bf16.mxu0 0
    %5028 = vmatpush1.bf16.msra.mxu0 %v2965
    %5029 = vmatprep.subr.bf16.mxu0 0
    %5030 = vmatpush1.bf16.msra.mxu0 %v2966
    %5031 = vmatprep.subr.bf16.mxu0 0
    %5032 = vmatpush1.bf16.msra.mxu0 %v2967
    %5033 = vmatprep.subr.bf16.mxu0 0
    %5034 = vmatpush1.bf16.msra.mxu0 %v2968
    %5035 = vmatprep.subr.bf16.mxu0 0
    %5036 = vmatpush1.bf16.msra.mxu0 %v2969
    %5037 = vmatprep.subr.bf16.mxu0 0
    %5038 = vmatpush1.bf16.msra.mxu0 %v2970
    %5039 = vmatprep.subr.bf16.mxu0 0
    %5040 = vmatpush1.bf16.msra.mxu0 %v2971
    %5041 = vmatprep.subr.bf16.mxu0 0
    %5042 = vmatpush1.bf16.msra.mxu0 %v2972
    %5043 = vmatprep.subr.bf16.mxu0 0
    %5044 = vmatpush1.bf16.msra.mxu0 %v2973
    %5045 = vmatprep.subr.bf16.mxu0 0
    %5046 = vmatpush1.bf16.msra.mxu0 %v2974
    %5047 = vmatprep.subr.bf16.mxu0 0
    %5048 = vmatpush1.bf16.msra.mxu0 %v2975
    %5049 = vmatprep.mubr.bf16.mxu0 %v4962
    %5050 = vmatmul.mubr.bf16.gmra.mrb[0].mxu0 %v4961
    %v5051 = vpop.f32.mrb[0].mxu0
    %v5052 = vadd.f32 %v5012, %v5051
    %v5053 = vpop.f32.mrb[0].mxu0
    %v5054 = vpop.f32.mrb[0].mxu0
    %v5055 = vpop.f32.mrb[0].mxu0
    %5056 = vdwg.mxu0
    %5057 = vmatprep.subr.bf16.mxu0 0
    %5058 = vmatpush1.bf16.msra.mxu0 %v2976
    %5059 = vmatprep.subr.bf16.mxu0 0
    %5060 = vmatpush1.bf16.msra.mxu0 %v2977
    %5061 = vmatprep.subr.bf16.mxu0 0
    %5062 = vmatpush1.bf16.msra.mxu0 %v2978
    %5063 = vmatprep.subr.bf16.mxu0 0
    %5064 = vmatpush1.bf16.msra.mxu0 %v2979
    %5065 = vmatprep.subr.bf16.mxu0 0
    %5066 = vmatpush1.bf16.msra.mxu0 %v2980
    %5067 = vmatprep.subr.bf16.mxu0 0
    %5068 = vmatpush1.bf16.msra.mxu0 %v2981
    %5069 = vmatprep.subr.bf16.mxu0 0
    %5070 = vmatpush1.bf16.msra.mxu0 %v2982
    %5071 = vmatprep.subr.bf16.mxu0 0
    %5072 = vmatpush1.bf16.msra.mxu0 %v2983
    %5073 = vmatprep.subr.bf16.mxu0 0
    %5074 = vmatpush1.bf16.msra.mxu0 %v2984
    %5075 = vmatprep.subr.bf16.mxu0 0
    %5076 = vmatpush1.bf16.msra.mxu0 %v2985
    %5077 = vmatprep.subr.bf16.mxu0 0
    %5078 = vmatpush1.bf16.msra.mxu0 %v2986
    %5079 = vmatprep.subr.bf16.mxu0 0
    %5080 = vmatpush1.bf16.msra.mxu0 %v2987
    %5081 = vmatprep.subr.bf16.mxu0 0
    %5082 = vmatpush1.bf16.msra.mxu0 %v2988
    %5083 = vmatprep.subr.bf16.mxu0 0
    %5084 = vmatpush1.bf16.msra.mxu0 %v2989
    %5085 = vmatprep.subr.bf16.mxu0 0
    %5086 = vmatpush1.bf16.msra.mxu0 %v2990
    %5087 = vmatprep.subr.bf16.mxu0 0
    %5088 = vmatpush1.bf16.msra.mxu0 %v2991
    %5089 = vmatprep.mubr.bf16.mxu0 %v4964
    %5090 = vmatmul.mubr.bf16.gmra.mrb[0].mxu0 %v4963
    %v5091 = vpop.f32.mrb[0].mxu0
    %v5092 = vadd.f32 %v5052, %v5091
    %v5093 = vpop.f32.mrb[0].mxu0
    %v5094 = vpop.f32.mrb[0].mxu0
    %v5095 = vpop.f32.mrb[0].mxu0
    %5096 = vdwg.mxu0
    %5097 = vmatprep.subr.bf16.mxu0 0
    %5098 = vmatpush1.bf16.msra.mxu0 %v2992
    %5099 = vmatprep.subr.bf16.mxu0 0
    %5100 = vmatpush1.bf16.msra.mxu0 %v2993
    %5101 = vmatprep.subr.bf16.mxu0 0
    %5102 = vmatpush1.bf16.msra.mxu0 %v2994
    %5103 = vmatprep.subr.bf16.mxu0 0
    %5104 = vmatpush1.bf16.msra.mxu0 %v2995
    %5105 = vmatprep.subr.bf16.mxu0 0
    %5106 = vmatpush1.bf16.msra.mxu0 %v2996
    %5107 = vmatprep.subr.bf16.mxu0 0
    %5108 = vmatpush1.bf16.msra.mxu0 %v2997
    %5109 = vmatprep.subr.bf16.mxu0 0
    %5110 = vmatpush1.bf16.msra.mxu0 %v2998
    %5111 = vmatprep.subr.bf16.mxu0 0
    %5112 = vmatpush1.bf16.msra.mxu0 %v2999
    %5113 = vmatprep.subr.bf16.mxu0 0
    %5114 = vmatpush1.bf16.msra.mxu0 %v3000
    %5115 = vmatprep.subr.bf16.mxu0 0
    %5116 = vmatpush1.bf16.msra.mxu0 %v3001
    %5117 = vmatprep.subr.bf16.mxu0 0
    %5118 = vmatpush1.bf16.msra.mxu0 %v3002
    %5119 = vmatprep.subr.bf16.mxu0 0
    %5120 = vmatpush1.bf16.msra.mxu0 %v3003
    %5121 = vmatprep.subr.bf16.mxu0 0
    %5122 = vmatpush1.bf16.msra.mxu0 %v3004
    %5123 = vmatprep.subr.bf16.mxu0 0
    %5124 = vmatpush1.bf16.msra.mxu0 %v3005
    %5125 = vmatprep.subr.bf16.mxu0 0
    %5126 = vmatpush1.bf16.msra.mxu0 %v3006
    %5127 = vmatprep.subr.bf16.mxu0 0
    %5128 = vmatpush1.bf16.msra.mxu0 %v3007
    %5129 = vmatprep.mubr.bf16.mxu0 %v4966
    %5130 = vmatmul.mubr.bf16.gmra.mrb[0].mxu0 %v4965
    %v5131 = vpop.f32.mrb[0].mxu0
    %v5132 = vadd.f32 %v5092, %v5131
    %v5133 = vpop.f32.mrb[0].mxu0
    %v5134 = vpop.f32.mrb[0].mxu0
    %v5135 = vpop.f32.mrb[0].mxu0
    %5136 = vdwg.mxu0
    %5137 = vmatprep.subr.bf16.mxu0 0
    %5138 = vmatpush1.bf16.msra.mxu0 %v3008
    %5139 = vmatprep.subr.bf16.mxu0 0
    %5140 = vmatpush1.bf16.msra.mxu0 %v3009
    %5141 = vmatprep.subr.bf16.mxu0 0
    %5142 = vmatpush1.bf16.msra.mxu0 %v3010
    %5143 = vmatprep.subr.bf16.mxu0 0
    %5144 = vmatpush1.bf16.msra.mxu0 %v3011
    %5145 = vmatprep.subr.bf16.mxu0 0
    %5146 = vmatpush1.bf16.msra.mxu0 %v3012
    %5147 = vmatprep.subr.bf16.mxu0 0
    %5148 = vmatpush1.bf16.msra.mxu0 %v3013
    %5149 = vmatprep.subr.bf16.mxu0 0
    %5150 = vmatpush1.bf16.msra.mxu0 %v3014
    %5151 = vmatprep.subr.bf16.mxu0 0
    %5152 = vmatpush1.bf16.msra.mxu0 %v3015
    %5153 = vmatprep.subr.bf16.mxu0 0
    %5154 = vmatpush1.bf16.msra.mxu0 %v3016
    %5155 = vmatprep.subr.bf16.mxu0 0
    %5156 = vmatpush1.bf16.msra.mxu0 %v3017
    %5157 = vmatprep.subr.bf16.mxu0 0
    %5158 = vmatpush1.bf16.msra.mxu0 %v3018
    %5159 = vmatprep.subr.bf16.mxu0 0
    %5160 = vmatpush1.bf16.msra.mxu0 %v3019
    %5161 = vmatprep.subr.bf16.mxu0 0
    %5162 = vmatpush1.bf16.msra.mxu0 %v3020
    %5163 = vmatprep.subr.bf16.mxu0 0
    %5164 = vmatpush1.bf16.msra.mxu0 %v3021
    %5165 = vmatprep.subr.bf16.mxu0 0
    %5166 = vmatpush1.bf16.msra.mxu0 %v3022
    %5167 = vmatprep.subr.bf16.mxu0 0
    %5168 = vmatpush1.bf16.msra.mxu0 %v3023
    %5169 = vmatprep.mubr.bf16.mxu0 %v4968
    %5170 = vmatmul.mubr.bf16.gmra.mrb[0].mxu0 %v4967
    %v5171 = vpop.f32.mrb[0].mxu0
    %v5172 = vadd.f32 %v5132, %v5171
    %v5173 = vpop.f32.mrb[0].mxu0
    %v5174 = vpop.f32.mrb[0].mxu0
    %v5175 = vpop.f32.mrb[0].mxu0
    %5176 = vdwg.mxu0
    %5177 = vmatprep.subr.bf16.mxu0 0
    %5178 = vmatpush1.bf16.msra.mxu0 %v3024
    %5179 = vmatprep.subr.bf16.mxu0 0
    %5180 = vmatpush1.bf16.msra.mxu0 %v3025
    %5181 = vmatprep.subr.bf16.mxu0 0
    %5182 = vmatpush1.bf16.msra.mxu0 %v3026
    %5183 = vmatprep.subr.bf16.mxu0 0
    %5184 = vmatpush1.bf16.msra.mxu0 %v3027
    %5185 = vmatprep.subr.bf16.mxu0 0
    %5186 = vmatpush1.bf16.msra.mxu0 %v3028
    %5187 = vmatprep.subr.bf16.mxu0 0
    %5188 = vmatpush1.bf16.msra.mxu0 %v3029
    %5189 = vmatprep.subr.bf16.mxu0 0
    %5190 = vmatpush1.bf16.msra.mxu0 %v3030
    %5191 = vmatprep.subr.bf16.mxu0 0
    %5192 = vmatpush1.bf16.msra.mxu0 %v3031
    %5193 = vmatprep.subr.bf16.mxu0 0
    %5194 = vmatpush1.bf16.msra.mxu0 %v3032
    %5195 = vmatprep.subr.bf16.mxu0 0
    %5196 = vmatpush1.bf16.msra.mxu0 %v3033
    %5197 = vmatprep.subr.bf16.mxu0 0
    %5198 = vmatpush1.bf16.msra.mxu0 %v3034
    %5199 = vmatprep.subr.bf16.mxu0 0
    %5200 = vmatpush1.bf16.msra.mxu0 %v3035
    %5201 = vmatprep.subr.bf16.mxu0 0
    %5202 = vmatpush1.bf16.msra.mxu0 %v3036
    %5203 = vmatprep.subr.bf16.mxu0 0
    %5204 = vmatpush1.bf16.msra.mxu0 %v3037
    %5205 = vmatprep.subr.bf16.mxu0 0
    %5206 = vmatpush1.bf16.msra.mxu0 %v3038
    %5207 = vmatprep.subr.bf16.mxu0 0
    %5208 = vmatpush1.bf16.msra.mxu0 %v3039
    %5209 = vmatprep.mubr.bf16.mxu0 %v4970
    %5210 = vmatmul.mubr.bf16.gmra.mrb[0].mxu0 %v4969
    %v5211 = vpop.f32.mrb[0].mxu0
    %v5212 = vadd.f32 %v5172, %v5211
    %v5213 = vpop.f32.mrb[0].mxu0
    %v5214 = vpop.f32.mrb[0].mxu0
    %v5215 = vpop.f32.mrb[0].mxu0
    %5216 = vdwg.mxu0
    %5217 = vmatprep.subr.bf16.mxu0 0
    %5218 = vmatpush1.bf16.msra.mxu0 %v3040
    %5219 = vmatprep.subr.bf16.mxu0 0
    %5220 = vmatpush1.bf16.msra.mxu0 %v3041
    %5221 = vmatprep.subr.bf16.mxu0 0
    %5222 = vmatpush1.bf16.msra.mxu0 %v3042
    %5223 = vmatprep.subr.bf16.mxu0 0
    %5224 = vmatpush1.bf16.msra.mxu0 %v3043
    %5225 = vmatprep.subr.bf16.mxu0 0
    %5226 = vmatpush1.bf16.msra.mxu0 %v3044
    %5227 = vmatprep.subr.bf16.mxu0 0
    %5228 = vmatpush1.bf16.msra.mxu0 %v3045
    %5229 = vmatprep.subr.bf16.mxu0 0
    %5230 = vmatpush1.bf16.msra.mxu0 %v3046
    %5231 = vmatprep.subr.bf16.mxu0 0
    %5232 = vmatpush1.bf16.msra.mxu0 %v3047
    %5233 = vmatprep.subr.bf16.mxu0 0
    %5234 = vmatpush1.bf16.msra.mxu0 %v3048
    %5235 = vmatprep.subr.bf16.mxu0 0
    %5236 = vmatpush1.bf16.msra.mxu0 %v3049
    %5237 = vmatprep.subr.bf16.mxu0 0
    %5238 = vmatpush1.bf16.msra.mxu0 %v3050
    %5239 = vmatprep.subr.bf16.mxu0 0
    %5240 = vmatpush1.bf16.msra.mxu0 %v3051
    %5241 = vmatprep.subr.bf16.mxu0 0
    %5242 = vmatpush1.bf16.msra.mxu0 %v3052
    %5243 = vmatprep.subr.bf16.mxu0 0
    %5244 = vmatpush1.bf16.msra.mxu0 %v3053
    %5245 = vmatprep.subr.bf16.mxu0 0
    %5246 = vmatpush1.bf16.msra.mxu0 %v3054
    %5247 = vmatprep.subr.bf16.mxu0 0
    %5248 = vmatpush1.bf16.msra.mxu0 %v3055
    %5249 = vmatprep.mubr.bf16.mxu0 %v4972
    %5250 = vmatmul.mubr.bf16.gmra.mrb[0].mxu0 %v4971
    %v5251 = vpop.f32.mrb[0].mxu0
    %v5252 = vadd.f32 %v5212, %v5251
    %v5253 = vpop.f32.mrb[0].mxu0
    %v5254 = vpop.f32.mrb[0].mxu0
    %v5255 = vpop.f32.mrb[0].mxu0
    %5256 = vdwg.mxu0
    %5257 = vmatprep.subr.bf16.mxu0 0
    %5258 = vmatpush1.bf16.msra.mxu0 %v3056
    %5259 = vmatprep.subr.bf16.mxu0 0
    %5260 = vmatpush1.bf16.msra.mxu0 %v3057
    %5261 = vmatprep.subr.bf16.mxu0 0
    %5262 = vmatpush1.bf16.msra.mxu0 %v3058
    %5263 = vmatprep.subr.bf16.mxu0 0
    %5264 = vmatpush1.bf16.msra.mxu0 %v3059
    %5265 = vmatprep.subr.bf16.mxu0 0
    %5266 = vmatpush1.bf16.msra.mxu0 %v3060
    %5267 = vmatprep.subr.bf16.mxu0 0
    %5268 = vmatpush1.bf16.msra.mxu0 %v3061
    %5269 = vmatprep.subr.bf16.mxu0 0
    %5270 = vmatpush1.bf16.msra.mxu0 %v3062
    %5271 = vmatprep.subr.bf16.mxu0 0
    %5272 = vmatpush1.bf16.msra.mxu0 %v3063
    %5273 = vmatprep.subr.bf16.mxu0 0
    %5274 = vmatpush1.bf16.msra.mxu0 %v3064
    %5275 = vmatprep.subr.bf16.mxu0 0
    %5276 = vmatpush1.bf16.msra.mxu0 %v3065
    %5277 = vmatprep.subr.bf16.mxu0 0
    %5278 = vmatpush1.bf16.msra.mxu0 %v3066
    %5279 = vmatprep.subr.bf16.mxu0 0
    %5280 = vmatpush1.bf16.msra.mxu0 %v3067
    %5281 = vmatprep.subr.bf16.mxu0 0
    %5282 = vmatpush1.bf16.msra.mxu0 %v3068
    %5283 = vmatprep.subr.bf16.mxu0 0
    %5284 = vmatpush1.bf16.msra.mxu0 %v3069
    %5285 = vmatprep.subr.bf16.mxu0 0
    %5286 = vmatpush1.bf16.msra.mxu0 %v3070
    %5287 = vmatprep.subr.bf16.mxu0 0
    %5288 = vmatpush1.bf16.msra.mxu0 %v3071
    %5289 = vmatprep.mubr.bf16.mxu0 %v4974
    %5290 = vmatmul.mubr.bf16.gmra.mrb[0].mxu0 %v4973
    %v5291 = vpop.f32.mrb[0].mxu0
    %v5292 = vadd.f32 %v5252, %v5291
    %v5293 = vpop.f32.mrb[0].mxu0
    %v5294 = vpop.f32.mrb[0].mxu0
    %v5295 = vpop.f32.mrb[0].mxu0
    %5296 = vdwg.mxu0
    %5297 = vmatprep.subr.bf16.mxu0 0
    %5298 = vmatpush1.bf16.msra.mxu0 %v3072
    %5299 = vmatprep.subr.bf16.mxu0 0
    %5300 = vmatpush1.bf16.msra.mxu0 %v3073
    %5301 = vmatprep.subr.bf16.mxu0 0
    %5302 = vmatpush1.bf16.msra.mxu0 %v3074
    %5303 = vmatprep.subr.bf16.mxu0 0
    %5304 = vmatpush1.bf16.msra.mxu0 %v3075
    %5305 = vmatprep.subr.bf16.mxu0 0
    %5306 = vmatpush1.bf16.msra.mxu0 %v3076
    %5307 = vmatprep.subr.bf16.mxu0 0
    %5308 = vmatpush1.bf16.msra.mxu0 %v3077
    %5309 = vmatprep.subr.bf16.mxu0 0
    %5310 = vmatpush1.bf16.msra.mxu0 %v3078
    %5311 = vmatprep.subr.bf16.mxu0 0
    %5312 = vmatpush1.bf16.msra.mxu0 %v3079
    %5313 = vmatprep.subr.bf16.mxu0 0
    %5314 = vmatpush1.bf16.msra.mxu0 %v3080
    %5315 = vmatprep.subr.bf16.mxu0 0
    %5316 = vmatpush1.bf16.msra.mxu0 %v3081
    %5317 = vmatprep.subr.bf16.mxu0 0
    %5318 = vmatpush1.bf16.msra.mxu0 %v3082
    %5319 = vmatprep.subr.bf16.mxu0 0
    %5320 = vmatpush1.bf16.msra.mxu0 %v3083
    %5321 = vmatprep.subr.bf16.mxu0 0
    %5322 = vmatpush1.bf16.msra.mxu0 %v3084
    %5323 = vmatprep.subr.bf16.mxu0 0
    %5324 = vmatpush1.bf16.msra.mxu0 %v3085
    %5325 = vmatprep.subr.bf16.mxu0 0
    %5326 = vmatpush1.bf16.msra.mxu0 %v3086
    %5327 = vmatprep.subr.bf16.mxu0 0
    %5328 = vmatpush1.bf16.msra.mxu0 %v3087
    %5329 = vmatprep.mubr.bf16.mxu0 %v4976
    %5330 = vmatmul.mubr.bf16.gmra.mrb[0].mxu0 %v4975
    %v5331 = vpop.f32.mrb[0].mxu0
    %v5332 = vadd.f32 %v5292, %v5331
    %v5333 = vpop.f32.mrb[0].mxu0
    %v5334 = vpop.f32.mrb[0].mxu0
    %v5335 = vpop.f32.mrb[0].mxu0
    %5336 = vdwg.mxu0
    %v5337 = vadd.f32 %v1665, %v5332
    %v5338 = vpack.c.bf16 %v4941, %v4941
    %v5339 = vpack.c.bf16 %v4942, %v4942
    %v5340 = vpack.c.bf16 %v4943, %v4943
    %v5341 = vpack.c.bf16 %v4944, %v4944
    %v5342 = vpack.c.bf16 %v4945, %v4945
    %v5343 = vpack.c.bf16 %v4946, %v4946
    %v5344 = vpack.c.bf16 %v4947, %v4947
    %v5345 = vpack.c.bf16 %v4948, %v4948
    %v5346 = vpack.c.bf16 %v4949, %v4949
    %v5347 = vpack.c.bf16 %v4950, %v4950
    %v5348 = vpack.c.bf16 %v4951, %v4951
    %v5349 = vpack.c.bf16 %v4952, %v4952
    %v5350 = vpack.c.bf16 %v4953, %v4953
    %v5351 = vpack.c.bf16 %v4954, %v4954
    %v5352 = vpack.c.bf16 %v4955, %v4955
    %v5353 = vpack.c.bf16 %v4956, %v4956
    %v5354 = vpack.c.bf16 %v4957, %v4957
    %v5355 = vpack.c.bf16 %v4958, %v4958
    %5356 = vmatprep.subr.bf16.mxu0 0
    %5357 = vmatpush1.bf16.msra.mxu0 %v4187
    %5358 = vmatprep.subr.bf16.mxu0 0
    %5359 = vmatpush1.bf16.msra.mxu0 %v4188
    %5360 = vmatprep.subr.bf16.mxu0 0
    %5361 = vmatpush1.bf16.msra.mxu0 %v4189
    %5362 = vmatprep.subr.bf16.mxu0 0
    %5363 = vmatpush1.bf16.msra.mxu0 %v4190
    %5364 = vmatprep.subr.bf16.mxu0 0
    %5365 = vmatpush1.bf16.msra.mxu0 %v4191
    %5366 = vmatprep.subr.bf16.mxu0 0
    %5367 = vmatpush1.bf16.msra.mxu0 %v4192
    %5368 = vmatprep.subr.bf16.mxu0 0
    %5369 = vmatpush1.bf16.msra.mxu0 %v4193
    %5370 = vmatprep.subr.bf16.mxu0 0
    %5371 = vmatpush1.bf16.msra.mxu0 %v4194
    %5372 = vmatprep.subr.bf16.mxu0 0
    %5373 = vmatpush1.bf16.msra.mxu0 %v4195
    %5374 = vmatprep.subr.bf16.mxu0 0
    %5375 = vmatpush1.bf16.msra.mxu0 %v4196
    %5376 = vmatprep.subr.bf16.mxu0 0
    %5377 = vmatpush1.bf16.msra.mxu0 %v4197
    %5378 = vmatprep.subr.bf16.mxu0 0
    %5379 = vmatpush1.bf16.msra.mxu0 %v4198
    %5380 = vmatprep.subr.bf16.mxu0 0
    %5381 = vmatpush1.bf16.msra.mxu0 %v4199
    %5382 = vmatprep.subr.bf16.mxu0 0
    %5383 = vmatpush1.bf16.msra.mxu0 %v4200
    %5384 = vmatprep.subr.bf16.mxu0 0
    %5385 = vmatpush1.bf16.msra.mxu0 %v4201
    %5386 = vmatprep.subr.bf16.mxu0 0
    %5387 = vmatpush1.bf16.msra.mxu0 %v4202
    %5388 = vmatprep.mubr.bf16.mxu0 %v5339
    %5389 = vmatmul.mubr.bf16.gmra.mrb[0].mxu0 %v5338
    %v5390 = vpop.f32.mrb[0].mxu0
    %v5391 = vadd.f32 0.0, %v5390
    %v5392 = vpop.f32.mrb[0].mxu0
    %v5393 = vpop.f32.mrb[0].mxu0
    %v5394 = vpop.f32.mrb[0].mxu0
    %5395 = vdwg.mxu0
    %5396 = vmatprep.subr.bf16.mxu0 0
    %5397 = vmatpush1.bf16.msra.mxu0 %v4203
    %5398 = vmatprep.subr.bf16.mxu0 0
    %5399 = vmatpush1.bf16.msra.mxu0 %v4204
    %5400 = vmatprep.subr.bf16.mxu0 0
    %5401 = vmatpush1.bf16.msra.mxu0 %v4205
    %5402 = vmatprep.subr.bf16.mxu0 0
    %5403 = vmatpush1.bf16.msra.mxu0 %v4206
    %5404 = vmatprep.subr.bf16.mxu0 0
    %5405 = vmatpush1.bf16.msra.mxu0 %v4207
    %5406 = vmatprep.subr.bf16.mxu0 0
    %5407 = vmatpush1.bf16.msra.mxu0 %v4208
    %5408 = vmatprep.subr.bf16.mxu0 0
    %5409 = vmatpush1.bf16.msra.mxu0 %v4209
    %5410 = vmatprep.subr.bf16.mxu0 0
    %5411 = vmatpush1.bf16.msra.mxu0 %v4210
    %5412 = vmatprep.subr.bf16.mxu0 0
    %5413 = vmatpush1.bf16.msra.mxu0 %v4211
    %5414 = vmatprep.subr.bf16.mxu0 0
    %5415 = vmatpush1.bf16.msra.mxu0 %v4212
    %5416 = vmatprep.subr.bf16.mxu0 0
    %5417 = vmatpush1.bf16.msra.mxu0 %v4213
    %5418 = vmatprep.subr.bf16.mxu0 0
    %5419 = vmatpush1.bf16.msra.mxu0 %v4214
    %5420 = vmatprep.subr.bf16.mxu0 0
    %5421 = vmatpush1.bf16.msra.mxu0 %v4215
    %5422 = vmatprep.subr.bf16.mxu0 0
    %5423 = vmatpush1.bf16.msra.mxu0 %v4216
    %5424 = vmatprep.subr.bf16.mxu0 0
    %5425 = vmatpush1.bf16.msra.mxu0 %v4217
    %5426 = vmatprep.subr.bf16.mxu0 0
    %5427 = vmatpush1.bf16.msra.mxu0 %v4218
    %5428 = vmatprep.mubr.bf16.mxu0 %v5341
    %5429 = vmatmul.mubr.bf16.gmra.mrb[0].mxu0 %v5340
    %v5430 = vpop.f32.mrb[0].mxu0
    %v5431 = vadd.f32 %v5391, %v5430
    %v5432 = vpop.f32.mrb[0].mxu0
    %v5433 = vpop.f32.mrb[0].mxu0
    %v5434 = vpop.f32.mrb[0].mxu0
    %5435 = vdwg.mxu0
    %5436 = vmatprep.subr.bf16.mxu0 0
    %5437 = vmatpush1.bf16.msra.mxu0 %v4219
    %5438 = vmatprep.subr.bf16.mxu0 0
    %5439 = vmatpush1.bf16.msra.mxu0 %v4220
    %5440 = vmatprep.subr.bf16.mxu0 0
    %5441 = vmatpush1.bf16.msra.mxu0 %v4221
    %5442 = vmatprep.subr.bf16.mxu0 0
    %5443 = vmatpush1.bf16.msra.mxu0 %v4222
    %5444 = vmatprep.subr.bf16.mxu0 0
    %5445 = vmatpush1.bf16.msra.mxu0 %v4223
    %5446 = vmatprep.subr.bf16.mxu0 0
    %5447 = vmatpush1.bf16.msra.mxu0 %v4224
    %5448 = vmatprep.subr.bf16.mxu0 0
    %5449 = vmatpush1.bf16.msra.mxu0 %v4225
    %5450 = vmatprep.subr.bf16.mxu0 0
    %5451 = vmatpush1.bf16.msra.mxu0 %v4226
    %5452 = vmatprep.subr.bf16.mxu0 0
    %5453 = vmatpush1.bf16.msra.mxu0 %v4227
    %5454 = vmatprep.subr.bf16.mxu0 0
    %5455 = vmatpush1.bf16.msra.mxu0 %v4228
    %5456 = vmatprep.subr.bf16.mxu0 0
    %5457 = vmatpush1.bf16.msra.mxu0 %v4229
    %5458 = vmatprep.subr.bf16.mxu0 0
    %5459 = vmatpush1.bf16.msra.mxu0 %v4230
    %5460 = vmatprep.subr.bf16.mxu0 0
    %5461 = vmatpush1.bf16.msra.mxu0 %v4231
    %5462 = vmatprep.subr.bf16.mxu0 0
    %5463 = vmatpush1.bf16.msra.mxu0 %v4232
    %5464 = vmatprep.subr.bf16.mxu0 0
    %5465 = vmatpush1.bf16.msra.mxu0 %v4233
    %5466 = vmatprep.subr.bf16.mxu0 0
    %5467 = vmatpush1.bf16.msra.mxu0 %v4234
    %5468 = vmatprep.mubr.bf16.mxu0 %v5343
    %5469 = vmatmul.mubr.bf16.gmra.mrb[0].mxu0 %v5342
    %v5470 = vpop.f32.mrb[0].mxu0
    %v5471 = vadd.f32 %v5431, %v5470
    %v5472 = vpop.f32.mrb[0].mxu0
    %v5473 = vpop.f32.mrb[0].mxu0
    %v5474 = vpop.f32.mrb[0].mxu0
    %5475 = vdwg.mxu0
    %5476 = vmatprep.subr.bf16.mxu0 0
    %5477 = vmatpush1.bf16.msra.mxu0 %v4235
    %5478 = vmatprep.subr.bf16.mxu0 0
    %5479 = vmatpush1.bf16.msra.mxu0 %v4236
    %5480 = vmatprep.subr.bf16.mxu0 0
    %5481 = vmatpush1.bf16.msra.mxu0 %v4237
    %5482 = vmatprep.subr.bf16.mxu0 0
    %5483 = vmatpush1.bf16.msra.mxu0 %v4238
    %5484 = vmatprep.subr.bf16.mxu0 0
    %5485 = vmatpush1.bf16.msra.mxu0 %v4239
    %5486 = vmatprep.subr.bf16.mxu0 0
    %5487 = vmatpush1.bf16.msra.mxu0 %v4240
    %5488 = vmatprep.subr.bf16.mxu0 0
    %5489 = vmatpush1.bf16.msra.mxu0 %v4241
    %5490 = vmatprep.subr.bf16.mxu0 0
    %5491 = vmatpush1.bf16.msra.mxu0 %v4242
    %5492 = vmatprep.subr.bf16.mxu0 0
    %5493 = vmatpush1.bf16.msra.mxu0 %v4243
    %5494 = vmatprep.subr.bf16.mxu0 0
    %5495 = vmatpush1.bf16.msra.mxu0 %v4244
    %5496 = vmatprep.subr.bf16.mxu0 0
    %5497 = vmatpush1.bf16.msra.mxu0 %v4245
    %5498 = vmatprep.subr.bf16.mxu0 0
    %5499 = vmatpush1.bf16.msra.mxu0 %v4246
    %5500 = vmatprep.subr.bf16.mxu0 0
    %5501 = vmatpush1.bf16.msra.mxu0 %v4247
    %5502 = vmatprep.subr.bf16.mxu0 0
    %5503 = vmatpush1.bf16.msra.mxu0 %v4248
    %5504 = vmatprep.subr.bf16.mxu0 0
    %5505 = vmatpush1.bf16.msra.mxu0 %v4249
    %5506 = vmatprep.subr.bf16.mxu0 0
    %5507 = vmatpush1.bf16.msra.mxu0 %v4250
    %5508 = vmatprep.mubr.bf16.mxu0 %v5345
    %5509 = vmatmul.mubr.bf16.gmra.mrb[0].mxu0 %v5344
    %v5510 = vpop.f32.mrb[0].mxu0
    %v5511 = vadd.f32 %v5471, %v5510
    %v5512 = vpop.f32.mrb[0].mxu0
    %v5513 = vpop.f32.mrb[0].mxu0
    %v5514 = vpop.f32.mrb[0].mxu0
    %5515 = vdwg.mxu0
    %5516 = vmatprep.subr.bf16.mxu0 0
    %5517 = vmatpush1.bf16.msra.mxu0 %v4251
    %5518 = vmatprep.subr.bf16.mxu0 0
    %5519 = vmatpush1.bf16.msra.mxu0 %v4252
    %5520 = vmatprep.subr.bf16.mxu0 0
    %5521 = vmatpush1.bf16.msra.mxu0 %v4253
    %5522 = vmatprep.subr.bf16.mxu0 0
    %5523 = vmatpush1.bf16.msra.mxu0 %v4254
    %5524 = vmatprep.subr.bf16.mxu0 0
    %5525 = vmatpush1.bf16.msra.mxu0 %v4255
    %5526 = vmatprep.subr.bf16.mxu0 0
    %5527 = vmatpush1.bf16.msra.mxu0 %v4256
    %5528 = vmatprep.subr.bf16.mxu0 0
    %5529 = vmatpush1.bf16.msra.mxu0 %v4257
    %5530 = vmatprep.subr.bf16.mxu0 0
    %5531 = vmatpush1.bf16.msra.mxu0 %v4258
    %5532 = vmatprep.subr.bf16.mxu0 0
    %5533 = vmatpush1.bf16.msra.mxu0 %v4259
    %5534 = vmatprep.subr.bf16.mxu0 0
    %5535 = vmatpush1.bf16.msra.mxu0 %v4260
    %5536 = vmatprep.subr.bf16.mxu0 0
    %5537 = vmatpush1.bf16.msra.mxu0 %v4261
    %5538 = vmatprep.subr.bf16.mxu0 0
    %5539 = vmatpush1.bf16.msra.mxu0 %v4262
    %5540 = vmatprep.subr.bf16.mxu0 0
    %5541 = vmatpush1.bf16.msra.mxu0 %v4263
    %5542 = vmatprep.subr.bf16.mxu0 0
    %5543 = vmatpush1.bf16.msra.mxu0 %v4264
    %5544 = vmatprep.subr.bf16.mxu0 0
    %5545 = vmatpush1.bf16.msra.mxu0 %v4265
    %5546 = vmatprep.subr.bf16.mxu0 0
    %5547 = vmatpush1.bf16.msra.mxu0 %v4266
    %5548 = vmatprep.mubr.bf16.mxu0 %v5347
    %5549 = vmatmul.mubr.bf16.gmra.mrb[0].mxu0 %v5346
    %v5550 = vpop.f32.mrb[0].mxu0
    %v5551 = vadd.f32 %v5511, %v5550
    %v5552 = vpop.f32.mrb[0].mxu0
    %v5553 = vpop.f32.mrb[0].mxu0
    %v5554 = vpop.f32.mrb[0].mxu0
    %5555 = vdwg.mxu0
    %5556 = vmatprep.subr.bf16.mxu0 0
    %5557 = vmatpush1.bf16.msra.mxu0 %v4267
    %5558 = vmatprep.subr.bf16.mxu0 0
    %5559 = vmatpush1.bf16.msra.mxu0 %v4268
    %5560 = vmatprep.subr.bf16.mxu0 0
    %5561 = vmatpush1.bf16.msra.mxu0 %v4269
    %5562 = vmatprep.subr.bf16.mxu0 0
    %5563 = vmatpush1.bf16.msra.mxu0 %v4270
    %5564 = vmatprep.subr.bf16.mxu0 0
    %5565 = vmatpush1.bf16.msra.mxu0 %v4271
    %5566 = vmatprep.subr.bf16.mxu0 0
    %5567 = vmatpush1.bf16.msra.mxu0 %v4272
    %5568 = vmatprep.subr.bf16.mxu0 0
    %5569 = vmatpush1.bf16.msra.mxu0 %v4273
    %5570 = vmatprep.subr.bf16.mxu0 0
    %5571 = vmatpush1.bf16.msra.mxu0 %v4274
    %5572 = vmatprep.subr.bf16.mxu0 0
    %5573 = vmatpush1.bf16.msra.mxu0 %v4275
    %5574 = vmatprep.subr.bf16.mxu0 0
    %5575 = vmatpush1.bf16.msra.mxu0 %v4276
    %5576 = vmatprep.subr.bf16.mxu0 0
    %5577 = vmatpush1.bf16.msra.mxu0 %v4277
    %5578 = vmatprep.subr.bf16.mxu0 0
    %5579 = vmatpush1.bf16.msra.mxu0 %v4278
    %5580 = vmatprep.subr.bf16.mxu0 0
    %5581 = vmatpush1.bf16.msra.mxu0 %v4279
    %5582 = vmatprep.subr.bf16.mxu0 0
    %5583 = vmatpush1.bf16.msra.mxu0 %v4280
    %5584 = vmatprep.subr.bf16.mxu0 0
    %5585 = vmatpush1.bf16.msra.mxu0 %v4281
    %5586 = vmatprep.subr.bf16.mxu0 0
    %5587 = vmatpush1.bf16.msra.mxu0 %v4282
    %5588 = vmatprep.mubr.bf16.mxu0 %v5349
    %5589 = vmatmul.mubr.bf16.gmra.mrb[0].mxu0 %v5348
    %v5590 = vpop.f32.mrb[0].mxu0
    %v5591 = vadd.f32 %v5551, %v5590
    %v5592 = vpop.f32.mrb[0].mxu0
    %v5593 = vpop.f32.mrb[0].mxu0
    %v5594 = vpop.f32.mrb[0].mxu0
    %5595 = vdwg.mxu0
    %5596 = vmatprep.subr.bf16.mxu0 0
    %5597 = vmatpush1.bf16.msra.mxu0 %v4283
    %5598 = vmatprep.subr.bf16.mxu0 0
    %5599 = vmatpush1.bf16.msra.mxu0 %v4284
    %5600 = vmatprep.subr.bf16.mxu0 0
    %5601 = vmatpush1.bf16.msra.mxu0 %v4285
    %5602 = vmatprep.subr.bf16.mxu0 0
    %5603 = vmatpush1.bf16.msra.mxu0 %v4286
    %5604 = vmatprep.subr.bf16.mxu0 0
    %5605 = vmatpush1.bf16.msra.mxu0 %v4287
    %5606 = vmatprep.subr.bf16.mxu0 0
    %5607 = vmatpush1.bf16.msra.mxu0 %v4288
    %5608 = vmatprep.subr.bf16.mxu0 0
    %5609 = vmatpush1.bf16.msra.mxu0 %v4289
    %5610 = vmatprep.subr.bf16.mxu0 0
    %5611 = vmatpush1.bf16.msra.mxu0 %v4290
    %5612 = vmatprep.subr.bf16.mxu0 0
    %5613 = vmatpush1.bf16.msra.mxu0 %v4291
    %5614 = vmatprep.subr.bf16.mxu0 0
    %5615 = vmatpush1.bf16.msra.mxu0 %v4292
    %5616 = vmatprep.subr.bf16.mxu0 0
    %5617 = vmatpush1.bf16.msra.mxu0 %v4293
    %5618 = vmatprep.subr.bf16.mxu0 0
    %5619 = vmatpush1.bf16.msra.mxu0 %v4294
    %5620 = vmatprep.subr.bf16.mxu0 0
    %5621 = vmatpush1.bf16.msra.mxu0 %v4295
    %5622 = vmatprep.subr.bf16.mxu0 0
    %5623 = vmatpush1.bf16.msra.mxu0 %v4296
    %5624 = vmatprep.subr.bf16.mxu0 0
    %5625 = vmatpush1.bf16.msra.mxu0 %v4297
    %5626 = vmatprep.subr.bf16.mxu0 0
    %5627 = vmatpush1.bf16.msra.mxu0 %v4298
    %5628 = vmatprep.mubr.bf16.mxu0 %v5351
    %5629 = vmatmul.mubr.bf16.gmra.mrb[0].mxu0 %v5350
    %v5630 = vpop.f32.mrb[0].mxu0
    %v5631 = vadd.f32 %v5591, %v5630
    %v5632 = vpop.f32.mrb[0].mxu0
    %v5633 = vpop.f32.mrb[0].mxu0
    %v5634 = vpop.f32.mrb[0].mxu0
    %5635 = vdwg.mxu0
    %5636 = vmatprep.subr.bf16.mxu0 0
    %5637 = vmatpush1.bf16.msra.mxu0 %v4299
    %5638 = vmatprep.subr.bf16.mxu0 0
    %5639 = vmatpush1.bf16.msra.mxu0 %v4300
    %5640 = vmatprep.subr.bf16.mxu0 0
    %5641 = vmatpush1.bf16.msra.mxu0 %v4301
    %5642 = vmatprep.subr.bf16.mxu0 0
    %5643 = vmatpush1.bf16.msra.mxu0 %v4302
    %5644 = vmatprep.subr.bf16.mxu0 0
    %5645 = vmatpush1.bf16.msra.mxu0 %v4303
    %5646 = vmatprep.subr.bf16.mxu0 0
    %5647 = vmatpush1.bf16.msra.mxu0 %v4304
    %5648 = vmatprep.subr.bf16.mxu0 0
    %5649 = vmatpush1.bf16.msra.mxu0 %v4305
    %5650 = vmatprep.subr.bf16.mxu0 0
    %5651 = vmatpush1.bf16.msra.mxu0 %v4306
    %5652 = vmatprep.subr.bf16.mxu0 0
    %5653 = vmatpush1.bf16.msra.mxu0 %v4307
    %5654 = vmatprep.subr.bf16.mxu0 0
    %5655 = vmatpush1.bf16.msra.mxu0 %v4308
    %5656 = vmatprep.subr.bf16.mxu0 0
    %5657 = vmatpush1.bf16.msra.mxu0 %v4309
    %5658 = vmatprep.subr.bf16.mxu0 0
    %5659 = vmatpush1.bf16.msra.mxu0 %v4310
    %5660 = vmatprep.subr.bf16.mxu0 0
    %5661 = vmatpush1.bf16.msra.mxu0 %v4311
    %5662 = vmatprep.subr.bf16.mxu0 0
    %5663 = vmatpush1.bf16.msra.mxu0 %v4312
    %5664 = vmatprep.subr.bf16.mxu0 0
    %5665 = vmatpush1.bf16.msra.mxu0 %v4313
    %5666 = vmatprep.subr.bf16.mxu0 0
    %5667 = vmatpush1.bf16.msra.mxu0 %v4314
    %5668 = vmatprep.mubr.bf16.mxu0 %v5353
    %5669 = vmatmul.mubr.bf16.gmra.mrb[0].mxu0 %v5352
    %v5670 = vpop.f32.mrb[0].mxu0
    %v5671 = vadd.f32 %v5631, %v5670
    %v5672 = vpop.f32.mrb[0].mxu0
    %v5673 = vpop.f32.mrb[0].mxu0
    %v5674 = vpop.f32.mrb[0].mxu0
    %5675 = vdwg.mxu0
    %5676 = vmatprep.subr.bf16.mxu0 0
    %5677 = vmatpush1.bf16.msra.mxu0 %v4315
    %5678 = vmatprep.subr.bf16.mxu0 0
    %5679 = vmatpush1.bf16.msra.mxu0 %v4316
    %5680 = vmatprep.subr.bf16.mxu0 0
    %5681 = vmatpush1.bf16.msra.mxu0 %v4317
    %5682 = vmatprep.subr.bf16.mxu0 0
    %5683 = vmatpush1.bf16.msra.mxu0 %v4318
    %5684 = vmatprep.subr.bf16.mxu0 0
    %5685 = vmatpush1.bf16.msra.mxu0 %v4319
    %5686 = vmatprep.subr.bf16.mxu0 0
    %5687 = vmatpush1.bf16.msra.mxu0 %v4320
    %5688 = vmatprep.subr.bf16.mxu0 0
    %5689 = vmatpush1.bf16.msra.mxu0 %v4321
    %5690 = vmatprep.subr.bf16.mxu0 0
    %5691 = vmatpush1.bf16.msra.mxu0 %v4322
    %5692 = vmatprep.subr.bf16.mxu0 0
    %5693 = vmatpush1.bf16.msra.mxu0 %v4323
    %5694 = vmatprep.subr.bf16.mxu0 0
    %5695 = vmatpush1.bf16.msra.mxu0 %v4324
    %5696 = vmatprep.subr.bf16.mxu0 0
    %5697 = vmatpush1.bf16.msra.mxu0 %v4325
    %5698 = vmatprep.subr.bf16.mxu0 0
    %5699 = vmatpush1.bf16.msra.mxu0 %v4326
    %5700 = vmatprep.subr.bf16.mxu0 0
    %5701 = vmatpush1.bf16.msra.mxu0 %v4327
    %5702 = vmatprep.subr.bf16.mxu0 0
    %5703 = vmatpush1.bf16.msra.mxu0 %v4328
    %5704 = vmatprep.subr.bf16.mxu0 0
    %5705 = vmatpush1.bf16.msra.mxu0 %v4329
    %5706 = vmatprep.subr.bf16.mxu0 0
    %5707 = vmatpush1.bf16.msra.mxu0 %v4330
    %5708 = vmatprep.mubr.bf16.mxu0 %v5355
    %5709 = vmatmul.mubr.bf16.gmra.mrb[0].mxu0 %v5354
    %v5710 = vpop.f32.mrb[0].mxu0
    %v5711 = vadd.f32 %v5671, %v5710
    %v5712 = vpop.f32.mrb[0].mxu0
    %v5713 = vpop.f32.mrb[0].mxu0
    %v5714 = vpop.f32.mrb[0].mxu0
    %5715 = vdwg.mxu0
    %v5716 = vadd.f32 %v5337, %v5711
    %v5717 = vld [vmem:[%s4] sm:$0xff]
    %v5718 = vadd.f32 %v5716, %v5717
    %v5719 = vmax.f32 %v5718, 0.0
    %v5720 = vmul.f32 %v5719, %v4843
    %5721 = vadd.xlane.f32.xlu0 %v5720
    %v5722 = vpop.xlane.xlu0 %5721
    %v5723 = vadd.f32 %v5722, %v4852
    %5724 = vst.msk [vmem:[%s11] sm:$0xff] %vm4855, %v5723
    // Predicated region
    $region50: #{score_model_forward.1} parent=1 // pred_check
      _
    $region51: #{score_model_forward.1} parent=1 // pred_check_branch
      %5726 = sbr.rel (0) target = $region53
    $region52: #{score_model_forward.1} parent=1 // pred_region
      _
    $region53: #{score_model_forward.1} parent=1 // pred_fallthru
      _
    // Predicated region
    $region54: #{score_model_forward.1} parent=1 // pred_check
      _
    $region55: #{score_model_forward.1} parent=1 // pred_check_branch
      %5728 = sbr.rel (0) target = $region57
    $region56: #{score_model_forward.1} parent=1 // pred_region
      _
    $region57: #{score_model_forward.1} parent=1 // pred_fallthru
      _
    // Predicated region
    $region58: #{score_model_forward.1} parent=1 // pred_check
      _
    $region59: #{score_model_forward.1} parent=1 // pred_check_branch
      %5730 = sbr.rel (0) target = $region61
    $region60: #{score_model_forward.1} parent=1 // pred_region
      _
    $region61: #{score_model_forward.1} parent=1 // pred_fallthru
      _
    // Predicated region
    $region62: #{score_model_forward.1} parent=1 // pred_check
      _
    $region63: #{score_model_forward.1} parent=1 // pred_check_branch
      %5732 = sbr.rel (0) target = $region65
    $region64: #{score_model_forward.1} parent=1 // pred_region
      _
    $region65: #{score_model_forward.1} parent=1 // pred_fallthru
      _
    %5733 = vsyncpa [#allocation4], 1
    %5734 = vsyncpa [#allocation6], 1

</llo_original>
